<compile_context>
chip_gen: v7x
topology: tpu7x:2x2x1
jax: 0.10.0
libtpu: 0.0.40
codegen_flags: <defaults>
</compile_context>

<pallas_src>
import functools

import jax
import jax.numpy as jnp
from jax import lax
from jax.experimental import pallas as pl
from jax.experimental.pallas import tpu as pltpu


def _round_up(a, b):
    return (a + b - 1) // b * b


# ------------------ Kernel 1: 7x7 depthwise conv (pad 3, stride 1), lane-dense ------------------
def _dwconv7x7_kernel(xpad_ref, w_ref, b_ref, o_ref, *, H, W, C):
    # xpad_ref: (1, H+6, (W+6)*C)  zero-padded input slab for one batch element
    # w_ref:    (49, W*C)          tap weights, tiled over the output width
    # b_ref:    (1,  W*C)          bias, tiled over the output width
    # o_ref:    (1, H, W*C)        lane-dense output slab
    x = xpad_ref[0]                                   # (H+6, (W+6)*C), f32
    w = w_ref[...]                                    # (49, W*C)
    # Initialize the accumulator from the bias (saves one full-slab add at the end).
    acc = jnp.broadcast_to(b_ref[...], (H, W * C)).astype(jnp.float32)
    for dy in range(7):
        rows = x[dy:dy + H, :]                        # (H, (W+6)*C)  vertical (sublane) shift
        for dx in range(7):
            win = rows[:, dx * C:dx * C + W * C]      # (H, W*C)      horizontal (lane) shift
            acc = acc + win * w[dy * 7 + dx, :]
    o_ref[0] = acc


def dwconv7x7(x_nhwc, w_dw, b_dw):
    """Depthwise 7x7 conv, padding 3, stride 1.  x_nhwc: (N,H,W,C); w_dw: (49,C); b_dw: (1,C)."""
    N, H, W, C = x_nhwc.shape
    xpad = jnp.pad(x_nhwc, ((0, 0), (3, 3), (3, 3), (0, 0)))        # (N, H+6, W+6, C)
    xpad2 = xpad.reshape(N, H + 6, (W + 6) * C)                     # free reshape -> lane-dense slab
    w_t = jnp.tile(w_dw, (1, W))                                    # (49, W*C): col w*C+c -> w_dw[k, c]
    b_t = jnp.tile(b_dw, (1, W))                                    # (1,  W*C)

    cost = pl.CostEstimate(
        flops=2 * 49 * N * H * W * C,
        transcendentals=0,
        bytes_accessed=4 * (N * (H + 6) * (W + 6) * C + N * H * W * C + 50 * W * C))

    out = pl.pallas_call(
        functools.partial(_dwconv7x7_kernel, H=H, W=W, C=C),
        out_shape=jax.ShapeDtypeStruct((N, H, W * C), jnp.float32),
        grid=(N,),
        in_specs=[
            pl.BlockSpec((1, H + 6, (W + 6) * C), lambda n: (n, 0, 0)),
            pl.BlockSpec((49, W * C), lambda n: (0, 0)),            # resident (constant block index)
            pl.BlockSpec((1, W * C), lambda n: (0, 0)),
        ],
        out_specs=pl.BlockSpec((1, H, W * C), lambda n: (n, 0, 0)),
        compiler_params=pltpu.CompilerParams(
            dimension_semantics=("parallel",),
            vmem_limit_bytes=32 * 1024 * 1024),
        cost_estimate=cost,
    )(xpad2, w_t, b_t)
    # TODO(synk): for very large H a second (row-tile) grid axis with a manually DMA'd halo
    # would be needed; at Block's typical shapes one batch element fits VMEM comfortably.
    return out.reshape(N, H, W, C)


# --------- Kernel 2: LayerNorm + Linear(C->4C) + GELU + Linear(4C->C) + gamma + residual ---------
def _ln_mlp_residual_kernel(x_ref, res_ref, lnw_ref, lnb_ref,
                            w1_ref, b1_ref, w2_ref, b2_ref, g_ref, o_ref, *, eps):
    x = x_ref[...]                                                   # (TM, C) f32
    mean = jnp.mean(x, axis=-1, keepdims=True)
    var = jnp.mean(jnp.square(x - mean), axis=-1, keepdims=True)
    xn = (x - mean) * lax.rsqrt(var + eps)
    xn = xn * lnw_ref[...] + lnb_ref[...]
    # MXU matmuls: bf16 operands, f32 accumulation.
    h = jnp.dot(xn.astype(jnp.bfloat16), w1_ref[...],
                preferred_element_type=jnp.float32) + b1_ref[...]
    h = jax.nn.gelu(h, approximate=False)                            # nn.GELU() default = exact erf
    y = jnp.dot(h.astype(jnp.bfloat16), w2_ref[...],
                preferred_element_type=jnp.float32) + b2_ref[...]
    y = y * g_ref[...]                                               # layer scale (gamma)
    o_ref[...] = res_ref[...] + y                                    # residual (drop_path = Identity)


def ln_mlp_residual(dw_flat, res_flat, params, *, tm=128, eps=1e-6):
    M, C = dw_flat.shape
    tm = max(8, min(tm, _round_up(M, 8)))
    Mp = _round_up(M, tm)
    if Mp != M:  # pad tokens so the grid divides evenly; padded rows are sliced off below.
        dw_flat = jnp.pad(dw_flat, ((0, Mp - M), (0, 0)))
        res_flat = jnp.pad(res_flat, ((0, Mp - M), (0, 0)))

    w1 = params["w1"].astype(jnp.bfloat16)                           # (C, 4C)
    w2 = params["w2"].astype(jnp.bfloat16)                           # (4C, C)
    row = lambda i: (i, 0)        # token-tiled operands
    rep = lambda i: (0, 0)        # resident parameters (constant block index -> single DMA)

    cost = pl.CostEstimate(
        flops=2 * 2 * Mp * C * 4 * C + 12 * Mp * C,
        transcendentals=Mp * 4 * C,
        bytes_accessed=4 * 3 * Mp * C + 2 * 2 * (4 * C * C) + 4 * 7 * C)

    out = pl.pallas_call(
        functools.partial(_ln_mlp_residual_kernel, eps=eps),
        out_shape=jax.ShapeDtypeStruct((Mp, C), jnp.float32),
        grid=(Mp // tm,),
        in_specs=[
            pl.BlockSpec((tm, C), row),          # dwconv output tokens
            pl.BlockSpec((tm, C), row),          # residual (original input) tokens
            pl.BlockSpec((1, C), rep),           # LayerNorm weight
            pl.BlockSpec((1, C), rep),           # LayerNorm bias
            pl.BlockSpec((C, 4 * C), rep),       # pwconv1 weight (bf16, resident)
            pl.BlockSpec((1, 4 * C), rep),       # pwconv1 bias
            pl.BlockSpec((4 * C, C), rep),       # pwconv2 weight (bf16, resident)
            pl.BlockSpec((1, C), rep),           # pwconv2 bias
            pl.BlockSpec((1, C), rep),           # gamma
        ],
        out_specs=pl.BlockSpec((tm, C), row),
        compiler_params=pltpu.CompilerParams(
            dimension_semantics=("parallel",),
            vmem_limit_bytes=32 * 1024 * 1024),
        cost_estimate=cost,
    )(dw_flat, res_flat, params["ln_w"], params["ln_b"],
      w1, params["b1"], w2, params["b2"], params["gamma"])
    return out[:M] if Mp != M else out


# -------------------------------------- Block forward --------------------------------------
def block_forward(x_nchw, params, *, tm=128):
    """ConvNeXt Block forward matching the PyTorch module (NCHW in / NCHW out)."""
    x = jnp.transpose(x_nchw, (0, 2, 3, 1))                          # NHWC
    N, H, W, C = x.shape
    dw = dwconv7x7(x, params["w_dw"], params["b_dw"])                # (N, H, W, C)
    M = N * H * W
    out_flat = ln_mlp_residual(dw.reshape(M, C), x.reshape(M, C), params, tm=tm)
    out = out_flat.reshape(N, H, W, C)
    return jnp.transpose(out, (0, 3, 1, 2))                          # back to NCHW


# ------------------------------ Pure-JAX references (f32) ------------------------------
def reference_dwconv(x_nhwc, w_dw, b_dw):
    C = x_nhwc.shape[-1]
    dw_w = w_dw.reshape(7, 7, 1, C)
    return lax.conv_general_dilated(
        x_nhwc, dw_w, window_strides=(1, 1), padding=((3, 3), (3, 3)),
        dimension_numbers=("NHWC", "HWIO", "NHWC"),
        feature_group_count=C, precision=lax.Precision.HIGHEST) + b_dw[0]


def reference_forward(x_nchw, params):
    x = jnp.transpose(x_nchw, (0, 2, 3, 1))
    dw = reference_dwconv(x, params["w_dw"], params["b_dw"])
    mean = jnp.mean(dw, axis=-1, keepdims=True)
    var = jnp.mean((dw - mean) ** 2, axis=-1, keepdims=True)
    xn = (dw - mean) / jnp.sqrt(var + 1e-6)
    xn = xn * params["ln_w"][0] + params["ln_b"][0]
    h = xn @ params["w1"] + params["b1"][0]
    h = jax.nn.gelu(h, approximate=False)
    o = h @ params["w2"] + params["b2"][0]
    o = o * params["gamma"][0]
    out = x + o
    return jnp.transpose(out, (0, 3, 1, 2))


if __name__ == "__main__":
    dim = 32               # channels; 4*dim = 128 -> one full lane tile for the MLP hidden
    N, H, W = 2, 16, 16

    key = jax.random.PRNGKey(0)
    ks = jax.random.split(key, 10)
    s = 0.05
    params = {
        # PyTorch shapes -> layout used here:
        #   dwconv.weight (C,1,7,7)  -> (49, C)  tap-major, per-channel
        #   pwconv1.weight (4C, C)   -> (C, 4C)  transposed for x @ W
        #   pwconv2.weight (C, 4C)   -> (4C, C)
        "w_dw":  jax.random.normal(ks[0], (49, dim), jnp.float32) * s,
        "b_dw":  jax.random.normal(ks[1], (1, dim), jnp.float32) * s,
        "ln_w":  1.0 + 0.1 * jax.random.normal(ks[2], (1, dim), jnp.float32),
        "ln_b":  0.1 * jax.random.normal(ks[3], (1, dim), jnp.float32),
        "w1":    jax.random.normal(ks[4], (dim, 4 * dim), jnp.float32) * s,
        "b1":    jax.random.normal(ks[5], (1, 4 * dim), jnp.float32) * s,
        "w2":    jax.random.normal(ks[6], (4 * dim, dim), jnp.float32) * s,
        "b2":    jax.random.normal(ks[7], (1, dim), jnp.float32) * s,
        # The module initializes gamma = 1e-6 * ones; it is a trained parameter, so use O(1)
        # values here so the MLP branch is actually exercised by the numerical check.
        "gamma": 0.5 * jax.random.normal(ks[8], (1, dim), jnp.float32),
    }
    x = jax.random.normal(ks[9], (N, dim, H, W), jnp.float32)        # NCHW, like PyTorch

    # Check 1: depthwise-conv kernel (pure f32) against lax.conv, tight tolerance.
    x_nhwc = jnp.transpose(x, (0, 2, 3, 1))
    dw_kernel = jax.block_until_ready(
        jax.jit(dwconv7x7)(x_nhwc, params["w_dw"], params["b_dw"]))
    dw_ref = reference_dwconv(x_nhwc, params["w_dw"], params["b_dw"])
    assert jnp.allclose(dw_kernel, dw_ref, rtol=1e-4, atol=1e-4), \
        float(jnp.max(jnp.abs(dw_kernel - dw_ref)))

    # Check 2: full fused forward (bf16 MXU operands, f32 accumulate) against the f32 reference.
    out = jax.block_until_ready(jax.jit(block_forward)(x, params))
    ref = reference_forward(x, params)
    assert out.shape == (N, dim, H, W), out.shape
    assert jnp.allclose(out, ref, rtol=1e-2, atol=1e-2), \
        float(jnp.max(jnp.abs(out - ref)))

    print("KERNEL_OK")
</pallas_src>

<mosaic_0001>
module attributes {stable_mosaic.version = 11 : i64} {
  func.func @_dwconv7x7_kernel(%arg0: i32, %arg1: memref<1x22x704xf32, #tpu.memory_space<vmem>>, %arg2: memref<49x512xf32, #tpu.memory_space<vmem>>, %arg3: memref<1x512xf32, #tpu.memory_space<vmem>>, %arg4: memref<1x16x512xf32, #tpu.memory_space<vmem>>) attributes {dimension_semantics = [#tpu.dimension_semantics<parallel>], iteration_bounds = array<i64: 2>, scalar_prefetch = 0 : i64, scratch_operands = 0 : i64, tpu.core_type = #tpu.core_type<tc>, window_params = [{transform_indices = @transform_0, window_bounds = array<i64: 1, 22, 704>}, {pipeline_mode = #tpu.pipeline_mode<synchronous>, transform_indices = @transform_1, window_bounds = array<i64: 49, 512>}, {pipeline_mode = #tpu.pipeline_mode<synchronous>, transform_indices = @transform_2, window_bounds = array<i64: 1, 512>}, {transform_indices = @transform_3, window_bounds = array<i64: 1, 16, 512>}]} {
    %c0 = arith.constant 0 : index
    %c0_0 = arith.constant 0 : index
    %c0_1 = arith.constant 0 : index
    %0 = vector.load %arg1[%c0, %c0_0, %c0_1] : memref<1x22x704xf32, #tpu.memory_space<vmem>>, vector<1x22x704xf32>
    %1 = vector.shape_cast %0 : vector<1x22x704xf32> to vector<22x704xf32>
    %c0_2 = arith.constant 0 : index
    %c0_3 = arith.constant 0 : index
    %2 = vector.load %arg2[%c0_2, %c0_3] : memref<49x512xf32, #tpu.memory_space<vmem>>, vector<49x512xf32>
    %c0_4 = arith.constant 0 : index
    %c0_5 = arith.constant 0 : index
    %3 = vector.load %arg3[%c0_4, %c0_5] : memref<1x512xf32, #tpu.memory_space<vmem>>, vector<1x512xf32>
    %4 = vector.shape_cast %3 : vector<1x512xf32> to vector<1x512xf32>
    %5 = vector.broadcast %4 : vector<1x512xf32> to vector<16x512xf32>
    %6 = vector.extract_strided_slice %1 {offsets = [0, 0], sizes = [16, 704], strides = [1, 1]} : vector<22x704xf32> to vector<16x704xf32>
    %7 = vector.extract_strided_slice %6 {offsets = [0, 0], sizes = [16, 512], strides = [1, 1]} : vector<16x704xf32> to vector<16x512xf32>
    %8 = vector.extract_strided_slice %2 {offsets = [0, 0], sizes = [1, 512], strides = [1, 1]} : vector<49x512xf32> to vector<1x512xf32>
    %9 = vector.shape_cast %8 : vector<1x512xf32> to vector<512xf32>
    %10 = vector.shape_cast %9 : vector<512xf32> to vector<1x512xf32>
    %11 = vector.broadcast %10 : vector<1x512xf32> to vector<16x512xf32>
    %12 = arith.mulf %7, %11 : vector<16x512xf32>
    %13 = arith.addf %5, %12 : vector<16x512xf32>
    %14 = vector.extract_strided_slice %6 {offsets = [0, 32], sizes = [16, 512], strides = [1, 1]} : vector<16x704xf32> to vector<16x512xf32>
    %15 = vector.extract_strided_slice %2 {offsets = [1, 0], sizes = [1, 512], strides = [1, 1]} : vector<49x512xf32> to vector<1x512xf32>
    %16 = vector.shape_cast %15 : vector<1x512xf32> to vector<512xf32>
    %17 = vector.shape_cast %16 : vector<512xf32> to vector<1x512xf32>
    %18 = vector.broadcast %17 : vector<1x512xf32> to vector<16x512xf32>
    %19 = arith.mulf %14, %18 : vector<16x512xf32>
    %20 = arith.addf %13, %19 : vector<16x512xf32>
    %21 = vector.extract_strided_slice %6 {offsets = [0, 64], sizes = [16, 512], strides = [1, 1]} : vector<16x704xf32> to vector<16x512xf32>
    %22 = vector.extract_strided_slice %2 {offsets = [2, 0], sizes = [1, 512], strides = [1, 1]} : vector<49x512xf32> to vector<1x512xf32>
    %23 = vector.shape_cast %22 : vector<1x512xf32> to vector<512xf32>
    %24 = vector.shape_cast %23 : vector<512xf32> to vector<1x512xf32>
    %25 = vector.broadcast %24 : vector<1x512xf32> to vector<16x512xf32>
    %26 = arith.mulf %21, %25 : vector<16x512xf32>
    %27 = arith.addf %20, %26 : vector<16x512xf32>
    %28 = vector.extract_strided_slice %6 {offsets = [0, 96], sizes = [16, 512], strides = [1, 1]} : vector<16x704xf32> to vector<16x512xf32>
    %29 = vector.extract_strided_slice %2 {offsets = [3, 0], sizes = [1, 512], strides = [1, 1]} : vector<49x512xf32> to vector<1x512xf32>
    %30 = vector.shape_cast %29 : vector<1x512xf32> to vector<512xf32>
    %31 = vector.shape_cast %30 : vector<512xf32> to vector<1x512xf32>
    %32 = vector.broadcast %31 : vector<1x512xf32> to vector<16x512xf32>
    %33 = arith.mulf %28, %32 : vector<16x512xf32>
    %34 = arith.addf %27, %33 : vector<16x512xf32>
    %35 = vector.extract_strided_slice %6 {offsets = [0, 128], sizes = [16, 512], strides = [1, 1]} : vector<16x704xf32> to vector<16x512xf32>
    %36 = vector.extract_strided_slice %2 {offsets = [4, 0], sizes = [1, 512], strides = [1, 1]} : vector<49x512xf32> to vector<1x512xf32>
    %37 = vector.shape_cast %36 : vector<1x512xf32> to vector<512xf32>
    %38 = vector.shape_cast %37 : vector<512xf32> to vector<1x512xf32>
    %39 = vector.broadcast %38 : vector<1x512xf32> to vector<16x512xf32>
    %40 = arith.mulf %35, %39 : vector<16x512xf32>
    %41 = arith.addf %34, %40 : vector<16x512xf32>
    %42 = vector.extract_strided_slice %6 {offsets = [0, 160], sizes = [16, 512], strides = [1, 1]} : vector<16x704xf32> to vector<16x512xf32>
    %43 = vector.extract_strided_slice %2 {offsets = [5, 0], sizes = [1, 512], strides = [1, 1]} : vector<49x512xf32> to vector<1x512xf32>
    %44 = vector.shape_cast %43 : vector<1x512xf32> to vector<512xf32>
    %45 = vector.shape_cast %44 : vector<512xf32> to vector<1x512xf32>
    %46 = vector.broadcast %45 : vector<1x512xf32> to vector<16x512xf32>
    %47 = arith.mulf %42, %46 : vector<16x512xf32>
    %48 = arith.addf %41, %47 : vector<16x512xf32>
    %49 = vector.extract_strided_slice %6 {offsets = [0, 192], sizes = [16, 512], strides = [1, 1]} : vector<16x704xf32> to vector<16x512xf32>
    %50 = vector.extract_strided_slice %2 {offsets = [6, 0], sizes = [1, 512], strides = [1, 1]} : vector<49x512xf32> to vector<1x512xf32>
    %51 = vector.shape_cast %50 : vector<1x512xf32> to vector<512xf32>
    %52 = vector.shape_cast %51 : vector<512xf32> to vector<1x512xf32>
    %53 = vector.broadcast %52 : vector<1x512xf32> to vector<16x512xf32>
    %54 = arith.mulf %49, %53 : vector<16x512xf32>
    %55 = arith.addf %48, %54 : vector<16x512xf32>
    %56 = vector.extract_strided_slice %1 {offsets = [1, 0], sizes = [16, 704], strides = [1, 1]} : vector<22x704xf32> to vector<16x704xf32>
    %57 = vector.extract_strided_slice %56 {offsets = [0, 0], sizes = [16, 512], strides = [1, 1]} : vector<16x704xf32> to vector<16x512xf32>
    %58 = vector.extract_strided_slice %2 {offsets = [7, 0], sizes = [1, 512], strides = [1, 1]} : vector<49x512xf32> to vector<1x512xf32>
    %59 = vector.shape_cast %58 : vector<1x512xf32> to vector<512xf32>
    %60 = vector.shape_cast %59 : vector<512xf32> to vector<1x512xf32>
    %61 = vector.broadcast %60 : vector<1x512xf32> to vector<16x512xf32>
    %62 = arith.mulf %57, %61 : vector<16x512xf32>
    %63 = arith.addf %55, %62 : vector<16x512xf32>
    %64 = vector.extract_strided_slice %56 {offsets = [0, 32], sizes = [16, 512], strides = [1, 1]} : vector<16x704xf32> to vector<16x512xf32>
    %65 = vector.extract_strided_slice %2 {offsets = [8, 0], sizes = [1, 512], strides = [1, 1]} : vector<49x512xf32> to vector<1x512xf32>
    %66 = vector.shape_cast %65 : vector<1x512xf32> to vector<512xf32>
    %67 = vector.shape_cast %66 : vector<512xf32> to vector<1x512xf32>
    %68 = vector.broadcast %67 : vector<1x512xf32> to vector<16x512xf32>
    %69 = arith.mulf %64, %68 : vector<16x512xf32>
    %70 = arith.addf %63, %69 : vector<16x512xf32>
    %71 = vector.extract_strided_slice %56 {offsets = [0, 64], sizes = [16, 512], strides = [1, 1]} : vector<16x704xf32> to vector<16x512xf32>
    %72 = vector.extract_strided_slice %2 {offsets = [9, 0], sizes = [1, 512], strides = [1, 1]} : vector<49x512xf32> to vector<1x512xf32>
    %73 = vector.shape_cast %72 : vector<1x512xf32> to vector<512xf32>
    %74 = vector.shape_cast %73 : vector<512xf32> to vector<1x512xf32>
    %75 = vector.broadcast %74 : vector<1x512xf32> to vector<16x512xf32>
    %76 = arith.mulf %71, %75 : vector<16x512xf32>
    %77 = arith.addf %70, %76 : vector<16x512xf32>
    %78 = vector.extract_strided_slice %56 {offsets = [0, 96], sizes = [16, 512], strides = [1, 1]} : vector<16x704xf32> to vector<16x512xf32>
    %79 = vector.extract_strided_slice %2 {offsets = [10, 0], sizes = [1, 512], strides = [1, 1]} : vector<49x512xf32> to vector<1x512xf32>
    %80 = vector.shape_cast %79 : vector<1x512xf32> to vector<512xf32>
    %81 = vector.shape_cast %80 : vector<512xf32> to vector<1x512xf32>
    %82 = vector.broadcast %81 : vector<1x512xf32> to vector<16x512xf32>
    %83 = arith.mulf %78, %82 : vector<16x512xf32>
    %84 = arith.addf %77, %83 : vector<16x512xf32>
    %85 = vector.extract_strided_slice %56 {offsets = [0, 128], sizes = [16, 512], strides = [1, 1]} : vector<16x704xf32> to vector<16x512xf32>
    %86 = vector.extract_strided_slice %2 {offsets = [11, 0], sizes = [1, 512], strides = [1, 1]} : vector<49x512xf32> to vector<1x512xf32>
    %87 = vector.shape_cast %86 : vector<1x512xf32> to vector<512xf32>
    %88 = vector.shape_cast %87 : vector<512xf32> to vector<1x512xf32>
    %89 = vector.broadcast %88 : vector<1x512xf32> to vector<16x512xf32>
    %90 = arith.mulf %85, %89 : vector<16x512xf32>
    %91 = arith.addf %84, %90 : vector<16x512xf32>
    %92 = vector.extract_strided_slice %56 {offsets = [0, 160], sizes = [16, 512], strides = [1, 1]} : vector<16x704xf32> to vector<16x512xf32>
    %93 = vector.extract_strided_slice %2 {offsets = [12, 0], sizes = [1, 512], strides = [1, 1]} : vector<49x512xf32> to vector<1x512xf32>
    %94 = vector.shape_cast %93 : vector<1x512xf32> to vector<512xf32>
    %95 = vector.shape_cast %94 : vector<512xf32> to vector<1x512xf32>
    %96 = vector.broadcast %95 : vector<1x512xf32> to vector<16x512xf32>
    %97 = arith.mulf %92, %96 : vector<16x512xf32>
    %98 = arith.addf %91, %97 : vector<16x512xf32>
    %99 = vector.extract_strided_slice %56 {offsets = [0, 192], sizes = [16, 512], strides = [1, 1]} : vector<16x704xf32> to vector<16x512xf32>
    %100 = vector.extract_strided_slice %2 {offsets = [13, 0], sizes = [1, 512], strides = [1, 1]} : vector<49x512xf32> to vector<1x512xf32>
    %101 = vector.shape_cast %100 : vector<1x512xf32> to vector<512xf32>
    %102 = vector.shape_cast %101 : vector<512xf32> to vector<1x512xf32>
    %103 = vector.broadcast %102 : vector<1x512xf32> to vector<16x512xf32>
    %104 = arith.mulf %99, %103 : vector<16x512xf32>
    %105 = arith.addf %98, %104 : vector<16x512xf32>
    %106 = vector.extract_strided_slice %1 {offsets = [2, 0], sizes = [16, 704], strides = [1, 1]} : vector<22x704xf32> to vector<16x704xf32>
    %107 = vector.extract_strided_slice %106 {offsets = [0, 0], sizes = [16, 512], strides = [1, 1]} : vector<16x704xf32> to vector<16x512xf32>
    %108 = vector.extract_strided_slice %2 {offsets = [14, 0], sizes = [1, 512], strides = [1, 1]} : vector<49x512xf32> to vector<1x512xf32>
    %109 = vector.shape_cast %108 : vector<1x512xf32> to vector<512xf32>
    %110 = vector.shape_cast %109 : vector<512xf32> to vector<1x512xf32>
    %111 = vector.broadcast %110 : vector<1x512xf32> to vector<16x512xf32>
    %112 = arith.mulf %107, %111 : vector<16x512xf32>
    %113 = arith.addf %105, %112 : vector<16x512xf32>
    %114 = vector.extract_strided_slice %106 {offsets = [0, 32], sizes = [16, 512], strides = [1, 1]} : vector<16x704xf32> to vector<16x512xf32>
    %115 = vector.extract_strided_slice %2 {offsets = [15, 0], sizes = [1, 512], strides = [1, 1]} : vector<49x512xf32> to vector<1x512xf32>
    %116 = vector.shape_cast %115 : vector<1x512xf32> to vector<512xf32>
    %117 = vector.shape_cast %116 : vector<512xf32> to vector<1x512xf32>
    %118 = vector.broadcast %117 : vector<1x512xf32> to vector<16x512xf32>
    %119 = arith.mulf %114, %118 : vector<16x512xf32>
    %120 = arith.addf %113, %119 : vector<16x512xf32>
    %121 = vector.extract_strided_slice %106 {offsets = [0, 64], sizes = [16, 512], strides = [1, 1]} : vector<16x704xf32> to vector<16x512xf32>
    %122 = vector.extract_strided_slice %2 {offsets = [16, 0], sizes = [1, 512], strides = [1, 1]} : vector<49x512xf32> to vector<1x512xf32>
    %123 = vector.shape_cast %122 : vector<1x512xf32> to vector<512xf32>
    %124 = vector.shape_cast %123 : vector<512xf32> to vector<1x512xf32>
    %125 = vector.broadcast %124 : vector<1x512xf32> to vector<16x512xf32>
    %126 = arith.mulf %121, %125 : vector<16x512xf32>
    %127 = arith.addf %120, %126 : vector<16x512xf32>
    %128 = vector.extract_strided_slice %106 {offsets = [0, 96], sizes = [16, 512], strides = [1, 1]} : vector<16x704xf32> to vector<16x512xf32>
    %129 = vector.extract_strided_slice %2 {offsets = [17, 0], sizes = [1, 512], strides = [1, 1]} : vector<49x512xf32> to vector<1x512xf32>
    %130 = vector.shape_cast %129 : vector<1x512xf32> to vector<512xf32>
    %131 = vector.shape_cast %130 : vector<512xf32> to vector<1x512xf32>
    %132 = vector.broadcast %131 : vector<1x512xf32> to vector<16x512xf32>
    %133 = arith.mulf %128, %132 : vector<16x512xf32>
    %134 = arith.addf %127, %133 : vector<16x512xf32>
    %135 = vector.extract_strided_slice %106 {offsets = [0, 128], sizes = [16, 512], strides = [1, 1]} : vector<16x704xf32> to vector<16x512xf32>
    %136 = vector.extract_strided_slice %2 {offsets = [18, 0], sizes = [1, 512], strides = [1, 1]} : vector<49x512xf32> to vector<1x512xf32>
    %137 = vector.shape_cast %136 : vector<1x512xf32> to vector<512xf32>
    %138 = vector.shape_cast %137 : vector<512xf32> to vector<1x512xf32>
    %139 = vector.broadcast %138 : vector<1x512xf32> to vector<16x512xf32>
    %140 = arith.mulf %135, %139 : vector<16x512xf32>
    %141 = arith.addf %134, %140 : vector<16x512xf32>
    %142 = vector.extract_strided_slice %106 {offsets = [0, 160], sizes = [16, 512], strides = [1, 1]} : vector<16x704xf32> to vector<16x512xf32>
    %143 = vector.extract_strided_slice %2 {offsets = [19, 0], sizes = [1, 512], strides = [1, 1]} : vector<49x512xf32> to vector<1x512xf32>
    %144 = vector.shape_cast %143 : vector<1x512xf32> to vector<512xf32>
    %145 = vector.shape_cast %144 : vector<512xf32> to vector<1x512xf32>
    %146 = vector.broadcast %145 : vector<1x512xf32> to vector<16x512xf32>
    %147 = arith.mulf %142, %146 : vector<16x512xf32>
    %148 = arith.addf %141, %147 : vector<16x512xf32>
    %149 = vector.extract_strided_slice %106 {offsets = [0, 192], sizes = [16, 512], strides = [1, 1]} : vector<16x704xf32> to vector<16x512xf32>
    %150 = vector.extract_strided_slice %2 {offsets = [20, 0], sizes = [1, 512], strides = [1, 1]} : vector<49x512xf32> to vector<1x512xf32>
    %151 = vector.shape_cast %150 : vector<1x512xf32> to vector<512xf32>
    %152 = vector.shape_cast %151 : vector<512xf32> to vector<1x512xf32>
    %153 = vector.broadcast %152 : vector<1x512xf32> to vector<16x512xf32>
    %154 = arith.mulf %149, %153 : vector<16x512xf32>
    %155 = arith.addf %148, %154 : vector<16x512xf32>
    %156 = vector.extract_strided_slice %1 {offsets = [3, 0], sizes = [16, 704], strides = [1, 1]} : vector<22x704xf32> to vector<16x704xf32>
    %157 = vector.extract_strided_slice %156 {offsets = [0, 0], sizes = [16, 512], strides = [1, 1]} : vector<16x704xf32> to vector<16x512xf32>
    %158 = vector.extract_strided_slice %2 {offsets = [21, 0], sizes = [1, 512], strides = [1, 1]} : vector<49x512xf32> to vector<1x512xf32>
    %159 = vector.shape_cast %158 : vector<1x512xf32> to vector<512xf32>
    %160 = vector.shape_cast %159 : vector<512xf32> to vector<1x512xf32>
    %161 = vector.broadcast %160 : vector<1x512xf32> to vector<16x512xf32>
    %162 = arith.mulf %157, %161 : vector<16x512xf32>
    %163 = arith.addf %155, %162 : vector<16x512xf32>
    %164 = vector.extract_strided_slice %156 {offsets = [0, 32], sizes = [16, 512], strides = [1, 1]} : vector<16x704xf32> to vector<16x512xf32>
    %165 = vector.extract_strided_slice %2 {offsets = [22, 0], sizes = [1, 512], strides = [1, 1]} : vector<49x512xf32> to vector<1x512xf32>
    %166 = vector.shape_cast %165 : vector<1x512xf32> to vector<512xf32>
    %167 = vector.shape_cast %166 : vector<512xf32> to vector<1x512xf32>
    %168 = vector.broadcast %167 : vector<1x512xf32> to vector<16x512xf32>
    %169 = arith.mulf %164, %168 : vector<16x512xf32>
    %170 = arith.addf %163, %169 : vector<16x512xf32>
    %171 = vector.extract_strided_slice %156 {offsets = [0, 64], sizes = [16, 512], strides = [1, 1]} : vector<16x704xf32> to vector<16x512xf32>
    %172 = vector.extract_strided_slice %2 {offsets = [23, 0], sizes = [1, 512], strides = [1, 1]} : vector<49x512xf32> to vector<1x512xf32>
    %173 = vector.shape_cast %172 : vector<1x512xf32> to vector<512xf32>
    %174 = vector.shape_cast %173 : vector<512xf32> to vector<1x512xf32>
    %175 = vector.broadcast %174 : vector<1x512xf32> to vector<16x512xf32>
    %176 = arith.mulf %171, %175 : vector<16x512xf32>
    %177 = arith.addf %170, %176 : vector<16x512xf32>
    %178 = vector.extract_strided_slice %156 {offsets = [0, 96], sizes = [16, 512], strides = [1, 1]} : vector<16x704xf32> to vector<16x512xf32>
    %179 = vector.extract_strided_slice %2 {offsets = [24, 0], sizes = [1, 512], strides = [1, 1]} : vector<49x512xf32> to vector<1x512xf32>
    %180 = vector.shape_cast %179 : vector<1x512xf32> to vector<512xf32>
    %181 = vector.shape_cast %180 : vector<512xf32> to vector<1x512xf32>
    %182 = vector.broadcast %181 : vector<1x512xf32> to vector<16x512xf32>
    %183 = arith.mulf %178, %182 : vector<16x512xf32>
    %184 = arith.addf %177, %183 : vector<16x512xf32>
    %185 = vector.extract_strided_slice %156 {offsets = [0, 128], sizes = [16, 512], strides = [1, 1]} : vector<16x704xf32> to vector<16x512xf32>
    %186 = vector.extract_strided_slice %2 {offsets = [25, 0], sizes = [1, 512], strides = [1, 1]} : vector<49x512xf32> to vector<1x512xf32>
    %187 = vector.shape_cast %186 : vector<1x512xf32> to vector<512xf32>
    %188 = vector.shape_cast %187 : vector<512xf32> to vector<1x512xf32>
    %189 = vector.broadcast %188 : vector<1x512xf32> to vector<16x512xf32>
    %190 = arith.mulf %185, %189 : vector<16x512xf32>
    %191 = arith.addf %184, %190 : vector<16x512xf32>
    %192 = vector.extract_strided_slice %156 {offsets = [0, 160], sizes = [16, 512], strides = [1, 1]} : vector<16x704xf32> to vector<16x512xf32>
    %193 = vector.extract_strided_slice %2 {offsets = [26, 0], sizes = [1, 512], strides = [1, 1]} : vector<49x512xf32> to vector<1x512xf32>
    %194 = vector.shape_cast %193 : vector<1x512xf32> to vector<512xf32>
    %195 = vector.shape_cast %194 : vector<512xf32> to vector<1x512xf32>
    %196 = vector.broadcast %195 : vector<1x512xf32> to vector<16x512xf32>
    %197 = arith.mulf %192, %196 : vector<16x512xf32>
    %198 = arith.addf %191, %197 : vector<16x512xf32>
    %199 = vector.extract_strided_slice %156 {offsets = [0, 192], sizes = [16, 512], strides = [1, 1]} : vector<16x704xf32> to vector<16x512xf32>
    %200 = vector.extract_strided_slice %2 {offsets = [27, 0], sizes = [1, 512], strides = [1, 1]} : vector<49x512xf32> to vector<1x512xf32>
    %201 = vector.shape_cast %200 : vector<1x512xf32> to vector<512xf32>
    %202 = vector.shape_cast %201 : vector<512xf32> to vector<1x512xf32>
    %203 = vector.broadcast %202 : vector<1x512xf32> to vector<16x512xf32>
    %204 = arith.mulf %199, %203 : vector<16x512xf32>
    %205 = arith.addf %198, %204 : vector<16x512xf32>
    %206 = vector.extract_strided_slice %1 {offsets = [4, 0], sizes = [16, 704], strides = [1, 1]} : vector<22x704xf32> to vector<16x704xf32>
    %207 = vector.extract_strided_slice %206 {offsets = [0, 0], sizes = [16, 512], strides = [1, 1]} : vector<16x704xf32> to vector<16x512xf32>
    %208 = vector.extract_strided_slice %2 {offsets = [28, 0], sizes = [1, 512], strides = [1, 1]} : vector<49x512xf32> to vector<1x512xf32>
    %209 = vector.shape_cast %208 : vector<1x512xf32> to vector<512xf32>
    %210 = vector.shape_cast %209 : vector<512xf32> to vector<1x512xf32>
    %211 = vector.broadcast %210 : vector<1x512xf32> to vector<16x512xf32>
    %212 = arith.mulf %207, %211 : vector<16x512xf32>
    %213 = arith.addf %205, %212 : vector<16x512xf32>
    %214 = vector.extract_strided_slice %206 {offsets = [0, 32], sizes = [16, 512], strides = [1, 1]} : vector<16x704xf32> to vector<16x512xf32>
    %215 = vector.extract_strided_slice %2 {offsets = [29, 0], sizes = [1, 512], strides = [1, 1]} : vector<49x512xf32> to vector<1x512xf32>
    %216 = vector.shape_cast %215 : vector<1x512xf32> to vector<512xf32>
    %217 = vector.shape_cast %216 : vector<512xf32> to vector<1x512xf32>
    %218 = vector.broadcast %217 : vector<1x512xf32> to vector<16x512xf32>
    %219 = arith.mulf %214, %218 : vector<16x512xf32>
    %220 = arith.addf %213, %219 : vector<16x512xf32>
    %221 = vector.extract_strided_slice %206 {offsets = [0, 64], sizes = [16, 512], strides = [1, 1]} : vector<16x704xf32> to vector<16x512xf32>
    %222 = vector.extract_strided_slice %2 {offsets = [30, 0], sizes = [1, 512], strides = [1, 1]} : vector<49x512xf32> to vector<1x512xf32>
    %223 = vector.shape_cast %222 : vector<1x512xf32> to vector<512xf32>
    %224 = vector.shape_cast %223 : vector<512xf32> to vector<1x512xf32>
    %225 = vector.broadcast %224 : vector<1x512xf32> to vector<16x512xf32>
    %226 = arith.mulf %221, %225 : vector<16x512xf32>
    %227 = arith.addf %220, %226 : vector<16x512xf32>
    %228 = vector.extract_strided_slice %206 {offsets = [0, 96], sizes = [16, 512], strides = [1, 1]} : vector<16x704xf32> to vector<16x512xf32>
    %229 = vector.extract_strided_slice %2 {offsets = [31, 0], sizes = [1, 512], strides = [1, 1]} : vector<49x512xf32> to vector<1x512xf32>
    %230 = vector.shape_cast %229 : vector<1x512xf32> to vector<512xf32>
    %231 = vector.shape_cast %230 : vector<512xf32> to vector<1x512xf32>
    %232 = vector.broadcast %231 : vector<1x512xf32> to vector<16x512xf32>
    %233 = arith.mulf %228, %232 : vector<16x512xf32>
    %234 = arith.addf %227, %233 : vector<16x512xf32>
    %235 = vector.extract_strided_slice %206 {offsets = [0, 128], sizes = [16, 512], strides = [1, 1]} : vector<16x704xf32> to vector<16x512xf32>
    %236 = vector.extract_strided_slice %2 {offsets = [32, 0], sizes = [1, 512], strides = [1, 1]} : vector<49x512xf32> to vector<1x512xf32>
    %237 = vector.shape_cast %236 : vector<1x512xf32> to vector<512xf32>
    %238 = vector.shape_cast %237 : vector<512xf32> to vector<1x512xf32>
    %239 = vector.broadcast %238 : vector<1x512xf32> to vector<16x512xf32>
    %240 = arith.mulf %235, %239 : vector<16x512xf32>
    %241 = arith.addf %234, %240 : vector<16x512xf32>
    %242 = vector.extract_strided_slice %206 {offsets = [0, 160], sizes = [16, 512], strides = [1, 1]} : vector<16x704xf32> to vector<16x512xf32>
    %243 = vector.extract_strided_slice %2 {offsets = [33, 0], sizes = [1, 512], strides = [1, 1]} : vector<49x512xf32> to vector<1x512xf32>
    %244 = vector.shape_cast %243 : vector<1x512xf32> to vector<512xf32>
    %245 = vector.shape_cast %244 : vector<512xf32> to vector<1x512xf32>
    %246 = vector.broadcast %245 : vector<1x512xf32> to vector<16x512xf32>
    %247 = arith.mulf %242, %246 : vector<16x512xf32>
    %248 = arith.addf %241, %247 : vector<16x512xf32>
    %249 = vector.extract_strided_slice %206 {offsets = [0, 192], sizes = [16, 512], strides = [1, 1]} : vector<16x704xf32> to vector<16x512xf32>
    %250 = vector.extract_strided_slice %2 {offsets = [34, 0], sizes = [1, 512], strides = [1, 1]} : vector<49x512xf32> to vector<1x512xf32>
    %251 = vector.shape_cast %250 : vector<1x512xf32> to vector<512xf32>
    %252 = vector.shape_cast %251 : vector<512xf32> to vector<1x512xf32>
    %253 = vector.broadcast %252 : vector<1x512xf32> to vector<16x512xf32>
    %254 = arith.mulf %249, %253 : vector<16x512xf32>
    %255 = arith.addf %248, %254 : vector<16x512xf32>
    %256 = vector.extract_strided_slice %1 {offsets = [5, 0], sizes = [16, 704], strides = [1, 1]} : vector<22x704xf32> to vector<16x704xf32>
    %257 = vector.extract_strided_slice %256 {offsets = [0, 0], sizes = [16, 512], strides = [1, 1]} : vector<16x704xf32> to vector<16x512xf32>
    %258 = vector.extract_strided_slice %2 {offsets = [35, 0], sizes = [1, 512], strides = [1, 1]} : vector<49x512xf32> to vector<1x512xf32>
    %259 = vector.shape_cast %258 : vector<1x512xf32> to vector<512xf32>
    %260 = vector.shape_cast %259 : vector<512xf32> to vector<1x512xf32>
    %261 = vector.broadcast %260 : vector<1x512xf32> to vector<16x512xf32>
    %262 = arith.mulf %257, %261 : vector<16x512xf32>
    %263 = arith.addf %255, %262 : vector<16x512xf32>
    %264 = vector.extract_strided_slice %256 {offsets = [0, 32], sizes = [16, 512], strides = [1, 1]} : vector<16x704xf32> to vector<16x512xf32>
    %265 = vector.extract_strided_slice %2 {offsets = [36, 0], sizes = [1, 512], strides = [1, 1]} : vector<49x512xf32> to vector<1x512xf32>
    %266 = vector.shape_cast %265 : vector<1x512xf32> to vector<512xf32>
    %267 = vector.shape_cast %266 : vector<512xf32> to vector<1x512xf32>
    %268 = vector.broadcast %267 : vector<1x512xf32> to vector<16x512xf32>
    %269 = arith.mulf %264, %268 : vector<16x512xf32>
    %270 = arith.addf %263, %269 : vector<16x512xf32>
    %271 = vector.extract_strided_slice %256 {offsets = [0, 64], sizes = [16, 512], strides = [1, 1]} : vector<16x704xf32> to vector<16x512xf32>
    %272 = vector.extract_strided_slice %2 {offsets = [37, 0], sizes = [1, 512], strides = [1, 1]} : vector<49x512xf32> to vector<1x512xf32>
    %273 = vector.shape_cast %272 : vector<1x512xf32> to vector<512xf32>
    %274 = vector.shape_cast %273 : vector<512xf32> to vector<1x512xf32>
    %275 = vector.broadcast %274 : vector<1x512xf32> to vector<16x512xf32>
    %276 = arith.mulf %271, %275 : vector<16x512xf32>
    %277 = arith.addf %270, %276 : vector<16x512xf32>
    %278 = vector.extract_strided_slice %256 {offsets = [0, 96], sizes = [16, 512], strides = [1, 1]} : vector<16x704xf32> to vector<16x512xf32>
    %279 = vector.extract_strided_slice %2 {offsets = [38, 0], sizes = [1, 512], strides = [1, 1]} : vector<49x512xf32> to vector<1x512xf32>
    %280 = vector.shape_cast %279 : vector<1x512xf32> to vector<512xf32>
    %281 = vector.shape_cast %280 : vector<512xf32> to vector<1x512xf32>
    %282 = vector.broadcast %281 : vector<1x512xf32> to vector<16x512xf32>
    %283 = arith.mulf %278, %282 : vector<16x512xf32>
    %284 = arith.addf %277, %283 : vector<16x512xf32>
    %285 = vector.extract_strided_slice %256 {offsets = [0, 128], sizes = [16, 512], strides = [1, 1]} : vector<16x704xf32> to vector<16x512xf32>
    %286 = vector.extract_strided_slice %2 {offsets = [39, 0], sizes = [1, 512], strides = [1, 1]} : vector<49x512xf32> to vector<1x512xf32>
    %287 = vector.shape_cast %286 : vector<1x512xf32> to vector<512xf32>
    %288 = vector.shape_cast %287 : vector<512xf32> to vector<1x512xf32>
    %289 = vector.broadcast %288 : vector<1x512xf32> to vector<16x512xf32>
    %290 = arith.mulf %285, %289 : vector<16x512xf32>
    %291 = arith.addf %284, %290 : vector<16x512xf32>
    %292 = vector.extract_strided_slice %256 {offsets = [0, 160], sizes = [16, 512], strides = [1, 1]} : vector<16x704xf32> to vector<16x512xf32>
    %293 = vector.extract_strided_slice %2 {offsets = [40, 0], sizes = [1, 512], strides = [1, 1]} : vector<49x512xf32> to vector<1x512xf32>
    %294 = vector.shape_cast %293 : vector<1x512xf32> to vector<512xf32>
    %295 = vector.shape_cast %294 : vector<512xf32> to vector<1x512xf32>
    %296 = vector.broadcast %295 : vector<1x512xf32> to vector<16x512xf32>
    %297 = arith.mulf %292, %296 : vector<16x512xf32>
    %298 = arith.addf %291, %297 : vector<16x512xf32>
    %299 = vector.extract_strided_slice %256 {offsets = [0, 192], sizes = [16, 512], strides = [1, 1]} : vector<16x704xf32> to vector<16x512xf32>
    %300 = vector.extract_strided_slice %2 {offsets = [41, 0], sizes = [1, 512], strides = [1, 1]} : vector<49x512xf32> to vector<1x512xf32>
    %301 = vector.shape_cast %300 : vector<1x512xf32> to vector<512xf32>
    %302 = vector.shape_cast %301 : vector<512xf32> to vector<1x512xf32>
    %303 = vector.broadcast %302 : vector<1x512xf32> to vector<16x512xf32>
    %304 = arith.mulf %299, %303 : vector<16x512xf32>
    %305 = arith.addf %298, %304 : vector<16x512xf32>
    %306 = vector.extract_strided_slice %1 {offsets = [6, 0], sizes = [16, 704], strides = [1, 1]} : vector<22x704xf32> to vector<16x704xf32>
    %307 = vector.extract_strided_slice %306 {offsets = [0, 0], sizes = [16, 512], strides = [1, 1]} : vector<16x704xf32> to vector<16x512xf32>
    %308 = vector.extract_strided_slice %2 {offsets = [42, 0], sizes = [1, 512], strides = [1, 1]} : vector<49x512xf32> to vector<1x512xf32>
    %309 = vector.shape_cast %308 : vector<1x512xf32> to vector<512xf32>
    %310 = vector.shape_cast %309 : vector<512xf32> to vector<1x512xf32>
    %311 = vector.broadcast %310 : vector<1x512xf32> to vector<16x512xf32>
    %312 = arith.mulf %307, %311 : vector<16x512xf32>
    %313 = arith.addf %305, %312 : vector<16x512xf32>
    %314 = vector.extract_strided_slice %306 {offsets = [0, 32], sizes = [16, 512], strides = [1, 1]} : vector<16x704xf32> to vector<16x512xf32>
    %315 = vector.extract_strided_slice %2 {offsets = [43, 0], sizes = [1, 512], strides = [1, 1]} : vector<49x512xf32> to vector<1x512xf32>
    %316 = vector.shape_cast %315 : vector<1x512xf32> to vector<512xf32>
    %317 = vector.shape_cast %316 : vector<512xf32> to vector<1x512xf32>
    %318 = vector.broadcast %317 : vector<1x512xf32> to vector<16x512xf32>
    %319 = arith.mulf %314, %318 : vector<16x512xf32>
    %320 = arith.addf %313, %319 : vector<16x512xf32>
    %321 = vector.extract_strided_slice %306 {offsets = [0, 64], sizes = [16, 512], strides = [1, 1]} : vector<16x704xf32> to vector<16x512xf32>
    %322 = vector.extract_strided_slice %2 {offsets = [44, 0], sizes = [1, 512], strides = [1, 1]} : vector<49x512xf32> to vector<1x512xf32>
    %323 = vector.shape_cast %322 : vector<1x512xf32> to vector<512xf32>
    %324 = vector.shape_cast %323 : vector<512xf32> to vector<1x512xf32>
    %325 = vector.broadcast %324 : vector<1x512xf32> to vector<16x512xf32>
    %326 = arith.mulf %321, %325 : vector<16x512xf32>
    %327 = arith.addf %320, %326 : vector<16x512xf32>
    %328 = vector.extract_strided_slice %306 {offsets = [0, 96], sizes = [16, 512], strides = [1, 1]} : vector<16x704xf32> to vector<16x512xf32>
    %329 = vector.extract_strided_slice %2 {offsets = [45, 0], sizes = [1, 512], strides = [1, 1]} : vector<49x512xf32> to vector<1x512xf32>
    %330 = vector.shape_cast %329 : vector<1x512xf32> to vector<512xf32>
    %331 = vector.shape_cast %330 : vector<512xf32> to vector<1x512xf32>
    %332 = vector.broadcast %331 : vector<1x512xf32> to vector<16x512xf32>
    %333 = arith.mulf %328, %332 : vector<16x512xf32>
    %334 = arith.addf %327, %333 : vector<16x512xf32>
    %335 = vector.extract_strided_slice %306 {offsets = [0, 128], sizes = [16, 512], strides = [1, 1]} : vector<16x704xf32> to vector<16x512xf32>
    %336 = vector.extract_strided_slice %2 {offsets = [46, 0], sizes = [1, 512], strides = [1, 1]} : vector<49x512xf32> to vector<1x512xf32>
    %337 = vector.shape_cast %336 : vector<1x512xf32> to vector<512xf32>
    %338 = vector.shape_cast %337 : vector<512xf32> to vector<1x512xf32>
    %339 = vector.broadcast %338 : vector<1x512xf32> to vector<16x512xf32>
    %340 = arith.mulf %335, %339 : vector<16x512xf32>
    %341 = arith.addf %334, %340 : vector<16x512xf32>
    %342 = vector.extract_strided_slice %306 {offsets = [0, 160], sizes = [16, 512], strides = [1, 1]} : vector<16x704xf32> to vector<16x512xf32>
    %343 = vector.extract_strided_slice %2 {offsets = [47, 0], sizes = [1, 512], strides = [1, 1]} : vector<49x512xf32> to vector<1x512xf32>
    %344 = vector.shape_cast %343 : vector<1x512xf32> to vector<512xf32>
    %345 = vector.shape_cast %344 : vector<512xf32> to vector<1x512xf32>
    %346 = vector.broadcast %345 : vector<1x512xf32> to vector<16x512xf32>
    %347 = arith.mulf %342, %346 : vector<16x512xf32>
    %348 = arith.addf %341, %347 : vector<16x512xf32>
    %349 = vector.extract_strided_slice %306 {offsets = [0, 192], sizes = [16, 512], strides = [1, 1]} : vector<16x704xf32> to vector<16x512xf32>
    %350 = vector.extract_strided_slice %2 {offsets = [48, 0], sizes = [1, 512], strides = [1, 1]} : vector<49x512xf32> to vector<1x512xf32>
    %351 = vector.shape_cast %350 : vector<1x512xf32> to vector<512xf32>
    %352 = vector.shape_cast %351 : vector<512xf32> to vector<1x512xf32>
    %353 = vector.broadcast %352 : vector<1x512xf32> to vector<16x512xf32>
    %354 = arith.mulf %349, %353 : vector<16x512xf32>
    %355 = arith.addf %348, %354 : vector<16x512xf32>
    %c0_6 = arith.constant 0 : index
    %c0_7 = arith.constant 0 : index
    %c0_8 = arith.constant 0 : index
    %356 = vector.load %arg4[%c0_6, %c0_7, %c0_8] : memref<1x16x512xf32, #tpu.memory_space<vmem>>, vector<1x16x512xf32>
    %357 = vector.shape_cast %356 : vector<1x16x512xf32> to vector<16x512xf32>
    %358 = vector.shape_cast %355 : vector<16x512xf32> to vector<1x16x512xf32>
    tpu.vector_store %arg4[%c0_6, %c0_7, %c0_8], %358 {strides = array<i32>} : memref<1x16x512xf32, #tpu.memory_space<vmem>>, vector<1x16x512xf32>,
    return
  }
  func.func @transform_0(%arg0: i32) -> (i32, i32, i32) {
    %c0_i32 = arith.constant 0 : i32
    %c0_i32_0 = arith.constant 0 : i32
    %c0_i32_1 = arith.constant 0 : i32
    return %arg0, %c0_i32, %c0_i32_0 : i32, i32, i32
  }
  func.func @transform_1(%arg0: i32) -> (i32, i32) {
    %c0_i32 = arith.constant 0 : i32
    %c0_i32_0 = arith.constant 0 : i32
    %c0_i32_1 = arith.constant 0 : i32
    return %c0_i32, %c0_i32_0 : i32, i32
  }
  func.func @transform_2(%arg0: i32) -> (i32, i32) {
    %c0_i32 = arith.constant 0 : i32
    %c0_i32_0 = arith.constant 0 : i32
    %c0_i32_1 = arith.constant 0 : i32
    return %c0_i32, %c0_i32_0 : i32, i32
  }
  func.func @transform_3(%arg0: i32) -> (i32, i32, i32) {
    %c0_i32 = arith.constant 0 : i32
    %c0_i32_0 = arith.constant 0 : i32
    %c0_i32_1 = arith.constant 0 : i32
    return %arg0, %c0_i32, %c0_i32_0 : i32, i32, i32
  }
}

</mosaic_0001>

<llo_original>
// kernel: dwconv7x7.1
$region0: #{dwconv7x7.1}
  #allocation0 [shape = 'u32[]', space=smem, size = 0x4, offset = 0x4, fixed_abs, tag = 'smem constant byte address 0x4 - core index']
  #allocation1 [shape = 'u32[144,128]{1,0:T(1,128)}', space=vmem, size = 0x12000, scoped, tag = 'internal scratch']
  %s0 = inlined_call_operand.vmem [shape: f32[2,22,704], index: 0, kind: input, shape index: {}]
  %s1 = inlined_call_operand.vmem [shape: f32[49,512], index: 1, kind: input, shape index: {}]
  %s2 = inlined_call_operand.vmem [shape: f32[1,512], index: 2, kind: input, shape index: {}]
  %s3 = inlined_call_operand.vmem [shape: f32[2,16,512], index: 3, kind: output, shape index: {}]
  %s4 = sld [smem:[#allocation0]]
  $region45: #{dwconv7x7.1} parent=0
    _
  %s6 = ssub.s32 1, %s4
  %s7 = scalar_select 0, %s6, %s4
  loop: start=0, step=1, limit=4
  $region2: #{dwconv7x7.1} parent=0 // loop_pre_header
    _
  $region3: #{dwconv7x7.1} parent=0 // loop_header
    %s9 = sphi 0, %s13
    %p10 = scmp.ge.s32.totalorder %s9, 4
    %s19 = sphi 0, %s21
    %s22 = sphi 0, %s19
    %s23 = sphi 0, %s22
    %s39 = sphi 0, %s23
    %s43 = sphi 0, %s43
    %s45 = sphi 0, %s43
    %s46 = sphi 0, %s45
    %s60 = sphi 0, %s46
    %s64 = sphi 0, %s64
    %s66 = sphi 0, %s64
    %s67 = sphi 0, %s66
    %s81 = sphi 0, %s67
    %s87 = sphi 0, %s89
    %s90 = sphi 0, %s87
    %s91 = sphi 0, %s90
    %s107 = sphi 0, %s91
  $region4: #{dwconv7x7.1} parent=0 // loop_header_branch
    %12 = sbr.rel (%p10) target = $region8
  $region5: #{dwconv7x7.1} parent=0 // loop_body
    %s14 = ssub.s32 %s9, 1
    %s15 = ssub.s32 %s9, 2
    %s16 = sadd.s32 %s9, 1
    %s17 = ssub.s32 %s9, %s16
    %p18 = scmp.eq.s32.totalorder %s17, 0
    %s20 = sadd.s32 %s19, 1
    %s21 = scalar_select %p18, %s19, %s20
    %p24 = pneg %p18
    %p25 = scmp.eq.s32.totalorder %s9, 1
    %p26 = por %p24, %p25
    %p27 = scmp.ne.s32.totalorder %s19, %s22
    %p28 = scmp.eq.s32.totalorder %s9, 0
    %p29 = por %p27, %p28
    %p30 = scmp.ne.s32.totalorder %s19, %s22
    %p31 = scmp.eq.s32.totalorder %s14, 1
    %p32 = por %p30, %p31
    %p33 = scmp.ne.s32.totalorder %s22, %s23
    %p34 = scmp.eq.s32.totalorder %s14, 0
    %p35 = por %p33, %p34
    %p36 = scmp.ne.s32.totalorder %s22, %s23
    %p37 = scmp.eq.s32.totalorder %s15, 1
    %p38 = por %p36, %p37
    %p40 = scmp.ne.s32.totalorder %s23, %s39
    %p41 = scmp.eq.s32.totalorder %s15, 0
    %p42 = por %p40, %p41
    %s44 = sadd.s32 %s43, 1
    %p47 = scmp.eq.s32.totalorder %s9, 1
    %p48 = scmp.ne.s32.totalorder %s43, %s45
    %p49 = scmp.eq.s32.totalorder %s9, 0
    %p50 = por %p48, %p49
    %p51 = scmp.ne.s32.totalorder %s43, %s45
    %p52 = scmp.eq.s32.totalorder %s14, 1
    %p53 = por %p51, %p52
    %p54 = scmp.ne.s32.totalorder %s45, %s46
    %p55 = scmp.eq.s32.totalorder %s14, 0
    %p56 = por %p54, %p55
    %p57 = scmp.ne.s32.totalorder %s45, %s46
    %p58 = scmp.eq.s32.totalorder %s15, 1
    %p59 = por %p57, %p58
    %p61 = scmp.ne.s32.totalorder %s46, %s60
    %p62 = scmp.eq.s32.totalorder %s15, 0
    %p63 = por %p61, %p62
    %s65 = sadd.s32 %s64, 1
    %p68 = scmp.eq.s32.totalorder %s9, 1
    %p69 = scmp.ne.s32.totalorder %s64, %s66
    %p70 = scmp.eq.s32.totalorder %s9, 0
    %p71 = por %p69, %p70
    %p72 = scmp.ne.s32.totalorder %s64, %s66
    %p73 = scmp.eq.s32.totalorder %s14, 1
    %p74 = por %p72, %p73
    %p75 = scmp.ne.s32.totalorder %s66, %s67
    %p76 = scmp.eq.s32.totalorder %s14, 0
    %p77 = por %p75, %p76
    %p78 = scmp.ne.s32.totalorder %s66, %s67
    %p79 = scmp.eq.s32.totalorder %s15, 1
    %p80 = por %p78, %p79
    %p82 = scmp.ne.s32.totalorder %s67, %s81
    %p83 = scmp.eq.s32.totalorder %s15, 0
    %p84 = por %p82, %p83
    %s85 = ssub.s32 %s9, %s16
    %p86 = scmp.eq.s32.totalorder %s85, 0
    %s88 = sadd.s32 %s87, 1
    %s89 = scalar_select %p86, %s87, %s88
    %p92 = pneg %p86
    %p93 = scmp.eq.s32.totalorder %s9, 1
    %p94 = por %p92, %p93
    %p95 = scmp.ne.s32.totalorder %s87, %s90
    %p96 = scmp.eq.s32.totalorder %s9, 0
    %p97 = por %p95, %p96
    %p98 = scmp.ne.s32.totalorder %s87, %s90
    %p99 = scmp.eq.s32.totalorder %s14, 1
    %p100 = por %p98, %p99
    %p101 = scmp.ne.s32.totalorder %s90, %s91
    %p102 = scmp.eq.s32.totalorder %s14, 0
    %p103 = por %p101, %p102
    %p104 = scmp.ne.s32.totalorder %s90, %s91
    %p105 = scmp.eq.s32.totalorder %s15, 1
    %p106 = por %p104, %p105
    %p108 = scmp.ne.s32.totalorder %s91, %s107
    %p109 = scmp.eq.s32.totalorder %s15, 0
    %p110 = por %p108, %p109
    %p111 = scmp.le.s32.totalorder 1, %s9
    %p112 = scmp.lt.s32.totalorder %s9, 3
    %p113 = pnand %p111, %p112
    %p114 = pneg %p113
    // Predicated region
    $region9: #{dwconv7x7.1} parent=5 // pred_check
      _
    $region10: #{dwconv7x7.1} parent=5 // pred_check_branch
      %116 = sbr.rel (%p113) target = $region12
    $region11: #{dwconv7x7.1} parent=5 // pred_region
      %s117 = ssub.s32 %s9, 1
      // Predicated region
      $region13: #{dwconv7x7.1} parent=11 // pred_check
        %p118 = pneg %p56
      $region14: #{dwconv7x7.1} parent=11 // pred_check_branch
        %120 = sbr.rel (%p118) target = $region16
      $region15: #{dwconv7x7.1} parent=11 // pred_region
        _
      $region16: #{dwconv7x7.1} parent=11 // pred_fallthru
        _
      // Predicated region
      $region17: #{dwconv7x7.1} parent=11 // pred_check
        %p121 = pneg %p77
      $region18: #{dwconv7x7.1} parent=11 // pred_check_branch
        %123 = sbr.rel (%p121) target = $region20
      $region19: #{dwconv7x7.1} parent=11 // pred_region
        _
      $region20: #{dwconv7x7.1} parent=11 // pred_fallthru
        _
    $region12: #{dwconv7x7.1} parent=5 // pred_fallthru
      _
    %p124 = scmp.lt.s32.totalorder %s9, 2
    // Predicated region
    $region21: #{dwconv7x7.1} parent=5 // pred_check
      %p125 = pneg %p124
    $region22: #{dwconv7x7.1} parent=5 // pred_check_branch
      %127 = sbr.rel (%p125) target = $region24
    $region23: #{dwconv7x7.1} parent=5 // pred_region
      // Predicated region
      $region25: #{dwconv7x7.1} parent=23 // pred_check
        %p128 = pneg %p29
      $region26: #{dwconv7x7.1} parent=23 // pred_check_branch
        %130 = sbr.rel (%p128) target = $region28
      $region27: #{dwconv7x7.1} parent=23 // pred_region
        %p131 = scmp.lt.s32.totalorder %s9, 1
        %s132 = scalar_select %p131, %s9, 1
        %s133 = smul.addr %s132, 18
        %s134 = smul.addr %s133, 8
        %s135 = scalar_lea.vmem %s0, %s134
      $region28: #{dwconv7x7.1} parent=23 // pred_fallthru
        _
    $region24: #{dwconv7x7.1} parent=5 // pred_fallthru
      _
    %p136 = scmp.le.s32.totalorder 1, %s9
    %p137 = scmp.lt.s32.totalorder %s9, 3
    %p138 = pnand %p136, %p137
    %p139 = pneg %p138
    // Predicated region
    $region29: #{dwconv7x7.1} parent=5 // pred_check
      _
    $region30: #{dwconv7x7.1} parent=5 // pred_check_branch
      %141 = sbr.rel (%p138) target = $region32
    $region31: #{dwconv7x7.1} parent=5 // pred_region
      %s142 = ssub.s32 %s9, 1
      %p143 = scmp.lt.s32.totalorder %s14, 1
      %s144 = scalar_select %p143, %s14, 1
      %s145 = smul.addr %s144, 18
      %s146 = smul.addr %s145, 8
      %s147 = scalar_lea.vmem %s0, %s146
      %p148 = pneg %p35
      %p149 = pneg %p32
      %p150 = pneg %p56
      %p151 = pneg %p53
      %p152 = pneg %p77
      %p153 = pneg %p74
      %p154 = pneg %p103
      %p155 = pneg %p100
      %p156 = scmp.lt.s32.totalorder %s14, 1
      %s157 = scalar_select %p156, %s14, 1
      %s158 = smul.addr %s157, 8
      %s159 = smul.addr %s158, 8
      %s160 = scalar_lea.vmem %s3, %s159
      %p161 = scmp.lt.s32.totalorder %s14, 1
      %s162 = scalar_select %p161, %s14, 1
      %s163 = smul.addr %s162, 18
      %s164 = smul.addr %s163, 8
      %s165 = scalar_lea.vmem %s0, %s164
      %p166 = scmp.lt.s32.totalorder %s14, 1
      %s167 = scalar_select %p166, %s14, 1
      %s168 = smul.addr %s167, 8
      %s169 = smul.addr %s168, 8
      %s170 = scalar_lea.vmem %s3, %s169
      %v171 = vld [vmem:[%s165] sm:$0xff]
      %v172 = vld [vmem:[%s165 + $0x8] sm:$0xff]
      %v173 = vld [vmem:[%s165 + $0x10] sm:$0xff]
      %v174 = vld [vmem:[%s165 + $0x18] sm:$0xff]
      %v175 = vld [vmem:[%s165 + $0x20] sm:$0xff]
      %v176 = vld [vmem:[%s165 + $0x28] sm:$0xff]
      %v177 = vld [vmem:[%s165 + $0x30] sm:$0xff]
      %v178 = vld [vmem:[%s165 + $0x38] sm:$0xff]
      %v179 = vld [vmem:[%s165 + $0x40] sm:$0xff]
      %v180 = vld [vmem:[%s165 + $0x48] sm:$0xff]
      %v181 = vld [vmem:[%s165 + $0x50] sm:$0xff]
      %v182 = vld [vmem:[%s165 + $0x58] sm:$0xff]
      %v183 = vld [vmem:[%s165 + $0x60] sm:$0x3f]
      %v184 = vld [vmem:[%s165 + $0x68] sm:$0x3f]
      %v185 = vld [vmem:[%s165 + $0x70] sm:$0x3f]
      %v186 = vld [vmem:[%s165 + $0x78] sm:$0x3f]
      %v187 = vld [vmem:[%s165 + $0x80] sm:$0x3f]
      %v188 = vld [vmem:[%s165 + $0x88] sm:$0x3f]
      %v189 = vld [vmem:[%s1] sm:$0xff]
      %v190 = vld [vmem:[%s1 + $0x8] sm:$0xff]
      %v191 = vld [vmem:[%s1 + $0x10] sm:$0xff]
      %v192 = vld [vmem:[%s1 + $0x18] sm:$0xff]
      %v193 = vld [vmem:[%s1 + $0x20] sm:$0xff]
      %v194 = vld [vmem:[%s1 + $0x28] sm:$0xff]
      %v195 = vld [vmem:[%s1 + $0x30] sm:$0xff]
      %v196 = vld [vmem:[%s1 + $0x38] sm:$0xff]
      %v197 = vld [vmem:[%s1 + $0x40] sm:$0xff]
      %v198 = vld [vmem:[%s1 + $0x48] sm:$0xff]
      %v199 = vld [vmem:[%s1 + $0x50] sm:$0xff]
      %v200 = vld [vmem:[%s1 + $0x58] sm:$0xff]
      %v201 = vld [vmem:[%s1 + $0x60] sm:$0xff]
      %v202 = vld [vmem:[%s1 + $0x68] sm:$0xff]
      %v203 = vld [vmem:[%s1 + $0x70] sm:$0xff]
      %v204 = vld [vmem:[%s1 + $0x78] sm:$0xff]
      %v205 = vld [vmem:[%s1 + $0x80] sm:$0xff]
      %v206 = vld [vmem:[%s1 + $0x88] sm:$0xff]
      %v207 = vld [vmem:[%s1 + $0x90] sm:$0xff]
      %v208 = vld [vmem:[%s1 + $0x98] sm:$0xff]
      %v209 = vld [vmem:[%s1 + $0xa0] sm:$0xff]
      %v210 = vld [vmem:[%s1 + $0xa8] sm:$0xff]
      %v211 = vld [vmem:[%s1 + $0xb0] sm:$0xff]
      %v212 = vld [vmem:[%s1 + $0xb8] sm:$0xff]
      %v213 = vld [vmem:[%s1 + $0xc0] sm:$0x1]
      %v214 = vld [vmem:[%s1 + $0xc8] sm:$0x1]
      %v215 = vld [vmem:[%s1 + $0xd0] sm:$0x1]
      %v216 = vld [vmem:[%s1 + $0xd8] sm:$0x1]
      %v217 = vld [vmem:[%s2] sm:$0xf]
      %v219 = vlaneseq
      %v220 = vshrl.u32 %v219, 7
      %v221 = vsub.s32 0, %v220
      %v222 = vrot.slane %v217, %v221
      %v223 = vlaneseq
      %v224 = vshrl.u32 %v223, 7
      %v225 = vsub.s32 1, %v224
      %v226 = vrot.slane %v217, %v225
      %v227 = vlaneseq
      %v228 = vshrl.u32 %v227, 7
      %v229 = vsub.s32 2, %v228
      %v230 = vrot.slane %v217, %v229
      %v231 = vlaneseq
      %v232 = vshrl.u32 %v231, 7
      %v233 = vsub.s32 3, %v232
      %v234 = vrot.slane %v217, %v233
      %v239 = vlaneseq
      %v240 = vshrl.u32 %v239, 7
      %v241 = vsub.s32 0, %v240
      %v242 = vrot.slane %v189, %v241
      %v243 = vlaneseq
      %v244 = vshrl.u32 %v243, 7
      %v245 = vsub.s32 0, %v244
      %v246 = vrot.slane %v190, %v245
      %v247 = vlaneseq
      %v248 = vshrl.u32 %v247, 7
      %v249 = vsub.s32 0, %v248
      %v250 = vrot.slane %v191, %v249
      %v251 = vlaneseq
      %v252 = vshrl.u32 %v251, 7
      %v253 = vsub.s32 0, %v252
      %v254 = vrot.slane %v192, %v253
      %v255 = vmul.f32 %v171, %v242
      %v256 = vmul.f32 %v172, %v246
      %v257 = vmul.f32 %v173, %v250
      %v258 = vmul.f32 %v174, %v254
      %v259 = vmul.f32 %v177, %v242
      %v260 = vmul.f32 %v178, %v246
      %v261 = vmul.f32 %v179, %v250
      %v262 = vmul.f32 %v180, %v254
      %v263 = vadd.f32 %v222, %v255
      %v264 = vadd.f32 %v226, %v256
      %v265 = vadd.f32 %v230, %v257
      %v266 = vadd.f32 %v234, %v258
      %v267 = vadd.f32 %v222, %v259
      %v268 = vadd.f32 %v226, %v260
      %v269 = vadd.f32 %v230, %v261
      %v270 = vadd.f32 %v234, %v262
      %v271 = vlaneseq
      %v272 = vshrl.u32 %v271, 7
      %v273 = vsub.s32 1, %v272
      %v274 = vrot.slane %v189, %v273
      %v275 = vlaneseq
      %v276 = vshrl.u32 %v275, 7
      %v277 = vsub.s32 1, %v276
      %v278 = vrot.slane %v190, %v277
      %v279 = vlaneseq
      %v280 = vshrl.u32 %v279, 7
      %v281 = vsub.s32 1, %v280
      %v282 = vrot.slane %v191, %v281
      %v283 = vlaneseq
      %v284 = vshrl.u32 %v283, 7
      %v285 = vsub.s32 1, %v284
      %v286 = vrot.slane %v192, %v285
      %291 = vrot.lane.b32.xlu0 %v274, 32
      %v292 = vpop.permute.xlu0 %291
      %293 = vrot.lane.b32.xlu0 %v278, 32
      %v294 = vpop.permute.xlu0 %293
      %295 = vrot.lane.b32.xlu0 %v282, 32
      %v296 = vpop.permute.xlu0 %295
      %297 = vrot.lane.b32.xlu0 %v286, 32
      %v298 = vpop.permute.xlu0 %297
      %vm299 = vcmask 261120
      %v300 = vsel %vm299, %v292, %v294
      %v301 = vsel %vm299, %v294, %v296
      %v302 = vsel %vm299, %v296, %v298
      %v308 = vmul.f32 %v171, %v292
      %v309 = vmul.f32 %v172, %v300
      %v310 = vmul.f32 %v173, %v301
      %v311 = vmul.f32 %v174, %v302
      %v312 = vmul.f32 %v175, %v298
      %v313 = vmul.f32 %v177, %v292
      %v314 = vmul.f32 %v178, %v300
      %v315 = vmul.f32 %v179, %v301
      %v316 = vmul.f32 %v180, %v302
      %v317 = vmul.f32 %v181, %v298
      %328 = vrot.lane.b32.xlu0 %v308, 96
      %v329 = vpop.permute.xlu0 %328
      %330 = vrot.lane.b32.xlu0 %v309, 96
      %v331 = vpop.permute.xlu0 %330
      %332 = vrot.lane.b32.xlu0 %v310, 96
      %v333 = vpop.permute.xlu0 %332
      %334 = vrot.lane.b32.xlu0 %v311, 96
      %v335 = vpop.permute.xlu0 %334
      %336 = vrot.lane.b32.xlu0 %v312, 96
      %v337 = vpop.permute.xlu0 %336
      %338 = vrot.lane.b32.xlu0 %v313, 96
      %v339 = vpop.permute.xlu0 %338
      %340 = vrot.lane.b32.xlu0 %v314, 96
      %v341 = vpop.permute.xlu0 %340
      %342 = vrot.lane.b32.xlu0 %v315, 96
      %v343 = vpop.permute.xlu0 %342
      %344 = vrot.lane.b32.xlu0 %v316, 96
      %v345 = vpop.permute.xlu0 %344
      %346 = vrot.lane.b32.xlu0 %v317, 96
      %v347 = vpop.permute.xlu0 %346
      %vm348 = vcmask 785408
      %v349 = vsel %vm348, %v329, %v331
      %v350 = vsel %vm348, %v331, %v333
      %v351 = vsel %vm348, %v333, %v335
      %v352 = vsel %vm348, %v335, %v337
      %v353 = vsel %vm348, %v339, %v341
      %v354 = vsel %vm348, %v341, %v343
      %v355 = vsel %vm348, %v343, %v345
      %v356 = vsel %vm348, %v345, %v347
      %v365 = vadd.f32 %v263, %v349
      %v366 = vadd.f32 %v264, %v350
      %v367 = vadd.f32 %v265, %v351
      %v368 = vadd.f32 %v266, %v352
      %v369 = vadd.f32 %v267, %v353
      %v370 = vadd.f32 %v268, %v354
      %v371 = vadd.f32 %v269, %v355
      %v372 = vadd.f32 %v270, %v356
      %v373 = vlaneseq
      %v374 = vshrl.u32 %v373, 7
      %v375 = vsub.s32 2, %v374
      %v376 = vrot.slane %v189, %v375
      %v377 = vlaneseq
      %v378 = vshrl.u32 %v377, 7
      %v379 = vsub.s32 2, %v378
      %v380 = vrot.slane %v190, %v379
      %v381 = vlaneseq
      %v382 = vshrl.u32 %v381, 7
      %v383 = vsub.s32 2, %v382
      %v384 = vrot.slane %v191, %v383
      %v385 = vlaneseq
      %v386 = vshrl.u32 %v385, 7
      %v387 = vsub.s32 2, %v386
      %v388 = vrot.slane %v192, %v387
      %393 = vrot.lane.b32.xlu0 %v376, 64
      %v394 = vpop.permute.xlu0 %393
      %395 = vrot.lane.b32.xlu0 %v380, 64
      %v396 = vpop.permute.xlu0 %395
      %397 = vrot.lane.b32.xlu0 %v384, 64
      %v398 = vpop.permute.xlu0 %397
      %399 = vrot.lane.b32.xlu0 %v388, 64
      %v400 = vpop.permute.xlu0 %399
      %vm401 = vcmask 523264
      %v402 = vsel %vm401, %v394, %v396
      %v403 = vsel %vm401, %v396, %v398
      %v404 = vsel %vm401, %v398, %v400
      %v410 = vmul.f32 %v171, %v394
      %v411 = vmul.f32 %v172, %v402
      %v412 = vmul.f32 %v173, %v403
      %v413 = vmul.f32 %v174, %v404
      %v414 = vmul.f32 %v175, %v400
      %v415 = vmul.f32 %v177, %v394
      %v416 = vmul.f32 %v178, %v402
      %v417 = vmul.f32 %v179, %v403
      %v418 = vmul.f32 %v180, %v404
      %v419 = vmul.f32 %v181, %v400
      %430 = vrot.lane.b32.xlu0 %v410, 64
      %v431 = vpop.permute.xlu0 %430
      %432 = vrot.lane.b32.xlu0 %v411, 64
      %v433 = vpop.permute.xlu0 %432
      %434 = vrot.lane.b32.xlu0 %v412, 64
      %v435 = vpop.permute.xlu0 %434
      %436 = vrot.lane.b32.xlu0 %v413, 64
      %v437 = vpop.permute.xlu0 %436
      %438 = vrot.lane.b32.xlu0 %v414, 64
      %v439 = vpop.permute.xlu0 %438
      %440 = vrot.lane.b32.xlu0 %v415, 64
      %v441 = vpop.permute.xlu0 %440
      %442 = vrot.lane.b32.xlu0 %v416, 64
      %v443 = vpop.permute.xlu0 %442
      %444 = vrot.lane.b32.xlu0 %v417, 64
      %v445 = vpop.permute.xlu0 %444
      %446 = vrot.lane.b32.xlu0 %v418, 64
      %v447 = vpop.permute.xlu0 %446
      %448 = vrot.lane.b32.xlu0 %v419, 64
      %v449 = vpop.permute.xlu0 %448
      %v450 = vsel %vm401, %v431, %v433
      %v451 = vsel %vm401, %v433, %v435
      %v452 = vsel %vm401, %v435, %v437
      %v453 = vsel %vm401, %v437, %v439
      %v454 = vsel %vm401, %v441, %v443
      %v455 = vsel %vm401, %v443, %v445
      %v456 = vsel %vm401, %v445, %v447
      %v457 = vsel %vm401, %v447, %v449
      %v466 = vadd.f32 %v365, %v450
      %v467 = vadd.f32 %v366, %v451
      %v468 = vadd.f32 %v367, %v452
      %v469 = vadd.f32 %v368, %v453
      %v470 = vadd.f32 %v369, %v454
      %v471 = vadd.f32 %v370, %v455
      %v472 = vadd.f32 %v371, %v456
      %v473 = vadd.f32 %v372, %v457
      %v474 = vlaneseq
      %v475 = vshrl.u32 %v474, 7
      %v476 = vsub.s32 3, %v475
      %v477 = vrot.slane %v189, %v476
      %v478 = vlaneseq
      %v479 = vshrl.u32 %v478, 7
      %v480 = vsub.s32 3, %v479
      %v481 = vrot.slane %v190, %v480
      %v482 = vlaneseq
      %v483 = vshrl.u32 %v482, 7
      %v484 = vsub.s32 3, %v483
      %v485 = vrot.slane %v191, %v484
      %v486 = vlaneseq
      %v487 = vshrl.u32 %v486, 7
      %v488 = vsub.s32 3, %v487
      %v489 = vrot.slane %v192, %v488
      %494 = vrot.lane.b32.xlu0 %v477, 96
      %v495 = vpop.permute.xlu0 %494
      %496 = vrot.lane.b32.xlu0 %v481, 96
      %v497 = vpop.permute.xlu0 %496
      %498 = vrot.lane.b32.xlu0 %v485, 96
      %v499 = vpop.permute.xlu0 %498
      %500 = vrot.lane.b32.xlu0 %v489, 96
      %v501 = vpop.permute.xlu0 %500
      %v502 = vsel %vm348, %v495, %v497
      %v503 = vsel %vm348, %v497, %v499
      %v504 = vsel %vm348, %v499, %v501
      %v510 = vmul.f32 %v171, %v495
      %v511 = vmul.f32 %v172, %v502
      %v512 = vmul.f32 %v173, %v503
      %v513 = vmul.f32 %v174, %v504
      %v514 = vmul.f32 %v175, %v501
      %v515 = vmul.f32 %v177, %v495
      %v516 = vmul.f32 %v178, %v502
      %v517 = vmul.f32 %v179, %v503
      %v518 = vmul.f32 %v180, %v504
      %v519 = vmul.f32 %v181, %v501
      %530 = vrot.lane.b32.xlu0 %v510, 32
      %v531 = vpop.permute.xlu0 %530
      %532 = vrot.lane.b32.xlu0 %v511, 32
      %v533 = vpop.permute.xlu0 %532
      %534 = vrot.lane.b32.xlu0 %v512, 32
      %v535 = vpop.permute.xlu0 %534
      %536 = vrot.lane.b32.xlu0 %v513, 32
      %v537 = vpop.permute.xlu0 %536
      %538 = vrot.lane.b32.xlu0 %v514, 32
      %v539 = vpop.permute.xlu0 %538
      %540 = vrot.lane.b32.xlu0 %v515, 32
      %v541 = vpop.permute.xlu0 %540
      %542 = vrot.lane.b32.xlu0 %v516, 32
      %v543 = vpop.permute.xlu0 %542
      %544 = vrot.lane.b32.xlu0 %v517, 32
      %v545 = vpop.permute.xlu0 %544
      %546 = vrot.lane.b32.xlu0 %v518, 32
      %v547 = vpop.permute.xlu0 %546
      %548 = vrot.lane.b32.xlu0 %v519, 32
      %v549 = vpop.permute.xlu0 %548
      %v550 = vsel %vm299, %v531, %v533
      %v551 = vsel %vm299, %v533, %v535
      %v552 = vsel %vm299, %v535, %v537
      %v553 = vsel %vm299, %v537, %v539
      %v554 = vsel %vm299, %v541, %v543
      %v555 = vsel %vm299, %v543, %v545
      %v556 = vsel %vm299, %v545, %v547
      %v557 = vsel %vm299, %v547, %v549
      %v566 = vadd.f32 %v466, %v550
      %v567 = vadd.f32 %v467, %v551
      %v568 = vadd.f32 %v468, %v552
      %v569 = vadd.f32 %v469, %v553
      %v570 = vadd.f32 %v470, %v554
      %v571 = vadd.f32 %v471, %v555
      %v572 = vadd.f32 %v472, %v556
      %v573 = vadd.f32 %v473, %v557
      %v574 = vlaneseq
      %v575 = vshrl.u32 %v574, 7
      %v576 = vsub.s32 4, %v575
      %v577 = vrot.slane %v189, %v576
      %v578 = vlaneseq
      %v579 = vshrl.u32 %v578, 7
      %v580 = vsub.s32 4, %v579
      %v581 = vrot.slane %v190, %v580
      %v582 = vlaneseq
      %v583 = vshrl.u32 %v582, 7
      %v584 = vsub.s32 4, %v583
      %v585 = vrot.slane %v191, %v584
      %v586 = vlaneseq
      %v587 = vshrl.u32 %v586, 7
      %v588 = vsub.s32 4, %v587
      %v589 = vrot.slane %v192, %v588
      %v590 = vmul.f32 %v172, %v577
      %v591 = vmul.f32 %v173, %v581
      %v592 = vmul.f32 %v174, %v585
      %v593 = vmul.f32 %v175, %v589
      %v594 = vmul.f32 %v178, %v577
      %v595 = vmul.f32 %v179, %v581
      %v596 = vmul.f32 %v180, %v585
      %v597 = vmul.f32 %v181, %v589
      %v598 = vadd.f32 %v566, %v590
      %v599 = vadd.f32 %v567, %v591
      %v600 = vadd.f32 %v568, %v592
      %v601 = vadd.f32 %v569, %v593
      %v602 = vadd.f32 %v570, %v594
      %v603 = vadd.f32 %v571, %v595
      %v604 = vadd.f32 %v572, %v596
      %v605 = vadd.f32 %v573, %v597
      %v606 = vlaneseq
      %v607 = vshrl.u32 %v606, 7
      %v608 = vsub.s32 5, %v607
      %v609 = vrot.slane %v189, %v608
      %v610 = vlaneseq
      %v611 = vshrl.u32 %v610, 7
      %v612 = vsub.s32 5, %v611
      %v613 = vrot.slane %v190, %v612
      %v614 = vlaneseq
      %v615 = vshrl.u32 %v614, 7
      %v616 = vsub.s32 5, %v615
      %v617 = vrot.slane %v191, %v616
      %v618 = vlaneseq
      %v619 = vshrl.u32 %v618, 7
      %v620 = vsub.s32 5, %v619
      %v621 = vrot.slane %v192, %v620
      %626 = vrot.lane.b32.xlu0 %v609, 32
      %v627 = vpop.permute.xlu0 %626
      %628 = vrot.lane.b32.xlu0 %v613, 32
      %v629 = vpop.permute.xlu0 %628
      %630 = vrot.lane.b32.xlu0 %v617, 32
      %v631 = vpop.permute.xlu0 %630
      %632 = vrot.lane.b32.xlu0 %v621, 32
      %v633 = vpop.permute.xlu0 %632
      %v634 = vsel %vm299, %v627, %v629
      %v635 = vsel %vm299, %v629, %v631
      %v636 = vsel %vm299, %v631, %v633
      %v642 = vmul.f32 %v172, %v627
      %v643 = vmul.f32 %v173, %v634
      %v644 = vmul.f32 %v174, %v635
      %v645 = vmul.f32 %v175, %v636
      %v646 = vmul.f32 %v176, %v633
      %v647 = vmul.f32 %v178, %v627
      %v648 = vmul.f32 %v179, %v634
      %v649 = vmul.f32 %v180, %v635
      %v650 = vmul.f32 %v181, %v636
      %v651 = vmul.f32 %v182, %v633
      %662 = vrot.lane.b32.xlu0 %v642, 96
      %v663 = vpop.permute.xlu0 %662
      %664 = vrot.lane.b32.xlu0 %v643, 96
      %v665 = vpop.permute.xlu0 %664
      %666 = vrot.lane.b32.xlu0 %v644, 96
      %v667 = vpop.permute.xlu0 %666
      %668 = vrot.lane.b32.xlu0 %v645, 96
      %v669 = vpop.permute.xlu0 %668
      %670 = vrot.lane.b32.xlu0 %v646, 96
      %v671 = vpop.permute.xlu0 %670
      %672 = vrot.lane.b32.xlu0 %v647, 96
      %v673 = vpop.permute.xlu0 %672
      %674 = vrot.lane.b32.xlu0 %v648, 96
      %v675 = vpop.permute.xlu0 %674
      %676 = vrot.lane.b32.xlu0 %v649, 96
      %v677 = vpop.permute.xlu0 %676
      %678 = vrot.lane.b32.xlu0 %v650, 96
      %v679 = vpop.permute.xlu0 %678
      %680 = vrot.lane.b32.xlu0 %v651, 96
      %v681 = vpop.permute.xlu0 %680
      %v682 = vsel %vm348, %v663, %v665
      %v683 = vsel %vm348, %v665, %v667
      %v684 = vsel %vm348, %v667, %v669
      %v685 = vsel %vm348, %v669, %v671
      %v686 = vsel %vm348, %v673, %v675
      %v687 = vsel %vm348, %v675, %v677
      %v688 = vsel %vm348, %v677, %v679
      %v689 = vsel %vm348, %v679, %v681
      %v698 = vadd.f32 %v598, %v682
      %v699 = vadd.f32 %v599, %v683
      %v700 = vadd.f32 %v600, %v684
      %v701 = vadd.f32 %v601, %v685
      %v702 = vadd.f32 %v602, %v686
      %v703 = vadd.f32 %v603, %v687
      %v704 = vadd.f32 %v604, %v688
      %v705 = vadd.f32 %v605, %v689
      %v706 = vlaneseq
      %v707 = vshrl.u32 %v706, 7
      %v708 = vsub.s32 6, %v707
      %v709 = vrot.slane %v189, %v708
      %v710 = vlaneseq
      %v711 = vshrl.u32 %v710, 7
      %v712 = vsub.s32 6, %v711
      %v713 = vrot.slane %v190, %v712
      %v714 = vlaneseq
      %v715 = vshrl.u32 %v714, 7
      %v716 = vsub.s32 6, %v715
      %v717 = vrot.slane %v191, %v716
      %v718 = vlaneseq
      %v719 = vshrl.u32 %v718, 7
      %v720 = vsub.s32 6, %v719
      %v721 = vrot.slane %v192, %v720
      %726 = vrot.lane.b32.xlu0 %v709, 64
      %v727 = vpop.permute.xlu0 %726
      %728 = vrot.lane.b32.xlu0 %v713, 64
      %v729 = vpop.permute.xlu0 %728
      %730 = vrot.lane.b32.xlu0 %v717, 64
      %v731 = vpop.permute.xlu0 %730
      %732 = vrot.lane.b32.xlu0 %v721, 64
      %v733 = vpop.permute.xlu0 %732
      %v734 = vsel %vm401, %v727, %v729
      %v735 = vsel %vm401, %v729, %v731
      %v736 = vsel %vm401, %v731, %v733
      %v742 = vmul.f32 %v172, %v727
      %v743 = vmul.f32 %v173, %v734
      %v744 = vmul.f32 %v174, %v735
      %v745 = vmul.f32 %v175, %v736
      %v746 = vmul.f32 %v176, %v733
      %v747 = vmul.f32 %v178, %v727
      %v748 = vmul.f32 %v179, %v734
      %v749 = vmul.f32 %v180, %v735
      %v750 = vmul.f32 %v181, %v736
      %v751 = vmul.f32 %v182, %v733
      %762 = vrot.lane.b32.xlu0 %v742, 64
      %v763 = vpop.permute.xlu0 %762
      %764 = vrot.lane.b32.xlu0 %v743, 64
      %v765 = vpop.permute.xlu0 %764
      %766 = vrot.lane.b32.xlu0 %v744, 64
      %v767 = vpop.permute.xlu0 %766
      %768 = vrot.lane.b32.xlu0 %v745, 64
      %v769 = vpop.permute.xlu0 %768
      %770 = vrot.lane.b32.xlu0 %v746, 64
      %v771 = vpop.permute.xlu0 %770
      %772 = vrot.lane.b32.xlu0 %v747, 64
      %v773 = vpop.permute.xlu0 %772
      %774 = vrot.lane.b32.xlu0 %v748, 64
      %v775 = vpop.permute.xlu0 %774
      %776 = vrot.lane.b32.xlu0 %v749, 64
      %v777 = vpop.permute.xlu0 %776
      %778 = vrot.lane.b32.xlu0 %v750, 64
      %v779 = vpop.permute.xlu0 %778
      %780 = vrot.lane.b32.xlu0 %v751, 64
      %v781 = vpop.permute.xlu0 %780
      %v782 = vsel %vm401, %v763, %v765
      %v783 = vsel %vm401, %v765, %v767
      %v784 = vsel %vm401, %v767, %v769
      %v785 = vsel %vm401, %v769, %v771
      %v786 = vsel %vm401, %v773, %v775
      %v787 = vsel %vm401, %v775, %v777
      %v788 = vsel %vm401, %v777, %v779
      %v789 = vsel %vm401, %v779, %v781
      %v798 = vadd.f32 %v698, %v782
      %v799 = vadd.f32 %v699, %v783
      %v800 = vadd.f32 %v700, %v784
      %v801 = vadd.f32 %v701, %v785
      %v802 = vadd.f32 %v702, %v786
      %v803 = vadd.f32 %v703, %v787
      %v804 = vadd.f32 %v704, %v788
      %v805 = vadd.f32 %v705, %v789
      %v806 = vlaneseq
      %v807 = vshrl.u32 %v806, 7
      %v808 = vsub.s32 7, %v807
      %v809 = vrot.slane %v189, %v808
      %v810 = vlaneseq
      %v811 = vshrl.u32 %v810, 7
      %v812 = vsub.s32 7, %v811
      %v813 = vrot.slane %v190, %v812
      %v814 = vlaneseq
      %v815 = vshrl.u32 %v814, 7
      %v816 = vsub.s32 7, %v815
      %v817 = vrot.slane %v191, %v816
      %v818 = vlaneseq
      %v819 = vshrl.u32 %v818, 7
      %v820 = vsub.s32 7, %v819
      %v821 = vrot.slane %v192, %v820
      %v822 = vmul.f32 %v171, %v809
      %v823 = vmul.f32 %v172, %v813
      %v824 = vmul.f32 %v173, %v817
      %v825 = vmul.f32 %v174, %v821
      %v826 = vmul.f32 %v177, %v809
      %v827 = vmul.f32 %v178, %v813
      %v828 = vmul.f32 %v179, %v817
      %v829 = vmul.f32 %v180, %v821
      %v830 = vmul.f32 %v183, %v809
      %v831 = vmul.f32 %v184, %v813
      %v832 = vmul.f32 %v185, %v817
      %v833 = vmul.f32 %v186, %v821
      %vm846 = vcmask 1046528
      %v847 = vrot.slane %v822, 1
      %v848 = vrot.slane %v826, 1
      %v849 = vsel %vm846, %v847, %v848
      %v850 = vrot.slane %v823, 1
      %v851 = vrot.slane %v827, 1
      %v852 = vsel %vm846, %v850, %v851
      %v853 = vrot.slane %v824, 1
      %v854 = vrot.slane %v828, 1
      %v855 = vsel %vm846, %v853, %v854
      %v856 = vrot.slane %v825, 1
      %v857 = vrot.slane %v829, 1
      %v858 = vsel %vm846, %v856, %v857
      %v859 = vrot.slane %v830, 1
      %v860 = vsel %vm846, %v848, %v859
      %v861 = vrot.slane %v831, 1
      %v862 = vsel %vm846, %v851, %v861
      %v863 = vrot.slane %v832, 1
      %v864 = vsel %vm846, %v854, %v863
      %v865 = vrot.slane %v833, 1
      %v866 = vsel %vm846, %v857, %v865
      %v875 = vadd.f32 %v798, %v849
      %v876 = vadd.f32 %v799, %v852
      %v877 = vadd.f32 %v800, %v855
      %v878 = vadd.f32 %v801, %v858
      %v879 = vadd.f32 %v802, %v860
      %v880 = vadd.f32 %v803, %v862
      %v881 = vadd.f32 %v804, %v864
      %v882 = vadd.f32 %v805, %v866
      %v883 = vlaneseq
      %v884 = vshrl.u32 %v883, 7
      %v885 = vsub.s32 0, %v884
      %v886 = vrot.slane %v193, %v885
      %v887 = vlaneseq
      %v888 = vshrl.u32 %v887, 7
      %v889 = vsub.s32 0, %v888
      %v890 = vrot.slane %v194, %v889
      %v891 = vlaneseq
      %v892 = vshrl.u32 %v891, 7
      %v893 = vsub.s32 0, %v892
      %v894 = vrot.slane %v195, %v893
      %v895 = vlaneseq
      %v896 = vshrl.u32 %v895, 7
      %v897 = vsub.s32 0, %v896
      %v898 = vrot.slane %v196, %v897
      %903 = vrot.lane.b32.xlu0 %v886, 32
      %v904 = vpop.permute.xlu0 %903
      %905 = vrot.lane.b32.xlu0 %v890, 32
      %v906 = vpop.permute.xlu0 %905
      %907 = vrot.lane.b32.xlu0 %v894, 32
      %v908 = vpop.permute.xlu0 %907
      %909 = vrot.lane.b32.xlu0 %v898, 32
      %v910 = vpop.permute.xlu0 %909
      %v911 = vsel %vm299, %v904, %v906
      %v912 = vsel %vm299, %v906, %v908
      %v913 = vsel %vm299, %v908, %v910
      %v919 = vmul.f32 %v171, %v904
      %v920 = vmul.f32 %v172, %v911
      %v921 = vmul.f32 %v173, %v912
      %v922 = vmul.f32 %v174, %v913
      %v923 = vmul.f32 %v175, %v910
      %v924 = vmul.f32 %v177, %v904
      %v925 = vmul.f32 %v178, %v911
      %v926 = vmul.f32 %v179, %v912
      %v927 = vmul.f32 %v180, %v913
      %v928 = vmul.f32 %v181, %v910
      %v929 = vmul.f32 %v183, %v904
      %v930 = vmul.f32 %v184, %v911
      %v931 = vmul.f32 %v185, %v912
      %v932 = vmul.f32 %v186, %v913
      %v933 = vmul.f32 %v187, %v910
      %v949 = vrot.slane %v919, 1
      %v950 = vrot.slane %v924, 1
      %v951 = vsel %vm846, %v949, %v950
      %v952 = vrot.slane %v920, 1
      %v953 = vrot.slane %v925, 1
      %v954 = vsel %vm846, %v952, %v953
      %v955 = vrot.slane %v921, 1
      %v956 = vrot.slane %v926, 1
      %v957 = vsel %vm846, %v955, %v956
      %v958 = vrot.slane %v922, 1
      %v959 = vrot.slane %v927, 1
      %v960 = vsel %vm846, %v958, %v959
      %v961 = vrot.slane %v923, 1
      %v962 = vrot.slane %v928, 1
      %v963 = vsel %vm846, %v961, %v962
      %v964 = vrot.slane %v929, 1
      %v965 = vsel %vm846, %v950, %v964
      %v966 = vrot.slane %v930, 1
      %v967 = vsel %vm846, %v953, %v966
      %v968 = vrot.slane %v931, 1
      %v969 = vsel %vm846, %v956, %v968
      %v970 = vrot.slane %v932, 1
      %v971 = vsel %vm846, %v959, %v970
      %v972 = vrot.slane %v933, 1
      %v973 = vsel %vm846, %v962, %v972
      %974 = vrot.lane.b32.xlu0 %v951, 96
      %v975 = vpop.permute.xlu0 %974
      %976 = vrot.lane.b32.xlu0 %v954, 96
      %v977 = vpop.permute.xlu0 %976
      %978 = vrot.lane.b32.xlu0 %v957, 96
      %v979 = vpop.permute.xlu0 %978
      %980 = vrot.lane.b32.xlu0 %v960, 96
      %v981 = vpop.permute.xlu0 %980
      %982 = vrot.lane.b32.xlu0 %v963, 96
      %v983 = vpop.permute.xlu0 %982
      %984 = vrot.lane.b32.xlu0 %v965, 96
      %v985 = vpop.permute.xlu0 %984
      %986 = vrot.lane.b32.xlu0 %v967, 96
      %v987 = vpop.permute.xlu0 %986
      %988 = vrot.lane.b32.xlu0 %v969, 96
      %v989 = vpop.permute.xlu0 %988
      %990 = vrot.lane.b32.xlu0 %v971, 96
      %v991 = vpop.permute.xlu0 %990
      %992 = vrot.lane.b32.xlu0 %v973, 96
      %v993 = vpop.permute.xlu0 %992
      %v994 = vsel %vm348, %v975, %v977
      %v995 = vsel %vm348, %v977, %v979
      %v996 = vsel %vm348, %v979, %v981
      %v997 = vsel %vm348, %v981, %v983
      %v998 = vsel %vm348, %v985, %v987
      %v999 = vsel %vm348, %v987, %v989
      %v1000 = vsel %vm348, %v989, %v991
      %v1001 = vsel %vm348, %v991, %v993
      %v1010 = vadd.f32 %v875, %v994
      %v1011 = vadd.f32 %v876, %v995
      %v1012 = vadd.f32 %v877, %v996
      %v1013 = vadd.f32 %v878, %v997
      %v1014 = vadd.f32 %v879, %v998
      %v1015 = vadd.f32 %v880, %v999
      %v1016 = vadd.f32 %v881, %v1000
      %v1017 = vadd.f32 %v882, %v1001
      %v1018 = vlaneseq
      %v1019 = vshrl.u32 %v1018, 7
      %v1020 = vsub.s32 1, %v1019
      %v1021 = vrot.slane %v193, %v1020
      %v1022 = vlaneseq
      %v1023 = vshrl.u32 %v1022, 7
      %v1024 = vsub.s32 1, %v1023
      %v1025 = vrot.slane %v194, %v1024
      %v1026 = vlaneseq
      %v1027 = vshrl.u32 %v1026, 7
      %v1028 = vsub.s32 1, %v1027
      %v1029 = vrot.slane %v195, %v1028
      %v1030 = vlaneseq
      %v1031 = vshrl.u32 %v1030, 7
      %v1032 = vsub.s32 1, %v1031
      %v1033 = vrot.slane %v196, %v1032
      %1038 = vrot.lane.b32.xlu0 %v1021, 64
      %v1039 = vpop.permute.xlu0 %1038
      %1040 = vrot.lane.b32.xlu0 %v1025, 64
      %v1041 = vpop.permute.xlu0 %1040
      %1042 = vrot.lane.b32.xlu0 %v1029, 64
      %v1043 = vpop.permute.xlu0 %1042
      %1044 = vrot.lane.b32.xlu0 %v1033, 64
      %v1045 = vpop.permute.xlu0 %1044
      %v1046 = vsel %vm401, %v1039, %v1041
      %v1047 = vsel %vm401, %v1041, %v1043
      %v1048 = vsel %vm401, %v1043, %v1045
      %v1054 = vmul.f32 %v171, %v1039
      %v1055 = vmul.f32 %v172, %v1046
      %v1056 = vmul.f32 %v173, %v1047
      %v1057 = vmul.f32 %v174, %v1048
      %v1058 = vmul.f32 %v175, %v1045
      %v1059 = vmul.f32 %v177, %v1039
      %v1060 = vmul.f32 %v178, %v1046
      %v1061 = vmul.f32 %v179, %v1047
      %v1062 = vmul.f32 %v180, %v1048
      %v1063 = vmul.f32 %v181, %v1045
      %v1064 = vmul.f32 %v183, %v1039
      %v1065 = vmul.f32 %v184, %v1046
      %v1066 = vmul.f32 %v185, %v1047
      %v1067 = vmul.f32 %v186, %v1048
      %v1068 = vmul.f32 %v187, %v1045
      %v1084 = vrot.slane %v1054, 1
      %v1085 = vrot.slane %v1059, 1
      %v1086 = vsel %vm846, %v1084, %v1085
      %v1087 = vrot.slane %v1055, 1
      %v1088 = vrot.slane %v1060, 1
      %v1089 = vsel %vm846, %v1087, %v1088
      %v1090 = vrot.slane %v1056, 1
      %v1091 = vrot.slane %v1061, 1
      %v1092 = vsel %vm846, %v1090, %v1091
      %v1093 = vrot.slane %v1057, 1
      %v1094 = vrot.slane %v1062, 1
      %v1095 = vsel %vm846, %v1093, %v1094
      %v1096 = vrot.slane %v1058, 1
      %v1097 = vrot.slane %v1063, 1
      %v1098 = vsel %vm846, %v1096, %v1097
      %v1099 = vrot.slane %v1064, 1
      %v1100 = vsel %vm846, %v1085, %v1099
      %v1101 = vrot.slane %v1065, 1
      %v1102 = vsel %vm846, %v1088, %v1101
      %v1103 = vrot.slane %v1066, 1
      %v1104 = vsel %vm846, %v1091, %v1103
      %v1105 = vrot.slane %v1067, 1
      %v1106 = vsel %vm846, %v1094, %v1105
      %v1107 = vrot.slane %v1068, 1
      %v1108 = vsel %vm846, %v1097, %v1107
      %1109 = vrot.lane.b32.xlu0 %v1086, 64
      %v1110 = vpop.permute.xlu0 %1109
      %1111 = vrot.lane.b32.xlu0 %v1089, 64
      %v1112 = vpop.permute.xlu0 %1111
      %1113 = vrot.lane.b32.xlu0 %v1092, 64
      %v1114 = vpop.permute.xlu0 %1113
      %1115 = vrot.lane.b32.xlu0 %v1095, 64
      %v1116 = vpop.permute.xlu0 %1115
      %1117 = vrot.lane.b32.xlu0 %v1098, 64
      %v1118 = vpop.permute.xlu0 %1117
      %1119 = vrot.lane.b32.xlu0 %v1100, 64
      %v1120 = vpop.permute.xlu0 %1119
      %1121 = vrot.lane.b32.xlu0 %v1102, 64
      %v1122 = vpop.permute.xlu0 %1121
      %1123 = vrot.lane.b32.xlu0 %v1104, 64
      %v1124 = vpop.permute.xlu0 %1123
      %1125 = vrot.lane.b32.xlu0 %v1106, 64
      %v1126 = vpop.permute.xlu0 %1125
      %1127 = vrot.lane.b32.xlu0 %v1108, 64
      %v1128 = vpop.permute.xlu0 %1127
      %v1129 = vsel %vm401, %v1110, %v1112
      %v1130 = vsel %vm401, %v1112, %v1114
      %v1131 = vsel %vm401, %v1114, %v1116
      %v1132 = vsel %vm401, %v1116, %v1118
      %v1133 = vsel %vm401, %v1120, %v1122
      %v1134 = vsel %vm401, %v1122, %v1124
      %v1135 = vsel %vm401, %v1124, %v1126
      %v1136 = vsel %vm401, %v1126, %v1128
      %v1145 = vadd.f32 %v1010, %v1129
      %v1146 = vadd.f32 %v1011, %v1130
      %v1147 = vadd.f32 %v1012, %v1131
      %v1148 = vadd.f32 %v1013, %v1132
      %v1149 = vadd.f32 %v1014, %v1133
      %v1150 = vadd.f32 %v1015, %v1134
      %v1151 = vadd.f32 %v1016, %v1135
      %v1152 = vadd.f32 %v1017, %v1136
      %v1153 = vlaneseq
      %v1154 = vshrl.u32 %v1153, 7
      %v1155 = vsub.s32 2, %v1154
      %v1156 = vrot.slane %v193, %v1155
      %v1157 = vlaneseq
      %v1158 = vshrl.u32 %v1157, 7
      %v1159 = vsub.s32 2, %v1158
      %v1160 = vrot.slane %v194, %v1159
      %v1161 = vlaneseq
      %v1162 = vshrl.u32 %v1161, 7
      %v1163 = vsub.s32 2, %v1162
      %v1164 = vrot.slane %v195, %v1163
      %v1165 = vlaneseq
      %v1166 = vshrl.u32 %v1165, 7
      %v1167 = vsub.s32 2, %v1166
      %v1168 = vrot.slane %v196, %v1167
      %1173 = vrot.lane.b32.xlu0 %v1156, 96
      %v1174 = vpop.permute.xlu0 %1173
      %1175 = vrot.lane.b32.xlu0 %v1160, 96
      %v1176 = vpop.permute.xlu0 %1175
      %1177 = vrot.lane.b32.xlu0 %v1164, 96
      %v1178 = vpop.permute.xlu0 %1177
      %1179 = vrot.lane.b32.xlu0 %v1168, 96
      %v1180 = vpop.permute.xlu0 %1179
      %v1181 = vsel %vm348, %v1174, %v1176
      %v1182 = vsel %vm348, %v1176, %v1178
      %v1183 = vsel %vm348, %v1178, %v1180
      %v1189 = vmul.f32 %v171, %v1174
      %v1190 = vmul.f32 %v172, %v1181
      %v1191 = vmul.f32 %v173, %v1182
      %v1192 = vmul.f32 %v174, %v1183
      %v1193 = vmul.f32 %v175, %v1180
      %v1194 = vmul.f32 %v177, %v1174
      %v1195 = vmul.f32 %v178, %v1181
      %v1196 = vmul.f32 %v179, %v1182
      %v1197 = vmul.f32 %v180, %v1183
      %v1198 = vmul.f32 %v181, %v1180
      %v1199 = vmul.f32 %v183, %v1174
      %v1200 = vmul.f32 %v184, %v1181
      %v1201 = vmul.f32 %v185, %v1182
      %v1202 = vmul.f32 %v186, %v1183
      %v1203 = vmul.f32 %v187, %v1180
      %v1219 = vrot.slane %v1189, 1
      %v1220 = vrot.slane %v1194, 1
      %v1221 = vsel %vm846, %v1219, %v1220
      %v1222 = vrot.slane %v1190, 1
      %v1223 = vrot.slane %v1195, 1
      %v1224 = vsel %vm846, %v1222, %v1223
      %v1225 = vrot.slane %v1191, 1
      %v1226 = vrot.slane %v1196, 1
      %v1227 = vsel %vm846, %v1225, %v1226
      %v1228 = vrot.slane %v1192, 1
      %v1229 = vrot.slane %v1197, 1
      %v1230 = vsel %vm846, %v1228, %v1229
      %v1231 = vrot.slane %v1193, 1
      %v1232 = vrot.slane %v1198, 1
      %v1233 = vsel %vm846, %v1231, %v1232
      %v1234 = vrot.slane %v1199, 1
      %v1235 = vsel %vm846, %v1220, %v1234
      %v1236 = vrot.slane %v1200, 1
      %v1237 = vsel %vm846, %v1223, %v1236
      %v1238 = vrot.slane %v1201, 1
      %v1239 = vsel %vm846, %v1226, %v1238
      %v1240 = vrot.slane %v1202, 1
      %v1241 = vsel %vm846, %v1229, %v1240
      %v1242 = vrot.slane %v1203, 1
      %v1243 = vsel %vm846, %v1232, %v1242
      %1244 = vrot.lane.b32.xlu0 %v1221, 32
      %v1245 = vpop.permute.xlu0 %1244
      %1246 = vrot.lane.b32.xlu0 %v1224, 32
      %v1247 = vpop.permute.xlu0 %1246
      %1248 = vrot.lane.b32.xlu0 %v1227, 32
      %v1249 = vpop.permute.xlu0 %1248
      %1250 = vrot.lane.b32.xlu0 %v1230, 32
      %v1251 = vpop.permute.xlu0 %1250
      %1252 = vrot.lane.b32.xlu0 %v1233, 32
      %v1253 = vpop.permute.xlu0 %1252
      %1254 = vrot.lane.b32.xlu0 %v1235, 32
      %v1255 = vpop.permute.xlu0 %1254
      %1256 = vrot.lane.b32.xlu0 %v1237, 32
      %v1257 = vpop.permute.xlu0 %1256
      %1258 = vrot.lane.b32.xlu0 %v1239, 32
      %v1259 = vpop.permute.xlu0 %1258
      %1260 = vrot.lane.b32.xlu0 %v1241, 32
      %v1261 = vpop.permute.xlu0 %1260
      %1262 = vrot.lane.b32.xlu0 %v1243, 32
      %v1263 = vpop.permute.xlu0 %1262
      %v1264 = vsel %vm299, %v1245, %v1247
      %v1265 = vsel %vm299, %v1247, %v1249
      %v1266 = vsel %vm299, %v1249, %v1251
      %v1267 = vsel %vm299, %v1251, %v1253
      %v1268 = vsel %vm299, %v1255, %v1257
      %v1269 = vsel %vm299, %v1257, %v1259
      %v1270 = vsel %vm299, %v1259, %v1261
      %v1271 = vsel %vm299, %v1261, %v1263
      %v1280 = vadd.f32 %v1145, %v1264
      %v1281 = vadd.f32 %v1146, %v1265
      %v1282 = vadd.f32 %v1147, %v1266
      %v1283 = vadd.f32 %v1148, %v1267
      %v1284 = vadd.f32 %v1149, %v1268
      %v1285 = vadd.f32 %v1150, %v1269
      %v1286 = vadd.f32 %v1151, %v1270
      %v1287 = vadd.f32 %v1152, %v1271
      %v1288 = vlaneseq
      %v1289 = vshrl.u32 %v1288, 7
      %v1290 = vsub.s32 3, %v1289
      %v1291 = vrot.slane %v193, %v1290
      %v1292 = vlaneseq
      %v1293 = vshrl.u32 %v1292, 7
      %v1294 = vsub.s32 3, %v1293
      %v1295 = vrot.slane %v194, %v1294
      %v1296 = vlaneseq
      %v1297 = vshrl.u32 %v1296, 7
      %v1298 = vsub.s32 3, %v1297
      %v1299 = vrot.slane %v195, %v1298
      %v1300 = vlaneseq
      %v1301 = vshrl.u32 %v1300, 7
      %v1302 = vsub.s32 3, %v1301
      %v1303 = vrot.slane %v196, %v1302
      %v1304 = vmul.f32 %v172, %v1291
      %v1305 = vmul.f32 %v173, %v1295
      %v1306 = vmul.f32 %v174, %v1299
      %v1307 = vmul.f32 %v175, %v1303
      %v1308 = vmul.f32 %v178, %v1291
      %v1309 = vmul.f32 %v179, %v1295
      %v1310 = vmul.f32 %v180, %v1299
      %v1311 = vmul.f32 %v181, %v1303
      %v1312 = vmul.f32 %v184, %v1291
      %v1313 = vmul.f32 %v185, %v1295
      %v1314 = vmul.f32 %v186, %v1299
      %v1315 = vmul.f32 %v187, %v1303
      %v1328 = vrot.slane %v1304, 1
      %v1329 = vrot.slane %v1308, 1
      %v1330 = vsel %vm846, %v1328, %v1329
      %v1331 = vrot.slane %v1305, 1
      %v1332 = vrot.slane %v1309, 1
      %v1333 = vsel %vm846, %v1331, %v1332
      %v1334 = vrot.slane %v1306, 1
      %v1335 = vrot.slane %v1310, 1
      %v1336 = vsel %vm846, %v1334, %v1335
      %v1337 = vrot.slane %v1307, 1
      %v1338 = vrot.slane %v1311, 1
      %v1339 = vsel %vm846, %v1337, %v1338
      %v1340 = vrot.slane %v1312, 1
      %v1341 = vsel %vm846, %v1329, %v1340
      %v1342 = vrot.slane %v1313, 1
      %v1343 = vsel %vm846, %v1332, %v1342
      %v1344 = vrot.slane %v1314, 1
      %v1345 = vsel %vm846, %v1335, %v1344
      %v1346 = vrot.slane %v1315, 1
      %v1347 = vsel %vm846, %v1338, %v1346
      %v1356 = vadd.f32 %v1280, %v1330
      %v1357 = vadd.f32 %v1281, %v1333
      %v1358 = vadd.f32 %v1282, %v1336
      %v1359 = vadd.f32 %v1283, %v1339
      %v1360 = vadd.f32 %v1284, %v1341
      %v1361 = vadd.f32 %v1285, %v1343
      %v1362 = vadd.f32 %v1286, %v1345
      %v1363 = vadd.f32 %v1287, %v1347
      %v1364 = vlaneseq
      %v1365 = vshrl.u32 %v1364, 7
      %v1366 = vsub.s32 4, %v1365
      %v1367 = vrot.slane %v193, %v1366
      %v1368 = vlaneseq
      %v1369 = vshrl.u32 %v1368, 7
      %v1370 = vsub.s32 4, %v1369
      %v1371 = vrot.slane %v194, %v1370
      %v1372 = vlaneseq
      %v1373 = vshrl.u32 %v1372, 7
      %v1374 = vsub.s32 4, %v1373
      %v1375 = vrot.slane %v195, %v1374
      %v1376 = vlaneseq
      %v1377 = vshrl.u32 %v1376, 7
      %v1378 = vsub.s32 4, %v1377
      %v1379 = vrot.slane %v196, %v1378
      %1384 = vrot.lane.b32.xlu0 %v1367, 32
      %v1385 = vpop.permute.xlu0 %1384
      %1386 = vrot.lane.b32.xlu0 %v1371, 32
      %v1387 = vpop.permute.xlu0 %1386
      %1388 = vrot.lane.b32.xlu0 %v1375, 32
      %v1389 = vpop.permute.xlu0 %1388
      %1390 = vrot.lane.b32.xlu0 %v1379, 32
      %v1391 = vpop.permute.xlu0 %1390
      %v1392 = vsel %vm299, %v1385, %v1387
      %v1393 = vsel %vm299, %v1387, %v1389
      %v1394 = vsel %vm299, %v1389, %v1391
      %v1400 = vmul.f32 %v172, %v1385
      %v1401 = vmul.f32 %v173, %v1392
      %v1402 = vmul.f32 %v174, %v1393
      %v1403 = vmul.f32 %v175, %v1394
      %v1404 = vmul.f32 %v176, %v1391
      %v1405 = vmul.f32 %v178, %v1385
      %v1406 = vmul.f32 %v179, %v1392
      %v1407 = vmul.f32 %v180, %v1393
      %v1408 = vmul.f32 %v181, %v1394
      %v1409 = vmul.f32 %v182, %v1391
      %v1410 = vmul.f32 %v184, %v1385
      %v1411 = vmul.f32 %v185, %v1392
      %v1412 = vmul.f32 %v186, %v1393
      %v1413 = vmul.f32 %v187, %v1394
      %v1414 = vmul.f32 %v188, %v1391
      %v1430 = vrot.slane %v1400, 1
      %v1431 = vrot.slane %v1405, 1
      %v1432 = vsel %vm846, %v1430, %v1431
      %v1433 = vrot.slane %v1401, 1
      %v1434 = vrot.slane %v1406, 1
      %v1435 = vsel %vm846, %v1433, %v1434
      %v1436 = vrot.slane %v1402, 1
      %v1437 = vrot.slane %v1407, 1
      %v1438 = vsel %vm846, %v1436, %v1437
      %v1439 = vrot.slane %v1403, 1
      %v1440 = vrot.slane %v1408, 1
      %v1441 = vsel %vm846, %v1439, %v1440
      %v1442 = vrot.slane %v1404, 1
      %v1443 = vrot.slane %v1409, 1
      %v1444 = vsel %vm846, %v1442, %v1443
      %v1445 = vrot.slane %v1410, 1
      %v1446 = vsel %vm846, %v1431, %v1445
      %v1447 = vrot.slane %v1411, 1
      %v1448 = vsel %vm846, %v1434, %v1447
      %v1449 = vrot.slane %v1412, 1
      %v1450 = vsel %vm846, %v1437, %v1449
      %v1451 = vrot.slane %v1413, 1
      %v1452 = vsel %vm846, %v1440, %v1451
      %v1453 = vrot.slane %v1414, 1
      %v1454 = vsel %vm846, %v1443, %v1453
      %1455 = vrot.lane.b32.xlu0 %v1432, 96
      %v1456 = vpop.permute.xlu0 %1455
      %1457 = vrot.lane.b32.xlu0 %v1435, 96
      %v1458 = vpop.permute.xlu0 %1457
      %1459 = vrot.lane.b32.xlu0 %v1438, 96
      %v1460 = vpop.permute.xlu0 %1459
      %1461 = vrot.lane.b32.xlu0 %v1441, 96
      %v1462 = vpop.permute.xlu0 %1461
      %1463 = vrot.lane.b32.xlu0 %v1444, 96
      %v1464 = vpop.permute.xlu0 %1463
      %1465 = vrot.lane.b32.xlu0 %v1446, 96
      %v1466 = vpop.permute.xlu0 %1465
      %1467 = vrot.lane.b32.xlu0 %v1448, 96
      %v1468 = vpop.permute.xlu0 %1467
      %1469 = vrot.lane.b32.xlu0 %v1450, 96
      %v1470 = vpop.permute.xlu0 %1469
      %1471 = vrot.lane.b32.xlu0 %v1452, 96
      %v1472 = vpop.permute.xlu0 %1471
      %1473 = vrot.lane.b32.xlu0 %v1454, 96
      %v1474 = vpop.permute.xlu0 %1473
      %v1475 = vsel %vm348, %v1456, %v1458
      %v1476 = vsel %vm348, %v1458, %v1460
      %v1477 = vsel %vm348, %v1460, %v1462
      %v1478 = vsel %vm348, %v1462, %v1464
      %v1479 = vsel %vm348, %v1466, %v1468
      %v1480 = vsel %vm348, %v1468, %v1470
      %v1481 = vsel %vm348, %v1470, %v1472
      %v1482 = vsel %vm348, %v1472, %v1474
      %v1491 = vadd.f32 %v1356, %v1475
      %v1492 = vadd.f32 %v1357, %v1476
      %v1493 = vadd.f32 %v1358, %v1477
      %v1494 = vadd.f32 %v1359, %v1478
      %v1495 = vadd.f32 %v1360, %v1479
      %v1496 = vadd.f32 %v1361, %v1480
      %v1497 = vadd.f32 %v1362, %v1481
      %v1498 = vadd.f32 %v1363, %v1482
      %v1499 = vlaneseq
      %v1500 = vshrl.u32 %v1499, 7
      %v1501 = vsub.s32 5, %v1500
      %v1502 = vrot.slane %v193, %v1501
      %v1503 = vlaneseq
      %v1504 = vshrl.u32 %v1503, 7
      %v1505 = vsub.s32 5, %v1504
      %v1506 = vrot.slane %v194, %v1505
      %v1507 = vlaneseq
      %v1508 = vshrl.u32 %v1507, 7
      %v1509 = vsub.s32 5, %v1508
      %v1510 = vrot.slane %v195, %v1509
      %v1511 = vlaneseq
      %v1512 = vshrl.u32 %v1511, 7
      %v1513 = vsub.s32 5, %v1512
      %v1514 = vrot.slane %v196, %v1513
      %1519 = vrot.lane.b32.xlu0 %v1502, 64
      %v1520 = vpop.permute.xlu0 %1519
      %1521 = vrot.lane.b32.xlu0 %v1506, 64
      %v1522 = vpop.permute.xlu0 %1521
      %1523 = vrot.lane.b32.xlu0 %v1510, 64
      %v1524 = vpop.permute.xlu0 %1523
      %1525 = vrot.lane.b32.xlu0 %v1514, 64
      %v1526 = vpop.permute.xlu0 %1525
      %v1527 = vsel %vm401, %v1520, %v1522
      %v1528 = vsel %vm401, %v1522, %v1524
      %v1529 = vsel %vm401, %v1524, %v1526
      %v1535 = vmul.f32 %v172, %v1520
      %v1536 = vmul.f32 %v173, %v1527
      %v1537 = vmul.f32 %v174, %v1528
      %v1538 = vmul.f32 %v175, %v1529
      %v1539 = vmul.f32 %v176, %v1526
      %v1540 = vmul.f32 %v178, %v1520
      %v1541 = vmul.f32 %v179, %v1527
      %v1542 = vmul.f32 %v180, %v1528
      %v1543 = vmul.f32 %v181, %v1529
      %v1544 = vmul.f32 %v182, %v1526
      %v1545 = vmul.f32 %v184, %v1520
      %v1546 = vmul.f32 %v185, %v1527
      %v1547 = vmul.f32 %v186, %v1528
      %v1548 = vmul.f32 %v187, %v1529
      %v1549 = vmul.f32 %v188, %v1526
      %v1565 = vrot.slane %v1535, 1
      %v1566 = vrot.slane %v1540, 1
      %v1567 = vsel %vm846, %v1565, %v1566
      %v1568 = vrot.slane %v1536, 1
      %v1569 = vrot.slane %v1541, 1
      %v1570 = vsel %vm846, %v1568, %v1569
      %v1571 = vrot.slane %v1537, 1
      %v1572 = vrot.slane %v1542, 1
      %v1573 = vsel %vm846, %v1571, %v1572
      %v1574 = vrot.slane %v1538, 1
      %v1575 = vrot.slane %v1543, 1
      %v1576 = vsel %vm846, %v1574, %v1575
      %v1577 = vrot.slane %v1539, 1
      %v1578 = vrot.slane %v1544, 1
      %v1579 = vsel %vm846, %v1577, %v1578
      %v1580 = vrot.slane %v1545, 1
      %v1581 = vsel %vm846, %v1566, %v1580
      %v1582 = vrot.slane %v1546, 1
      %v1583 = vsel %vm846, %v1569, %v1582
      %v1584 = vrot.slane %v1547, 1
      %v1585 = vsel %vm846, %v1572, %v1584
      %v1586 = vrot.slane %v1548, 1
      %v1587 = vsel %vm846, %v1575, %v1586
      %v1588 = vrot.slane %v1549, 1
      %v1589 = vsel %vm846, %v1578, %v1588
      %1590 = vrot.lane.b32.xlu0 %v1567, 64
      %v1591 = vpop.permute.xlu0 %1590
      %1592 = vrot.lane.b32.xlu0 %v1570, 64
      %v1593 = vpop.permute.xlu0 %1592
      %1594 = vrot.lane.b32.xlu0 %v1573, 64
      %v1595 = vpop.permute.xlu0 %1594
      %1596 = vrot.lane.b32.xlu0 %v1576, 64
      %v1597 = vpop.permute.xlu0 %1596
      %1598 = vrot.lane.b32.xlu0 %v1579, 64
      %v1599 = vpop.permute.xlu0 %1598
      %1600 = vrot.lane.b32.xlu0 %v1581, 64
      %v1601 = vpop.permute.xlu0 %1600
      %1602 = vrot.lane.b32.xlu0 %v1583, 64
      %v1603 = vpop.permute.xlu0 %1602
      %1604 = vrot.lane.b32.xlu0 %v1585, 64
      %v1605 = vpop.permute.xlu0 %1604
      %1606 = vrot.lane.b32.xlu0 %v1587, 64
      %v1607 = vpop.permute.xlu0 %1606
      %1608 = vrot.lane.b32.xlu0 %v1589, 64
      %v1609 = vpop.permute.xlu0 %1608
      %v1610 = vsel %vm401, %v1591, %v1593
      %v1611 = vsel %vm401, %v1593, %v1595
      %v1612 = vsel %vm401, %v1595, %v1597
      %v1613 = vsel %vm401, %v1597, %v1599
      %v1614 = vsel %vm401, %v1601, %v1603
      %v1615 = vsel %vm401, %v1603, %v1605
      %v1616 = vsel %vm401, %v1605, %v1607
      %v1617 = vsel %vm401, %v1607, %v1609
      %v1626 = vadd.f32 %v1491, %v1610
      %v1627 = vadd.f32 %v1492, %v1611
      %v1628 = vadd.f32 %v1493, %v1612
      %v1629 = vadd.f32 %v1494, %v1613
      %v1630 = vadd.f32 %v1495, %v1614
      %v1631 = vadd.f32 %v1496, %v1615
      %v1632 = vadd.f32 %v1497, %v1616
      %v1633 = vadd.f32 %v1498, %v1617
      %v1634 = vlaneseq
      %v1635 = vshrl.u32 %v1634, 7
      %v1636 = vsub.s32 6, %v1635
      %v1637 = vrot.slane %v193, %v1636
      %v1638 = vlaneseq
      %v1639 = vshrl.u32 %v1638, 7
      %v1640 = vsub.s32 6, %v1639
      %v1641 = vrot.slane %v194, %v1640
      %v1642 = vlaneseq
      %v1643 = vshrl.u32 %v1642, 7
      %v1644 = vsub.s32 6, %v1643
      %v1645 = vrot.slane %v195, %v1644
      %v1646 = vlaneseq
      %v1647 = vshrl.u32 %v1646, 7
      %v1648 = vsub.s32 6, %v1647
      %v1649 = vrot.slane %v196, %v1648
      %v1650 = vmul.f32 %v171, %v1637
      %v1651 = vmul.f32 %v172, %v1641
      %v1652 = vmul.f32 %v173, %v1645
      %v1653 = vmul.f32 %v174, %v1649
      %v1654 = vmul.f32 %v177, %v1637
      %v1655 = vmul.f32 %v178, %v1641
      %v1656 = vmul.f32 %v179, %v1645
      %v1657 = vmul.f32 %v180, %v1649
      %v1658 = vmul.f32 %v183, %v1637
      %v1659 = vmul.f32 %v184, %v1641
      %v1660 = vmul.f32 %v185, %v1645
      %v1661 = vmul.f32 %v186, %v1649
      %vm1674 = vcmask 1045504
      %v1675 = vrot.slane %v1650, 2
      %v1676 = vrot.slane %v1654, 2
      %v1677 = vsel %vm1674, %v1675, %v1676
      %v1678 = vrot.slane %v1651, 2
      %v1679 = vrot.slane %v1655, 2
      %v1680 = vsel %vm1674, %v1678, %v1679
      %v1681 = vrot.slane %v1652, 2
      %v1682 = vrot.slane %v1656, 2
      %v1683 = vsel %vm1674, %v1681, %v1682
      %v1684 = vrot.slane %v1653, 2
      %v1685 = vrot.slane %v1657, 2
      %v1686 = vsel %vm1674, %v1684, %v1685
      %v1687 = vrot.slane %v1658, 2
      %v1688 = vsel %vm1674, %v1676, %v1687
      %v1689 = vrot.slane %v1659, 2
      %v1690 = vsel %vm1674, %v1679, %v1689
      %v1691 = vrot.slane %v1660, 2
      %v1692 = vsel %vm1674, %v1682, %v1691
      %v1693 = vrot.slane %v1661, 2
      %v1694 = vsel %vm1674, %v1685, %v1693
      %v1703 = vadd.f32 %v1626, %v1677
      %v1704 = vadd.f32 %v1627, %v1680
      %v1705 = vadd.f32 %v1628, %v1683
      %v1706 = vadd.f32 %v1629, %v1686
      %v1707 = vadd.f32 %v1630, %v1688
      %v1708 = vadd.f32 %v1631, %v1690
      %v1709 = vadd.f32 %v1632, %v1692
      %v1710 = vadd.f32 %v1633, %v1694
      %v1711 = vlaneseq
      %v1712 = vshrl.u32 %v1711, 7
      %v1713 = vsub.s32 7, %v1712
      %v1714 = vrot.slane %v193, %v1713
      %v1715 = vlaneseq
      %v1716 = vshrl.u32 %v1715, 7
      %v1717 = vsub.s32 7, %v1716
      %v1718 = vrot.slane %v194, %v1717
      %v1719 = vlaneseq
      %v1720 = vshrl.u32 %v1719, 7
      %v1721 = vsub.s32 7, %v1720
      %v1722 = vrot.slane %v195, %v1721
      %v1723 = vlaneseq
      %v1724 = vshrl.u32 %v1723, 7
      %v1725 = vsub.s32 7, %v1724
      %v1726 = vrot.slane %v196, %v1725
      %1731 = vrot.lane.b32.xlu0 %v1714, 32
      %v1732 = vpop.permute.xlu0 %1731
      %1733 = vrot.lane.b32.xlu0 %v1718, 32
      %v1734 = vpop.permute.xlu0 %1733
      %1735 = vrot.lane.b32.xlu0 %v1722, 32
      %v1736 = vpop.permute.xlu0 %1735
      %1737 = vrot.lane.b32.xlu0 %v1726, 32
      %v1738 = vpop.permute.xlu0 %1737
      %v1739 = vsel %vm299, %v1732, %v1734
      %v1740 = vsel %vm299, %v1734, %v1736
      %v1741 = vsel %vm299, %v1736, %v1738
      %v1747 = vmul.f32 %v171, %v1732
      %v1748 = vmul.f32 %v172, %v1739
      %v1749 = vmul.f32 %v173, %v1740
      %v1750 = vmul.f32 %v174, %v1741
      %v1751 = vmul.f32 %v175, %v1738
      %v1752 = vmul.f32 %v177, %v1732
      %v1753 = vmul.f32 %v178, %v1739
      %v1754 = vmul.f32 %v179, %v1740
      %v1755 = vmul.f32 %v180, %v1741
      %v1756 = vmul.f32 %v181, %v1738
      %v1757 = vmul.f32 %v183, %v1732
      %v1758 = vmul.f32 %v184, %v1739
      %v1759 = vmul.f32 %v185, %v1740
      %v1760 = vmul.f32 %v186, %v1741
      %v1761 = vmul.f32 %v187, %v1738
      %v1777 = vrot.slane %v1747, 2
      %v1778 = vrot.slane %v1752, 2
      %v1779 = vsel %vm1674, %v1777, %v1778
      %v1780 = vrot.slane %v1748, 2
      %v1781 = vrot.slane %v1753, 2
      %v1782 = vsel %vm1674, %v1780, %v1781
      %v1783 = vrot.slane %v1749, 2
      %v1784 = vrot.slane %v1754, 2
      %v1785 = vsel %vm1674, %v1783, %v1784
      %v1786 = vrot.slane %v1750, 2
      %v1787 = vrot.slane %v1755, 2
      %v1788 = vsel %vm1674, %v1786, %v1787
      %v1789 = vrot.slane %v1751, 2
      %v1790 = vrot.slane %v1756, 2
      %v1791 = vsel %vm1674, %v1789, %v1790
      %v1792 = vrot.slane %v1757, 2
      %v1793 = vsel %vm1674, %v1778, %v1792
      %v1794 = vrot.slane %v1758, 2
      %v1795 = vsel %vm1674, %v1781, %v1794
      %v1796 = vrot.slane %v1759, 2
      %v1797 = vsel %vm1674, %v1784, %v1796
      %v1798 = vrot.slane %v1760, 2
      %v1799 = vsel %vm1674, %v1787, %v1798
      %v1800 = vrot.slane %v1761, 2
      %v1801 = vsel %vm1674, %v1790, %v1800
      %1802 = vrot.lane.b32.xlu0 %v1779, 96
      %v1803 = vpop.permute.xlu0 %1802
      %1804 = vrot.lane.b32.xlu0 %v1782, 96
      %v1805 = vpop.permute.xlu0 %1804
      %1806 = vrot.lane.b32.xlu0 %v1785, 96
      %v1807 = vpop.permute.xlu0 %1806
      %1808 = vrot.lane.b32.xlu0 %v1788, 96
      %v1809 = vpop.permute.xlu0 %1808
      %1810 = vrot.lane.b32.xlu0 %v1791, 96
      %v1811 = vpop.permute.xlu0 %1810
      %1812 = vrot.lane.b32.xlu0 %v1793, 96
      %v1813 = vpop.permute.xlu0 %1812
      %1814 = vrot.lane.b32.xlu0 %v1795, 96
      %v1815 = vpop.permute.xlu0 %1814
      %1816 = vrot.lane.b32.xlu0 %v1797, 96
      %v1817 = vpop.permute.xlu0 %1816
      %1818 = vrot.lane.b32.xlu0 %v1799, 96
      %v1819 = vpop.permute.xlu0 %1818
      %1820 = vrot.lane.b32.xlu0 %v1801, 96
      %v1821 = vpop.permute.xlu0 %1820
      %v1822 = vsel %vm348, %v1803, %v1805
      %v1823 = vsel %vm348, %v1805, %v1807
      %v1824 = vsel %vm348, %v1807, %v1809
      %v1825 = vsel %vm348, %v1809, %v1811
      %v1826 = vsel %vm348, %v1813, %v1815
      %v1827 = vsel %vm348, %v1815, %v1817
      %v1828 = vsel %vm348, %v1817, %v1819
      %v1829 = vsel %vm348, %v1819, %v1821
      %v1838 = vadd.f32 %v1703, %v1822
      %v1839 = vadd.f32 %v1704, %v1823
      %v1840 = vadd.f32 %v1705, %v1824
      %v1841 = vadd.f32 %v1706, %v1825
      %v1842 = vadd.f32 %v1707, %v1826
      %v1843 = vadd.f32 %v1708, %v1827
      %v1844 = vadd.f32 %v1709, %v1828
      %v1845 = vadd.f32 %v1710, %v1829
      %v1846 = vlaneseq
      %v1847 = vshrl.u32 %v1846, 7
      %v1848 = vsub.s32 0, %v1847
      %v1849 = vrot.slane %v197, %v1848
      %v1850 = vlaneseq
      %v1851 = vshrl.u32 %v1850, 7
      %v1852 = vsub.s32 0, %v1851
      %v1853 = vrot.slane %v198, %v1852
      %v1854 = vlaneseq
      %v1855 = vshrl.u32 %v1854, 7
      %v1856 = vsub.s32 0, %v1855
      %v1857 = vrot.slane %v199, %v1856
      %v1858 = vlaneseq
      %v1859 = vshrl.u32 %v1858, 7
      %v1860 = vsub.s32 0, %v1859
      %v1861 = vrot.slane %v200, %v1860
      %1866 = vrot.lane.b32.xlu0 %v1849, 64
      %v1867 = vpop.permute.xlu0 %1866
      %1868 = vrot.lane.b32.xlu0 %v1853, 64
      %v1869 = vpop.permute.xlu0 %1868
      %1870 = vrot.lane.b32.xlu0 %v1857, 64
      %v1871 = vpop.permute.xlu0 %1870
      %1872 = vrot.lane.b32.xlu0 %v1861, 64
      %v1873 = vpop.permute.xlu0 %1872
      %v1874 = vsel %vm401, %v1867, %v1869
      %v1875 = vsel %vm401, %v1869, %v1871
      %v1876 = vsel %vm401, %v1871, %v1873
      %v1882 = vmul.f32 %v171, %v1867
      %v1883 = vmul.f32 %v172, %v1874
      %v1884 = vmul.f32 %v173, %v1875
      %v1885 = vmul.f32 %v174, %v1876
      %v1886 = vmul.f32 %v175, %v1873
      %v1887 = vmul.f32 %v177, %v1867
      %v1888 = vmul.f32 %v178, %v1874
      %v1889 = vmul.f32 %v179, %v1875
      %v1890 = vmul.f32 %v180, %v1876
      %v1891 = vmul.f32 %v181, %v1873
      %v1892 = vmul.f32 %v183, %v1867
      %v1893 = vmul.f32 %v184, %v1874
      %v1894 = vmul.f32 %v185, %v1875
      %v1895 = vmul.f32 %v186, %v1876
      %v1896 = vmul.f32 %v187, %v1873
      %v1912 = vrot.slane %v1882, 2
      %v1913 = vrot.slane %v1887, 2
      %v1914 = vsel %vm1674, %v1912, %v1913
      %v1915 = vrot.slane %v1883, 2
      %v1916 = vrot.slane %v1888, 2
      %v1917 = vsel %vm1674, %v1915, %v1916
      %v1918 = vrot.slane %v1884, 2
      %v1919 = vrot.slane %v1889, 2
      %v1920 = vsel %vm1674, %v1918, %v1919
      %v1921 = vrot.slane %v1885, 2
      %v1922 = vrot.slane %v1890, 2
      %v1923 = vsel %vm1674, %v1921, %v1922
      %v1924 = vrot.slane %v1886, 2
      %v1925 = vrot.slane %v1891, 2
      %v1926 = vsel %vm1674, %v1924, %v1925
      %v1927 = vrot.slane %v1892, 2
      %v1928 = vsel %vm1674, %v1913, %v1927
      %v1929 = vrot.slane %v1893, 2
      %v1930 = vsel %vm1674, %v1916, %v1929
      %v1931 = vrot.slane %v1894, 2
      %v1932 = vsel %vm1674, %v1919, %v1931
      %v1933 = vrot.slane %v1895, 2
      %v1934 = vsel %vm1674, %v1922, %v1933
      %v1935 = vrot.slane %v1896, 2
      %v1936 = vsel %vm1674, %v1925, %v1935
      %1937 = vrot.lane.b32.xlu0 %v1914, 64
      %v1938 = vpop.permute.xlu0 %1937
      %1939 = vrot.lane.b32.xlu0 %v1917, 64
      %v1940 = vpop.permute.xlu0 %1939
      %1941 = vrot.lane.b32.xlu0 %v1920, 64
      %v1942 = vpop.permute.xlu0 %1941
      %1943 = vrot.lane.b32.xlu0 %v1923, 64
      %v1944 = vpop.permute.xlu0 %1943
      %1945 = vrot.lane.b32.xlu0 %v1926, 64
      %v1946 = vpop.permute.xlu0 %1945
      %1947 = vrot.lane.b32.xlu0 %v1928, 64
      %v1948 = vpop.permute.xlu0 %1947
      %1949 = vrot.lane.b32.xlu0 %v1930, 64
      %v1950 = vpop.permute.xlu0 %1949
      %1951 = vrot.lane.b32.xlu0 %v1932, 64
      %v1952 = vpop.permute.xlu0 %1951
      %1953 = vrot.lane.b32.xlu0 %v1934, 64
      %v1954 = vpop.permute.xlu0 %1953
      %1955 = vrot.lane.b32.xlu0 %v1936, 64
      %v1956 = vpop.permute.xlu0 %1955
      %v1957 = vsel %vm401, %v1938, %v1940
      %v1958 = vsel %vm401, %v1940, %v1942
      %v1959 = vsel %vm401, %v1942, %v1944
      %v1960 = vsel %vm401, %v1944, %v1946
      %v1961 = vsel %vm401, %v1948, %v1950
      %v1962 = vsel %vm401, %v1950, %v1952
      %v1963 = vsel %vm401, %v1952, %v1954
      %v1964 = vsel %vm401, %v1954, %v1956
      %v1973 = vadd.f32 %v1838, %v1957
      %v1974 = vadd.f32 %v1839, %v1958
      %v1975 = vadd.f32 %v1840, %v1959
      %v1976 = vadd.f32 %v1841, %v1960
      %v1977 = vadd.f32 %v1842, %v1961
      %v1978 = vadd.f32 %v1843, %v1962
      %v1979 = vadd.f32 %v1844, %v1963
      %v1980 = vadd.f32 %v1845, %v1964
      %v1981 = vlaneseq
      %v1982 = vshrl.u32 %v1981, 7
      %v1983 = vsub.s32 1, %v1982
      %v1984 = vrot.slane %v197, %v1983
      %v1985 = vlaneseq
      %v1986 = vshrl.u32 %v1985, 7
      %v1987 = vsub.s32 1, %v1986
      %v1988 = vrot.slane %v198, %v1987
      %v1989 = vlaneseq
      %v1990 = vshrl.u32 %v1989, 7
      %v1991 = vsub.s32 1, %v1990
      %v1992 = vrot.slane %v199, %v1991
      %v1993 = vlaneseq
      %v1994 = vshrl.u32 %v1993, 7
      %v1995 = vsub.s32 1, %v1994
      %v1996 = vrot.slane %v200, %v1995
      %2001 = vrot.lane.b32.xlu0 %v1984, 96
      %v2002 = vpop.permute.xlu0 %2001
      %2003 = vrot.lane.b32.xlu0 %v1988, 96
      %v2004 = vpop.permute.xlu0 %2003
      %2005 = vrot.lane.b32.xlu0 %v1992, 96
      %v2006 = vpop.permute.xlu0 %2005
      %2007 = vrot.lane.b32.xlu0 %v1996, 96
      %v2008 = vpop.permute.xlu0 %2007
      %v2009 = vsel %vm348, %v2002, %v2004
      %v2010 = vsel %vm348, %v2004, %v2006
      %v2011 = vsel %vm348, %v2006, %v2008
      %v2017 = vmul.f32 %v171, %v2002
      %v2018 = vmul.f32 %v172, %v2009
      %v2019 = vmul.f32 %v173, %v2010
      %v2020 = vmul.f32 %v174, %v2011
      %v2021 = vmul.f32 %v175, %v2008
      %v2022 = vmul.f32 %v177, %v2002
      %v2023 = vmul.f32 %v178, %v2009
      %v2024 = vmul.f32 %v179, %v2010
      %v2025 = vmul.f32 %v180, %v2011
      %v2026 = vmul.f32 %v181, %v2008
      %v2027 = vmul.f32 %v183, %v2002
      %v2028 = vmul.f32 %v184, %v2009
      %v2029 = vmul.f32 %v185, %v2010
      %v2030 = vmul.f32 %v186, %v2011
      %v2031 = vmul.f32 %v187, %v2008
      %v2047 = vrot.slane %v2017, 2
      %v2048 = vrot.slane %v2022, 2
      %v2049 = vsel %vm1674, %v2047, %v2048
      %v2050 = vrot.slane %v2018, 2
      %v2051 = vrot.slane %v2023, 2
      %v2052 = vsel %vm1674, %v2050, %v2051
      %v2053 = vrot.slane %v2019, 2
      %v2054 = vrot.slane %v2024, 2
      %v2055 = vsel %vm1674, %v2053, %v2054
      %v2056 = vrot.slane %v2020, 2
      %v2057 = vrot.slane %v2025, 2
      %v2058 = vsel %vm1674, %v2056, %v2057
      %v2059 = vrot.slane %v2021, 2
      %v2060 = vrot.slane %v2026, 2
      %v2061 = vsel %vm1674, %v2059, %v2060
      %v2062 = vrot.slane %v2027, 2
      %v2063 = vsel %vm1674, %v2048, %v2062
      %v2064 = vrot.slane %v2028, 2
      %v2065 = vsel %vm1674, %v2051, %v2064
      %v2066 = vrot.slane %v2029, 2
      %v2067 = vsel %vm1674, %v2054, %v2066
      %v2068 = vrot.slane %v2030, 2
      %v2069 = vsel %vm1674, %v2057, %v2068
      %v2070 = vrot.slane %v2031, 2
      %v2071 = vsel %vm1674, %v2060, %v2070
      %2072 = vrot.lane.b32.xlu0 %v2049, 32
      %v2073 = vpop.permute.xlu0 %2072
      %2074 = vrot.lane.b32.xlu0 %v2052, 32
      %v2075 = vpop.permute.xlu0 %2074
      %2076 = vrot.lane.b32.xlu0 %v2055, 32
      %v2077 = vpop.permute.xlu0 %2076
      %2078 = vrot.lane.b32.xlu0 %v2058, 32
      %v2079 = vpop.permute.xlu0 %2078
      %2080 = vrot.lane.b32.xlu0 %v2061, 32
      %v2081 = vpop.permute.xlu0 %2080
      %2082 = vrot.lane.b32.xlu0 %v2063, 32
      %v2083 = vpop.permute.xlu0 %2082
      %2084 = vrot.lane.b32.xlu0 %v2065, 32
      %v2085 = vpop.permute.xlu0 %2084
      %2086 = vrot.lane.b32.xlu0 %v2067, 32
      %v2087 = vpop.permute.xlu0 %2086
      %2088 = vrot.lane.b32.xlu0 %v2069, 32
      %v2089 = vpop.permute.xlu0 %2088
      %2090 = vrot.lane.b32.xlu0 %v2071, 32
      %v2091 = vpop.permute.xlu0 %2090
      %v2092 = vsel %vm299, %v2073, %v2075
      %v2093 = vsel %vm299, %v2075, %v2077
      %v2094 = vsel %vm299, %v2077, %v2079
      %v2095 = vsel %vm299, %v2079, %v2081
      %v2096 = vsel %vm299, %v2083, %v2085
      %v2097 = vsel %vm299, %v2085, %v2087
      %v2098 = vsel %vm299, %v2087, %v2089
      %v2099 = vsel %vm299, %v2089, %v2091
      %v2108 = vadd.f32 %v1973, %v2092
      %v2109 = vadd.f32 %v1974, %v2093
      %v2110 = vadd.f32 %v1975, %v2094
      %v2111 = vadd.f32 %v1976, %v2095
      %v2112 = vadd.f32 %v1977, %v2096
      %v2113 = vadd.f32 %v1978, %v2097
      %v2114 = vadd.f32 %v1979, %v2098
      %v2115 = vadd.f32 %v1980, %v2099
      %v2116 = vlaneseq
      %v2117 = vshrl.u32 %v2116, 7
      %v2118 = vsub.s32 2, %v2117
      %v2119 = vrot.slane %v197, %v2118
      %v2120 = vlaneseq
      %v2121 = vshrl.u32 %v2120, 7
      %v2122 = vsub.s32 2, %v2121
      %v2123 = vrot.slane %v198, %v2122
      %v2124 = vlaneseq
      %v2125 = vshrl.u32 %v2124, 7
      %v2126 = vsub.s32 2, %v2125
      %v2127 = vrot.slane %v199, %v2126
      %v2128 = vlaneseq
      %v2129 = vshrl.u32 %v2128, 7
      %v2130 = vsub.s32 2, %v2129
      %v2131 = vrot.slane %v200, %v2130
      %v2132 = vmul.f32 %v172, %v2119
      %v2133 = vmul.f32 %v173, %v2123
      %v2134 = vmul.f32 %v174, %v2127
      %v2135 = vmul.f32 %v175, %v2131
      %v2136 = vmul.f32 %v178, %v2119
      %v2137 = vmul.f32 %v179, %v2123
      %v2138 = vmul.f32 %v180, %v2127
      %v2139 = vmul.f32 %v181, %v2131
      %v2140 = vmul.f32 %v184, %v2119
      %v2141 = vmul.f32 %v185, %v2123
      %v2142 = vmul.f32 %v186, %v2127
      %v2143 = vmul.f32 %v187, %v2131
      %v2156 = vrot.slane %v2132, 2
      %v2157 = vrot.slane %v2136, 2
      %v2158 = vsel %vm1674, %v2156, %v2157
      %v2159 = vrot.slane %v2133, 2
      %v2160 = vrot.slane %v2137, 2
      %v2161 = vsel %vm1674, %v2159, %v2160
      %v2162 = vrot.slane %v2134, 2
      %v2163 = vrot.slane %v2138, 2
      %v2164 = vsel %vm1674, %v2162, %v2163
      %v2165 = vrot.slane %v2135, 2
      %v2166 = vrot.slane %v2139, 2
      %v2167 = vsel %vm1674, %v2165, %v2166
      %v2168 = vrot.slane %v2140, 2
      %v2169 = vsel %vm1674, %v2157, %v2168
      %v2170 = vrot.slane %v2141, 2
      %v2171 = vsel %vm1674, %v2160, %v2170
      %v2172 = vrot.slane %v2142, 2
      %v2173 = vsel %vm1674, %v2163, %v2172
      %v2174 = vrot.slane %v2143, 2
      %v2175 = vsel %vm1674, %v2166, %v2174
      %v2184 = vadd.f32 %v2108, %v2158
      %v2185 = vadd.f32 %v2109, %v2161
      %v2186 = vadd.f32 %v2110, %v2164
      %v2187 = vadd.f32 %v2111, %v2167
      %v2188 = vadd.f32 %v2112, %v2169
      %v2189 = vadd.f32 %v2113, %v2171
      %v2190 = vadd.f32 %v2114, %v2173
      %v2191 = vadd.f32 %v2115, %v2175
      %v2192 = vlaneseq
      %v2193 = vshrl.u32 %v2192, 7
      %v2194 = vsub.s32 3, %v2193
      %v2195 = vrot.slane %v197, %v2194
      %v2196 = vlaneseq
      %v2197 = vshrl.u32 %v2196, 7
      %v2198 = vsub.s32 3, %v2197
      %v2199 = vrot.slane %v198, %v2198
      %v2200 = vlaneseq
      %v2201 = vshrl.u32 %v2200, 7
      %v2202 = vsub.s32 3, %v2201
      %v2203 = vrot.slane %v199, %v2202
      %v2204 = vlaneseq
      %v2205 = vshrl.u32 %v2204, 7
      %v2206 = vsub.s32 3, %v2205
      %v2207 = vrot.slane %v200, %v2206
      %2212 = vrot.lane.b32.xlu0 %v2195, 32
      %v2213 = vpop.permute.xlu0 %2212
      %2214 = vrot.lane.b32.xlu0 %v2199, 32
      %v2215 = vpop.permute.xlu0 %2214
      %2216 = vrot.lane.b32.xlu0 %v2203, 32
      %v2217 = vpop.permute.xlu0 %2216
      %2218 = vrot.lane.b32.xlu0 %v2207, 32
      %v2219 = vpop.permute.xlu0 %2218
      %v2220 = vsel %vm299, %v2213, %v2215
      %v2221 = vsel %vm299, %v2215, %v2217
      %v2222 = vsel %vm299, %v2217, %v2219
      %v2228 = vmul.f32 %v172, %v2213
      %v2229 = vmul.f32 %v173, %v2220
      %v2230 = vmul.f32 %v174, %v2221
      %v2231 = vmul.f32 %v175, %v2222
      %v2232 = vmul.f32 %v176, %v2219
      %v2233 = vmul.f32 %v178, %v2213
      %v2234 = vmul.f32 %v179, %v2220
      %v2235 = vmul.f32 %v180, %v2221
      %v2236 = vmul.f32 %v181, %v2222
      %v2237 = vmul.f32 %v182, %v2219
      %v2238 = vmul.f32 %v184, %v2213
      %v2239 = vmul.f32 %v185, %v2220
      %v2240 = vmul.f32 %v186, %v2221
      %v2241 = vmul.f32 %v187, %v2222
      %v2242 = vmul.f32 %v188, %v2219
      %v2258 = vrot.slane %v2228, 2
      %v2259 = vrot.slane %v2233, 2
      %v2260 = vsel %vm1674, %v2258, %v2259
      %v2261 = vrot.slane %v2229, 2
      %v2262 = vrot.slane %v2234, 2
      %v2263 = vsel %vm1674, %v2261, %v2262
      %v2264 = vrot.slane %v2230, 2
      %v2265 = vrot.slane %v2235, 2
      %v2266 = vsel %vm1674, %v2264, %v2265
      %v2267 = vrot.slane %v2231, 2
      %v2268 = vrot.slane %v2236, 2
      %v2269 = vsel %vm1674, %v2267, %v2268
      %v2270 = vrot.slane %v2232, 2
      %v2271 = vrot.slane %v2237, 2
      %v2272 = vsel %vm1674, %v2270, %v2271
      %v2273 = vrot.slane %v2238, 2
      %v2274 = vsel %vm1674, %v2259, %v2273
      %v2275 = vrot.slane %v2239, 2
      %v2276 = vsel %vm1674, %v2262, %v2275
      %v2277 = vrot.slane %v2240, 2
      %v2278 = vsel %vm1674, %v2265, %v2277
      %v2279 = vrot.slane %v2241, 2
      %v2280 = vsel %vm1674, %v2268, %v2279
      %v2281 = vrot.slane %v2242, 2
      %v2282 = vsel %vm1674, %v2271, %v2281
      %2283 = vrot.lane.b32.xlu0 %v2260, 96
      %v2284 = vpop.permute.xlu0 %2283
      %2285 = vrot.lane.b32.xlu0 %v2263, 96
      %v2286 = vpop.permute.xlu0 %2285
      %2287 = vrot.lane.b32.xlu0 %v2266, 96
      %v2288 = vpop.permute.xlu0 %2287
      %2289 = vrot.lane.b32.xlu0 %v2269, 96
      %v2290 = vpop.permute.xlu0 %2289
      %2291 = vrot.lane.b32.xlu0 %v2272, 96
      %v2292 = vpop.permute.xlu0 %2291
      %2293 = vrot.lane.b32.xlu0 %v2274, 96
      %v2294 = vpop.permute.xlu0 %2293
      %2295 = vrot.lane.b32.xlu0 %v2276, 96
      %v2296 = vpop.permute.xlu0 %2295
      %2297 = vrot.lane.b32.xlu0 %v2278, 96
      %v2298 = vpop.permute.xlu0 %2297
      %2299 = vrot.lane.b32.xlu0 %v2280, 96
      %v2300 = vpop.permute.xlu0 %2299
      %2301 = vrot.lane.b32.xlu0 %v2282, 96
      %v2302 = vpop.permute.xlu0 %2301
      %v2303 = vsel %vm348, %v2284, %v2286
      %v2304 = vsel %vm348, %v2286, %v2288
      %v2305 = vsel %vm348, %v2288, %v2290
      %v2306 = vsel %vm348, %v2290, %v2292
      %v2307 = vsel %vm348, %v2294, %v2296
      %v2308 = vsel %vm348, %v2296, %v2298
      %v2309 = vsel %vm348, %v2298, %v2300
      %v2310 = vsel %vm348, %v2300, %v2302
      %v2319 = vadd.f32 %v2184, %v2303
      %v2320 = vadd.f32 %v2185, %v2304
      %v2321 = vadd.f32 %v2186, %v2305
      %v2322 = vadd.f32 %v2187, %v2306
      %v2323 = vadd.f32 %v2188, %v2307
      %v2324 = vadd.f32 %v2189, %v2308
      %v2325 = vadd.f32 %v2190, %v2309
      %v2326 = vadd.f32 %v2191, %v2310
      %v2327 = vlaneseq
      %v2328 = vshrl.u32 %v2327, 7
      %v2329 = vsub.s32 4, %v2328
      %v2330 = vrot.slane %v197, %v2329
      %v2331 = vlaneseq
      %v2332 = vshrl.u32 %v2331, 7
      %v2333 = vsub.s32 4, %v2332
      %v2334 = vrot.slane %v198, %v2333
      %v2335 = vlaneseq
      %v2336 = vshrl.u32 %v2335, 7
      %v2337 = vsub.s32 4, %v2336
      %v2338 = vrot.slane %v199, %v2337
      %v2339 = vlaneseq
      %v2340 = vshrl.u32 %v2339, 7
      %v2341 = vsub.s32 4, %v2340
      %v2342 = vrot.slane %v200, %v2341
      %2347 = vrot.lane.b32.xlu0 %v2330, 64
      %v2348 = vpop.permute.xlu0 %2347
      %2349 = vrot.lane.b32.xlu0 %v2334, 64
      %v2350 = vpop.permute.xlu0 %2349
      %2351 = vrot.lane.b32.xlu0 %v2338, 64
      %v2352 = vpop.permute.xlu0 %2351
      %2353 = vrot.lane.b32.xlu0 %v2342, 64
      %v2354 = vpop.permute.xlu0 %2353
      %v2355 = vsel %vm401, %v2348, %v2350
      %v2356 = vsel %vm401, %v2350, %v2352
      %v2357 = vsel %vm401, %v2352, %v2354
      %v2363 = vmul.f32 %v172, %v2348
      %v2364 = vmul.f32 %v173, %v2355
      %v2365 = vmul.f32 %v174, %v2356
      %v2366 = vmul.f32 %v175, %v2357
      %v2367 = vmul.f32 %v176, %v2354
      %v2368 = vmul.f32 %v178, %v2348
      %v2369 = vmul.f32 %v179, %v2355
      %v2370 = vmul.f32 %v180, %v2356
      %v2371 = vmul.f32 %v181, %v2357
      %v2372 = vmul.f32 %v182, %v2354
      %v2373 = vmul.f32 %v184, %v2348
      %v2374 = vmul.f32 %v185, %v2355
      %v2375 = vmul.f32 %v186, %v2356
      %v2376 = vmul.f32 %v187, %v2357
      %v2377 = vmul.f32 %v188, %v2354
      %v2393 = vrot.slane %v2363, 2
      %v2394 = vrot.slane %v2368, 2
      %v2395 = vsel %vm1674, %v2393, %v2394
      %v2396 = vrot.slane %v2364, 2
      %v2397 = vrot.slane %v2369, 2
      %v2398 = vsel %vm1674, %v2396, %v2397
      %v2399 = vrot.slane %v2365, 2
      %v2400 = vrot.slane %v2370, 2
      %v2401 = vsel %vm1674, %v2399, %v2400
      %v2402 = vrot.slane %v2366, 2
      %v2403 = vrot.slane %v2371, 2
      %v2404 = vsel %vm1674, %v2402, %v2403
      %v2405 = vrot.slane %v2367, 2
      %v2406 = vrot.slane %v2372, 2
      %v2407 = vsel %vm1674, %v2405, %v2406
      %v2408 = vrot.slane %v2373, 2
      %v2409 = vsel %vm1674, %v2394, %v2408
      %v2410 = vrot.slane %v2374, 2
      %v2411 = vsel %vm1674, %v2397, %v2410
      %v2412 = vrot.slane %v2375, 2
      %v2413 = vsel %vm1674, %v2400, %v2412
      %v2414 = vrot.slane %v2376, 2
      %v2415 = vsel %vm1674, %v2403, %v2414
      %v2416 = vrot.slane %v2377, 2
      %v2417 = vsel %vm1674, %v2406, %v2416
      %2418 = vrot.lane.b32.xlu0 %v2395, 64
      %v2419 = vpop.permute.xlu0 %2418
      %2420 = vrot.lane.b32.xlu0 %v2398, 64
      %v2421 = vpop.permute.xlu0 %2420
      %2422 = vrot.lane.b32.xlu0 %v2401, 64
      %v2423 = vpop.permute.xlu0 %2422
      %2424 = vrot.lane.b32.xlu0 %v2404, 64
      %v2425 = vpop.permute.xlu0 %2424
      %2426 = vrot.lane.b32.xlu0 %v2407, 64
      %v2427 = vpop.permute.xlu0 %2426
      %2428 = vrot.lane.b32.xlu0 %v2409, 64
      %v2429 = vpop.permute.xlu0 %2428
      %2430 = vrot.lane.b32.xlu0 %v2411, 64
      %v2431 = vpop.permute.xlu0 %2430
      %2432 = vrot.lane.b32.xlu0 %v2413, 64
      %v2433 = vpop.permute.xlu0 %2432
      %2434 = vrot.lane.b32.xlu0 %v2415, 64
      %v2435 = vpop.permute.xlu0 %2434
      %2436 = vrot.lane.b32.xlu0 %v2417, 64
      %v2437 = vpop.permute.xlu0 %2436
      %v2438 = vsel %vm401, %v2419, %v2421
      %v2439 = vsel %vm401, %v2421, %v2423
      %v2440 = vsel %vm401, %v2423, %v2425
      %v2441 = vsel %vm401, %v2425, %v2427
      %v2442 = vsel %vm401, %v2429, %v2431
      %v2443 = vsel %vm401, %v2431, %v2433
      %v2444 = vsel %vm401, %v2433, %v2435
      %v2445 = vsel %vm401, %v2435, %v2437
      %v2454 = vadd.f32 %v2319, %v2438
      %v2455 = vadd.f32 %v2320, %v2439
      %v2456 = vadd.f32 %v2321, %v2440
      %v2457 = vadd.f32 %v2322, %v2441
      %v2458 = vadd.f32 %v2323, %v2442
      %v2459 = vadd.f32 %v2324, %v2443
      %v2460 = vadd.f32 %v2325, %v2444
      %v2461 = vadd.f32 %v2326, %v2445
      %v2462 = vlaneseq
      %v2463 = vshrl.u32 %v2462, 7
      %v2464 = vsub.s32 5, %v2463
      %v2465 = vrot.slane %v197, %v2464
      %v2466 = vlaneseq
      %v2467 = vshrl.u32 %v2466, 7
      %v2468 = vsub.s32 5, %v2467
      %v2469 = vrot.slane %v198, %v2468
      %v2470 = vlaneseq
      %v2471 = vshrl.u32 %v2470, 7
      %v2472 = vsub.s32 5, %v2471
      %v2473 = vrot.slane %v199, %v2472
      %v2474 = vlaneseq
      %v2475 = vshrl.u32 %v2474, 7
      %v2476 = vsub.s32 5, %v2475
      %v2477 = vrot.slane %v200, %v2476
      %v2478 = vmul.f32 %v171, %v2465
      %v2479 = vmul.f32 %v172, %v2469
      %v2480 = vmul.f32 %v173, %v2473
      %v2481 = vmul.f32 %v174, %v2477
      %v2482 = vmul.f32 %v177, %v2465
      %v2483 = vmul.f32 %v178, %v2469
      %v2484 = vmul.f32 %v179, %v2473
      %v2485 = vmul.f32 %v180, %v2477
      %v2486 = vmul.f32 %v183, %v2465
      %v2487 = vmul.f32 %v184, %v2469
      %v2488 = vmul.f32 %v185, %v2473
      %v2489 = vmul.f32 %v186, %v2477
      %vm2502 = vcmask 1044480
      %v2503 = vrot.slane %v2478, 3
      %v2504 = vrot.slane %v2482, 3
      %v2505 = vsel %vm2502, %v2503, %v2504
      %v2506 = vrot.slane %v2479, 3
      %v2507 = vrot.slane %v2483, 3
      %v2508 = vsel %vm2502, %v2506, %v2507
      %v2509 = vrot.slane %v2480, 3
      %v2510 = vrot.slane %v2484, 3
      %v2511 = vsel %vm2502, %v2509, %v2510
      %v2512 = vrot.slane %v2481, 3
      %v2513 = vrot.slane %v2485, 3
      %v2514 = vsel %vm2502, %v2512, %v2513
      %v2515 = vrot.slane %v2486, 3
      %v2516 = vsel %vm2502, %v2504, %v2515
      %v2517 = vrot.slane %v2487, 3
      %v2518 = vsel %vm2502, %v2507, %v2517
      %v2519 = vrot.slane %v2488, 3
      %v2520 = vsel %vm2502, %v2510, %v2519
      %v2521 = vrot.slane %v2489, 3
      %v2522 = vsel %vm2502, %v2513, %v2521
      %v2531 = vadd.f32 %v2454, %v2505
      %v2532 = vadd.f32 %v2455, %v2508
      %v2533 = vadd.f32 %v2456, %v2511
      %v2534 = vadd.f32 %v2457, %v2514
      %v2535 = vadd.f32 %v2458, %v2516
      %v2536 = vadd.f32 %v2459, %v2518
      %v2537 = vadd.f32 %v2460, %v2520
      %v2538 = vadd.f32 %v2461, %v2522
      %v2539 = vlaneseq
      %v2540 = vshrl.u32 %v2539, 7
      %v2541 = vsub.s32 6, %v2540
      %v2542 = vrot.slane %v197, %v2541
      %v2543 = vlaneseq
      %v2544 = vshrl.u32 %v2543, 7
      %v2545 = vsub.s32 6, %v2544
      %v2546 = vrot.slane %v198, %v2545
      %v2547 = vlaneseq
      %v2548 = vshrl.u32 %v2547, 7
      %v2549 = vsub.s32 6, %v2548
      %v2550 = vrot.slane %v199, %v2549
      %v2551 = vlaneseq
      %v2552 = vshrl.u32 %v2551, 7
      %v2553 = vsub.s32 6, %v2552
      %v2554 = vrot.slane %v200, %v2553
      %2559 = vrot.lane.b32.xlu0 %v2542, 32
      %v2560 = vpop.permute.xlu0 %2559
      %2561 = vrot.lane.b32.xlu0 %v2546, 32
      %v2562 = vpop.permute.xlu0 %2561
      %2563 = vrot.lane.b32.xlu0 %v2550, 32
      %v2564 = vpop.permute.xlu0 %2563
      %2565 = vrot.lane.b32.xlu0 %v2554, 32
      %v2566 = vpop.permute.xlu0 %2565
      %v2567 = vsel %vm299, %v2560, %v2562
      %v2568 = vsel %vm299, %v2562, %v2564
      %v2569 = vsel %vm299, %v2564, %v2566
      %v2575 = vmul.f32 %v171, %v2560
      %v2576 = vmul.f32 %v172, %v2567
      %v2577 = vmul.f32 %v173, %v2568
      %v2578 = vmul.f32 %v174, %v2569
      %v2579 = vmul.f32 %v175, %v2566
      %v2580 = vmul.f32 %v177, %v2560
      %v2581 = vmul.f32 %v178, %v2567
      %v2582 = vmul.f32 %v179, %v2568
      %v2583 = vmul.f32 %v180, %v2569
      %v2584 = vmul.f32 %v181, %v2566
      %v2585 = vmul.f32 %v183, %v2560
      %v2586 = vmul.f32 %v184, %v2567
      %v2587 = vmul.f32 %v185, %v2568
      %v2588 = vmul.f32 %v186, %v2569
      %v2589 = vmul.f32 %v187, %v2566
      %v2605 = vrot.slane %v2575, 3
      %v2606 = vrot.slane %v2580, 3
      %v2607 = vsel %vm2502, %v2605, %v2606
      %v2608 = vrot.slane %v2576, 3
      %v2609 = vrot.slane %v2581, 3
      %v2610 = vsel %vm2502, %v2608, %v2609
      %v2611 = vrot.slane %v2577, 3
      %v2612 = vrot.slane %v2582, 3
      %v2613 = vsel %vm2502, %v2611, %v2612
      %v2614 = vrot.slane %v2578, 3
      %v2615 = vrot.slane %v2583, 3
      %v2616 = vsel %vm2502, %v2614, %v2615
      %v2617 = vrot.slane %v2579, 3
      %v2618 = vrot.slane %v2584, 3
      %v2619 = vsel %vm2502, %v2617, %v2618
      %v2620 = vrot.slane %v2585, 3
      %v2621 = vsel %vm2502, %v2606, %v2620
      %v2622 = vrot.slane %v2586, 3
      %v2623 = vsel %vm2502, %v2609, %v2622
      %v2624 = vrot.slane %v2587, 3
      %v2625 = vsel %vm2502, %v2612, %v2624
      %v2626 = vrot.slane %v2588, 3
      %v2627 = vsel %vm2502, %v2615, %v2626
      %v2628 = vrot.slane %v2589, 3
      %v2629 = vsel %vm2502, %v2618, %v2628
      %2630 = vrot.lane.b32.xlu0 %v2607, 96
      %v2631 = vpop.permute.xlu0 %2630
      %2632 = vrot.lane.b32.xlu0 %v2610, 96
      %v2633 = vpop.permute.xlu0 %2632
      %2634 = vrot.lane.b32.xlu0 %v2613, 96
      %v2635 = vpop.permute.xlu0 %2634
      %2636 = vrot.lane.b32.xlu0 %v2616, 96
      %v2637 = vpop.permute.xlu0 %2636
      %2638 = vrot.lane.b32.xlu0 %v2619, 96
      %v2639 = vpop.permute.xlu0 %2638
      %2640 = vrot.lane.b32.xlu0 %v2621, 96
      %v2641 = vpop.permute.xlu0 %2640
      %2642 = vrot.lane.b32.xlu0 %v2623, 96
      %v2643 = vpop.permute.xlu0 %2642
      %2644 = vrot.lane.b32.xlu0 %v2625, 96
      %v2645 = vpop.permute.xlu0 %2644
      %2646 = vrot.lane.b32.xlu0 %v2627, 96
      %v2647 = vpop.permute.xlu0 %2646
      %2648 = vrot.lane.b32.xlu0 %v2629, 96
      %v2649 = vpop.permute.xlu0 %2648
      %v2650 = vsel %vm348, %v2631, %v2633
      %v2651 = vsel %vm348, %v2633, %v2635
      %v2652 = vsel %vm348, %v2635, %v2637
      %v2653 = vsel %vm348, %v2637, %v2639
      %v2654 = vsel %vm348, %v2641, %v2643
      %v2655 = vsel %vm348, %v2643, %v2645
      %v2656 = vsel %vm348, %v2645, %v2647
      %v2657 = vsel %vm348, %v2647, %v2649
      %v2666 = vadd.f32 %v2531, %v2650
      %v2667 = vadd.f32 %v2532, %v2651
      %v2668 = vadd.f32 %v2533, %v2652
      %v2669 = vadd.f32 %v2534, %v2653
      %v2670 = vadd.f32 %v2535, %v2654
      %v2671 = vadd.f32 %v2536, %v2655
      %v2672 = vadd.f32 %v2537, %v2656
      %v2673 = vadd.f32 %v2538, %v2657
      %v2674 = vlaneseq
      %v2675 = vshrl.u32 %v2674, 7
      %v2676 = vsub.s32 7, %v2675
      %v2677 = vrot.slane %v197, %v2676
      %v2678 = vlaneseq
      %v2679 = vshrl.u32 %v2678, 7
      %v2680 = vsub.s32 7, %v2679
      %v2681 = vrot.slane %v198, %v2680
      %v2682 = vlaneseq
      %v2683 = vshrl.u32 %v2682, 7
      %v2684 = vsub.s32 7, %v2683
      %v2685 = vrot.slane %v199, %v2684
      %v2686 = vlaneseq
      %v2687 = vshrl.u32 %v2686, 7
      %v2688 = vsub.s32 7, %v2687
      %v2689 = vrot.slane %v200, %v2688
      %2694 = vrot.lane.b32.xlu0 %v2677, 64
      %v2695 = vpop.permute.xlu0 %2694
      %2696 = vrot.lane.b32.xlu0 %v2681, 64
      %v2697 = vpop.permute.xlu0 %2696
      %2698 = vrot.lane.b32.xlu0 %v2685, 64
      %v2699 = vpop.permute.xlu0 %2698
      %2700 = vrot.lane.b32.xlu0 %v2689, 64
      %v2701 = vpop.permute.xlu0 %2700
      %v2702 = vsel %vm401, %v2695, %v2697
      %v2703 = vsel %vm401, %v2697, %v2699
      %v2704 = vsel %vm401, %v2699, %v2701
      %v2710 = vmul.f32 %v171, %v2695
      %v2711 = vmul.f32 %v172, %v2702
      %v2712 = vmul.f32 %v173, %v2703
      %v2713 = vmul.f32 %v174, %v2704
      %v2714 = vmul.f32 %v175, %v2701
      %v2715 = vmul.f32 %v177, %v2695
      %v2716 = vmul.f32 %v178, %v2702
      %v2717 = vmul.f32 %v179, %v2703
      %v2718 = vmul.f32 %v180, %v2704
      %v2719 = vmul.f32 %v181, %v2701
      %v2720 = vmul.f32 %v183, %v2695
      %v2721 = vmul.f32 %v184, %v2702
      %v2722 = vmul.f32 %v185, %v2703
      %v2723 = vmul.f32 %v186, %v2704
      %v2724 = vmul.f32 %v187, %v2701
      %v2740 = vrot.slane %v2710, 3
      %v2741 = vrot.slane %v2715, 3
      %v2742 = vsel %vm2502, %v2740, %v2741
      %v2743 = vrot.slane %v2711, 3
      %v2744 = vrot.slane %v2716, 3
      %v2745 = vsel %vm2502, %v2743, %v2744
      %v2746 = vrot.slane %v2712, 3
      %v2747 = vrot.slane %v2717, 3
      %v2748 = vsel %vm2502, %v2746, %v2747
      %v2749 = vrot.slane %v2713, 3
      %v2750 = vrot.slane %v2718, 3
      %v2751 = vsel %vm2502, %v2749, %v2750
      %v2752 = vrot.slane %v2714, 3
      %v2753 = vrot.slane %v2719, 3
      %v2754 = vsel %vm2502, %v2752, %v2753
      %v2755 = vrot.slane %v2720, 3
      %v2756 = vsel %vm2502, %v2741, %v2755
      %v2757 = vrot.slane %v2721, 3
      %v2758 = vsel %vm2502, %v2744, %v2757
      %v2759 = vrot.slane %v2722, 3
      %v2760 = vsel %vm2502, %v2747, %v2759
      %v2761 = vrot.slane %v2723, 3
      %v2762 = vsel %vm2502, %v2750, %v2761
      %v2763 = vrot.slane %v2724, 3
      %v2764 = vsel %vm2502, %v2753, %v2763
      %2765 = vrot.lane.b32.xlu0 %v2742, 64
      %v2766 = vpop.permute.xlu0 %2765
      %2767 = vrot.lane.b32.xlu0 %v2745, 64
      %v2768 = vpop.permute.xlu0 %2767
      %2769 = vrot.lane.b32.xlu0 %v2748, 64
      %v2770 = vpop.permute.xlu0 %2769
      %2771 = vrot.lane.b32.xlu0 %v2751, 64
      %v2772 = vpop.permute.xlu0 %2771
      %2773 = vrot.lane.b32.xlu0 %v2754, 64
      %v2774 = vpop.permute.xlu0 %2773
      %2775 = vrot.lane.b32.xlu0 %v2756, 64
      %v2776 = vpop.permute.xlu0 %2775
      %2777 = vrot.lane.b32.xlu0 %v2758, 64
      %v2778 = vpop.permute.xlu0 %2777
      %2779 = vrot.lane.b32.xlu0 %v2760, 64
      %v2780 = vpop.permute.xlu0 %2779
      %2781 = vrot.lane.b32.xlu0 %v2762, 64
      %v2782 = vpop.permute.xlu0 %2781
      %2783 = vrot.lane.b32.xlu0 %v2764, 64
      %v2784 = vpop.permute.xlu0 %2783
      %v2785 = vsel %vm401, %v2766, %v2768
      %v2786 = vsel %vm401, %v2768, %v2770
      %v2787 = vsel %vm401, %v2770, %v2772
      %v2788 = vsel %vm401, %v2772, %v2774
      %v2789 = vsel %vm401, %v2776, %v2778
      %v2790 = vsel %vm401, %v2778, %v2780
      %v2791 = vsel %vm401, %v2780, %v2782
      %v2792 = vsel %vm401, %v2782, %v2784
      %v2801 = vadd.f32 %v2666, %v2785
      %v2802 = vadd.f32 %v2667, %v2786
      %v2803 = vadd.f32 %v2668, %v2787
      %v2804 = vadd.f32 %v2669, %v2788
      %v2805 = vadd.f32 %v2670, %v2789
      %v2806 = vadd.f32 %v2671, %v2790
      %v2807 = vadd.f32 %v2672, %v2791
      %v2808 = vadd.f32 %v2673, %v2792
      %v2809 = vlaneseq
      %v2810 = vshrl.u32 %v2809, 7
      %v2811 = vsub.s32 0, %v2810
      %v2812 = vrot.slane %v201, %v2811
      %v2813 = vlaneseq
      %v2814 = vshrl.u32 %v2813, 7
      %v2815 = vsub.s32 0, %v2814
      %v2816 = vrot.slane %v202, %v2815
      %v2817 = vlaneseq
      %v2818 = vshrl.u32 %v2817, 7
      %v2819 = vsub.s32 0, %v2818
      %v2820 = vrot.slane %v203, %v2819
      %v2821 = vlaneseq
      %v2822 = vshrl.u32 %v2821, 7
      %v2823 = vsub.s32 0, %v2822
      %v2824 = vrot.slane %v204, %v2823
      %2829 = vrot.lane.b32.xlu0 %v2812, 96
      %v2830 = vpop.permute.xlu0 %2829
      %2831 = vrot.lane.b32.xlu0 %v2816, 96
      %v2832 = vpop.permute.xlu0 %2831
      %2833 = vrot.lane.b32.xlu0 %v2820, 96
      %v2834 = vpop.permute.xlu0 %2833
      %2835 = vrot.lane.b32.xlu0 %v2824, 96
      %v2836 = vpop.permute.xlu0 %2835
      %v2837 = vsel %vm348, %v2830, %v2832
      %v2838 = vsel %vm348, %v2832, %v2834
      %v2839 = vsel %vm348, %v2834, %v2836
      %v2845 = vmul.f32 %v171, %v2830
      %v2846 = vmul.f32 %v172, %v2837
      %v2847 = vmul.f32 %v173, %v2838
      %v2848 = vmul.f32 %v174, %v2839
      %v2849 = vmul.f32 %v175, %v2836
      %v2850 = vmul.f32 %v177, %v2830
      %v2851 = vmul.f32 %v178, %v2837
      %v2852 = vmul.f32 %v179, %v2838
      %v2853 = vmul.f32 %v180, %v2839
      %v2854 = vmul.f32 %v181, %v2836
      %v2855 = vmul.f32 %v183, %v2830
      %v2856 = vmul.f32 %v184, %v2837
      %v2857 = vmul.f32 %v185, %v2838
      %v2858 = vmul.f32 %v186, %v2839
      %v2859 = vmul.f32 %v187, %v2836
      %v2875 = vrot.slane %v2845, 3
      %v2876 = vrot.slane %v2850, 3
      %v2877 = vsel %vm2502, %v2875, %v2876
      %v2878 = vrot.slane %v2846, 3
      %v2879 = vrot.slane %v2851, 3
      %v2880 = vsel %vm2502, %v2878, %v2879
      %v2881 = vrot.slane %v2847, 3
      %v2882 = vrot.slane %v2852, 3
      %v2883 = vsel %vm2502, %v2881, %v2882
      %v2884 = vrot.slane %v2848, 3
      %v2885 = vrot.slane %v2853, 3
      %v2886 = vsel %vm2502, %v2884, %v2885
      %v2887 = vrot.slane %v2849, 3
      %v2888 = vrot.slane %v2854, 3
      %v2889 = vsel %vm2502, %v2887, %v2888
      %v2890 = vrot.slane %v2855, 3
      %v2891 = vsel %vm2502, %v2876, %v2890
      %v2892 = vrot.slane %v2856, 3
      %v2893 = vsel %vm2502, %v2879, %v2892
      %v2894 = vrot.slane %v2857, 3
      %v2895 = vsel %vm2502, %v2882, %v2894
      %v2896 = vrot.slane %v2858, 3
      %v2897 = vsel %vm2502, %v2885, %v2896
      %v2898 = vrot.slane %v2859, 3
      %v2899 = vsel %vm2502, %v2888, %v2898
      %2900 = vrot.lane.b32.xlu0 %v2877, 32
      %v2901 = vpop.permute.xlu0 %2900
      %2902 = vrot.lane.b32.xlu0 %v2880, 32
      %v2903 = vpop.permute.xlu0 %2902
      %2904 = vrot.lane.b32.xlu0 %v2883, 32
      %v2905 = vpop.permute.xlu0 %2904
      %2906 = vrot.lane.b32.xlu0 %v2886, 32
      %v2907 = vpop.permute.xlu0 %2906
      %2908 = vrot.lane.b32.xlu0 %v2889, 32
      %v2909 = vpop.permute.xlu0 %2908
      %2910 = vrot.lane.b32.xlu0 %v2891, 32
      %v2911 = vpop.permute.xlu0 %2910
      %2912 = vrot.lane.b32.xlu0 %v2893, 32
      %v2913 = vpop.permute.xlu0 %2912
      %2914 = vrot.lane.b32.xlu0 %v2895, 32
      %v2915 = vpop.permute.xlu0 %2914
      %2916 = vrot.lane.b32.xlu0 %v2897, 32
      %v2917 = vpop.permute.xlu0 %2916
      %2918 = vrot.lane.b32.xlu0 %v2899, 32
      %v2919 = vpop.permute.xlu0 %2918
      %v2920 = vsel %vm299, %v2901, %v2903
      %v2921 = vsel %vm299, %v2903, %v2905
      %v2922 = vsel %vm299, %v2905, %v2907
      %v2923 = vsel %vm299, %v2907, %v2909
      %v2924 = vsel %vm299, %v2911, %v2913
      %v2925 = vsel %vm299, %v2913, %v2915
      %v2926 = vsel %vm299, %v2915, %v2917
      %v2927 = vsel %vm299, %v2917, %v2919
      %v2936 = vadd.f32 %v2801, %v2920
      %v2937 = vadd.f32 %v2802, %v2921
      %v2938 = vadd.f32 %v2803, %v2922
      %v2939 = vadd.f32 %v2804, %v2923
      %v2940 = vadd.f32 %v2805, %v2924
      %v2941 = vadd.f32 %v2806, %v2925
      %v2942 = vadd.f32 %v2807, %v2926
      %v2943 = vadd.f32 %v2808, %v2927
      %v2944 = vlaneseq
      %v2945 = vshrl.u32 %v2944, 7
      %v2946 = vsub.s32 1, %v2945
      %v2947 = vrot.slane %v201, %v2946
      %v2948 = vlaneseq
      %v2949 = vshrl.u32 %v2948, 7
      %v2950 = vsub.s32 1, %v2949
      %v2951 = vrot.slane %v202, %v2950
      %v2952 = vlaneseq
      %v2953 = vshrl.u32 %v2952, 7
      %v2954 = vsub.s32 1, %v2953
      %v2955 = vrot.slane %v203, %v2954
      %v2956 = vlaneseq
      %v2957 = vshrl.u32 %v2956, 7
      %v2958 = vsub.s32 1, %v2957
      %v2959 = vrot.slane %v204, %v2958
      %v2960 = vmul.f32 %v172, %v2947
      %v2961 = vmul.f32 %v173, %v2951
      %v2962 = vmul.f32 %v174, %v2955
      %v2963 = vmul.f32 %v175, %v2959
      %v2964 = vmul.f32 %v178, %v2947
      %v2965 = vmul.f32 %v179, %v2951
      %v2966 = vmul.f32 %v180, %v2955
      %v2967 = vmul.f32 %v181, %v2959
      %v2968 = vmul.f32 %v184, %v2947
      %v2969 = vmul.f32 %v185, %v2951
      %v2970 = vmul.f32 %v186, %v2955
      %v2971 = vmul.f32 %v187, %v2959
      %v2984 = vrot.slane %v2960, 3
      %v2985 = vrot.slane %v2964, 3
      %v2986 = vsel %vm2502, %v2984, %v2985
      %v2987 = vrot.slane %v2961, 3
      %v2988 = vrot.slane %v2965, 3
      %v2989 = vsel %vm2502, %v2987, %v2988
      %v2990 = vrot.slane %v2962, 3
      %v2991 = vrot.slane %v2966, 3
      %v2992 = vsel %vm2502, %v2990, %v2991
      %v2993 = vrot.slane %v2963, 3
      %v2994 = vrot.slane %v2967, 3
      %v2995 = vsel %vm2502, %v2993, %v2994
      %v2996 = vrot.slane %v2968, 3
      %v2997 = vsel %vm2502, %v2985, %v2996
      %v2998 = vrot.slane %v2969, 3
      %v2999 = vsel %vm2502, %v2988, %v2998
      %v3000 = vrot.slane %v2970, 3
      %v3001 = vsel %vm2502, %v2991, %v3000
      %v3002 = vrot.slane %v2971, 3
      %v3003 = vsel %vm2502, %v2994, %v3002
      %v3012 = vadd.f32 %v2936, %v2986
      %v3013 = vadd.f32 %v2937, %v2989
      %v3014 = vadd.f32 %v2938, %v2992
      %v3015 = vadd.f32 %v2939, %v2995
      %v3016 = vadd.f32 %v2940, %v2997
      %v3017 = vadd.f32 %v2941, %v2999
      %v3018 = vadd.f32 %v2942, %v3001
      %v3019 = vadd.f32 %v2943, %v3003
      %v3020 = vlaneseq
      %v3021 = vshrl.u32 %v3020, 7
      %v3022 = vsub.s32 2, %v3021
      %v3023 = vrot.slane %v201, %v3022
      %v3024 = vlaneseq
      %v3025 = vshrl.u32 %v3024, 7
      %v3026 = vsub.s32 2, %v3025
      %v3027 = vrot.slane %v202, %v3026
      %v3028 = vlaneseq
      %v3029 = vshrl.u32 %v3028, 7
      %v3030 = vsub.s32 2, %v3029
      %v3031 = vrot.slane %v203, %v3030
      %v3032 = vlaneseq
      %v3033 = vshrl.u32 %v3032, 7
      %v3034 = vsub.s32 2, %v3033
      %v3035 = vrot.slane %v204, %v3034
      %3040 = vrot.lane.b32.xlu0 %v3023, 32
      %v3041 = vpop.permute.xlu0 %3040
      %3042 = vrot.lane.b32.xlu0 %v3027, 32
      %v3043 = vpop.permute.xlu0 %3042
      %3044 = vrot.lane.b32.xlu0 %v3031, 32
      %v3045 = vpop.permute.xlu0 %3044
      %3046 = vrot.lane.b32.xlu0 %v3035, 32
      %v3047 = vpop.permute.xlu0 %3046
      %v3048 = vsel %vm299, %v3041, %v3043
      %v3049 = vsel %vm299, %v3043, %v3045
      %v3050 = vsel %vm299, %v3045, %v3047
      %v3056 = vmul.f32 %v172, %v3041
      %v3057 = vmul.f32 %v173, %v3048
      %v3058 = vmul.f32 %v174, %v3049
      %v3059 = vmul.f32 %v175, %v3050
      %v3060 = vmul.f32 %v176, %v3047
      %v3061 = vmul.f32 %v178, %v3041
      %v3062 = vmul.f32 %v179, %v3048
      %v3063 = vmul.f32 %v180, %v3049
      %v3064 = vmul.f32 %v181, %v3050
      %v3065 = vmul.f32 %v182, %v3047
      %v3066 = vmul.f32 %v184, %v3041
      %v3067 = vmul.f32 %v185, %v3048
      %v3068 = vmul.f32 %v186, %v3049
      %v3069 = vmul.f32 %v187, %v3050
      %v3070 = vmul.f32 %v188, %v3047
      %v3086 = vrot.slane %v3056, 3
      %v3087 = vrot.slane %v3061, 3
      %v3088 = vsel %vm2502, %v3086, %v3087
      %v3089 = vrot.slane %v3057, 3
      %v3090 = vrot.slane %v3062, 3
      %v3091 = vsel %vm2502, %v3089, %v3090
      %v3092 = vrot.slane %v3058, 3
      %v3093 = vrot.slane %v3063, 3
      %v3094 = vsel %vm2502, %v3092, %v3093
      %v3095 = vrot.slane %v3059, 3
      %v3096 = vrot.slane %v3064, 3
      %v3097 = vsel %vm2502, %v3095, %v3096
      %v3098 = vrot.slane %v3060, 3
      %v3099 = vrot.slane %v3065, 3
      %v3100 = vsel %vm2502, %v3098, %v3099
      %v3101 = vrot.slane %v3066, 3
      %v3102 = vsel %vm2502, %v3087, %v3101
      %v3103 = vrot.slane %v3067, 3
      %v3104 = vsel %vm2502, %v3090, %v3103
      %v3105 = vrot.slane %v3068, 3
      %v3106 = vsel %vm2502, %v3093, %v3105
      %v3107 = vrot.slane %v3069, 3
      %v3108 = vsel %vm2502, %v3096, %v3107
      %v3109 = vrot.slane %v3070, 3
      %v3110 = vsel %vm2502, %v3099, %v3109
      %3111 = vrot.lane.b32.xlu0 %v3088, 96
      %v3112 = vpop.permute.xlu0 %3111
      %3113 = vrot.lane.b32.xlu0 %v3091, 96
      %v3114 = vpop.permute.xlu0 %3113
      %3115 = vrot.lane.b32.xlu0 %v3094, 96
      %v3116 = vpop.permute.xlu0 %3115
      %3117 = vrot.lane.b32.xlu0 %v3097, 96
      %v3118 = vpop.permute.xlu0 %3117
      %3119 = vrot.lane.b32.xlu0 %v3100, 96
      %v3120 = vpop.permute.xlu0 %3119
      %3121 = vrot.lane.b32.xlu0 %v3102, 96
      %v3122 = vpop.permute.xlu0 %3121
      %3123 = vrot.lane.b32.xlu0 %v3104, 96
      %v3124 = vpop.permute.xlu0 %3123
      %3125 = vrot.lane.b32.xlu0 %v3106, 96
      %v3126 = vpop.permute.xlu0 %3125
      %3127 = vrot.lane.b32.xlu0 %v3108, 96
      %v3128 = vpop.permute.xlu0 %3127
      %3129 = vrot.lane.b32.xlu0 %v3110, 96
      %v3130 = vpop.permute.xlu0 %3129
      %v3131 = vsel %vm348, %v3112, %v3114
      %v3132 = vsel %vm348, %v3114, %v3116
      %v3133 = vsel %vm348, %v3116, %v3118
      %v3134 = vsel %vm348, %v3118, %v3120
      %v3135 = vsel %vm348, %v3122, %v3124
      %v3136 = vsel %vm348, %v3124, %v3126
      %v3137 = vsel %vm348, %v3126, %v3128
      %v3138 = vsel %vm348, %v3128, %v3130
      %v3147 = vadd.f32 %v3012, %v3131
      %v3148 = vadd.f32 %v3013, %v3132
      %v3149 = vadd.f32 %v3014, %v3133
      %v3150 = vadd.f32 %v3015, %v3134
      %v3151 = vadd.f32 %v3016, %v3135
      %v3152 = vadd.f32 %v3017, %v3136
      %v3153 = vadd.f32 %v3018, %v3137
      %v3154 = vadd.f32 %v3019, %v3138
      %v3155 = vlaneseq
      %v3156 = vshrl.u32 %v3155, 7
      %v3157 = vsub.s32 3, %v3156
      %v3158 = vrot.slane %v201, %v3157
      %v3159 = vlaneseq
      %v3160 = vshrl.u32 %v3159, 7
      %v3161 = vsub.s32 3, %v3160
      %v3162 = vrot.slane %v202, %v3161
      %v3163 = vlaneseq
      %v3164 = vshrl.u32 %v3163, 7
      %v3165 = vsub.s32 3, %v3164
      %v3166 = vrot.slane %v203, %v3165
      %v3167 = vlaneseq
      %v3168 = vshrl.u32 %v3167, 7
      %v3169 = vsub.s32 3, %v3168
      %v3170 = vrot.slane %v204, %v3169
      %3175 = vrot.lane.b32.xlu0 %v3158, 64
      %v3176 = vpop.permute.xlu0 %3175
      %3177 = vrot.lane.b32.xlu0 %v3162, 64
      %v3178 = vpop.permute.xlu0 %3177
      %3179 = vrot.lane.b32.xlu0 %v3166, 64
      %v3180 = vpop.permute.xlu0 %3179
      %3181 = vrot.lane.b32.xlu0 %v3170, 64
      %v3182 = vpop.permute.xlu0 %3181
      %v3183 = vsel %vm401, %v3176, %v3178
      %v3184 = vsel %vm401, %v3178, %v3180
      %v3185 = vsel %vm401, %v3180, %v3182
      %v3191 = vmul.f32 %v172, %v3176
      %v3192 = vmul.f32 %v173, %v3183
      %v3193 = vmul.f32 %v174, %v3184
      %v3194 = vmul.f32 %v175, %v3185
      %v3195 = vmul.f32 %v176, %v3182
      %v3196 = vmul.f32 %v178, %v3176
      %v3197 = vmul.f32 %v179, %v3183
      %v3198 = vmul.f32 %v180, %v3184
      %v3199 = vmul.f32 %v181, %v3185
      %v3200 = vmul.f32 %v182, %v3182
      %v3201 = vmul.f32 %v184, %v3176
      %v3202 = vmul.f32 %v185, %v3183
      %v3203 = vmul.f32 %v186, %v3184
      %v3204 = vmul.f32 %v187, %v3185
      %v3205 = vmul.f32 %v188, %v3182
      %v3221 = vrot.slane %v3191, 3
      %v3222 = vrot.slane %v3196, 3
      %v3223 = vsel %vm2502, %v3221, %v3222
      %v3224 = vrot.slane %v3192, 3
      %v3225 = vrot.slane %v3197, 3
      %v3226 = vsel %vm2502, %v3224, %v3225
      %v3227 = vrot.slane %v3193, 3
      %v3228 = vrot.slane %v3198, 3
      %v3229 = vsel %vm2502, %v3227, %v3228
      %v3230 = vrot.slane %v3194, 3
      %v3231 = vrot.slane %v3199, 3
      %v3232 = vsel %vm2502, %v3230, %v3231
      %v3233 = vrot.slane %v3195, 3
      %v3234 = vrot.slane %v3200, 3
      %v3235 = vsel %vm2502, %v3233, %v3234
      %v3236 = vrot.slane %v3201, 3
      %v3237 = vsel %vm2502, %v3222, %v3236
      %v3238 = vrot.slane %v3202, 3
      %v3239 = vsel %vm2502, %v3225, %v3238
      %v3240 = vrot.slane %v3203, 3
      %v3241 = vsel %vm2502, %v3228, %v3240
      %v3242 = vrot.slane %v3204, 3
      %v3243 = vsel %vm2502, %v3231, %v3242
      %v3244 = vrot.slane %v3205, 3
      %v3245 = vsel %vm2502, %v3234, %v3244
      %3246 = vrot.lane.b32.xlu0 %v3223, 64
      %v3247 = vpop.permute.xlu0 %3246
      %3248 = vrot.lane.b32.xlu0 %v3226, 64
      %v3249 = vpop.permute.xlu0 %3248
      %3250 = vrot.lane.b32.xlu0 %v3229, 64
      %v3251 = vpop.permute.xlu0 %3250
      %3252 = vrot.lane.b32.xlu0 %v3232, 64
      %v3253 = vpop.permute.xlu0 %3252
      %3254 = vrot.lane.b32.xlu0 %v3235, 64
      %v3255 = vpop.permute.xlu0 %3254
      %3256 = vrot.lane.b32.xlu0 %v3237, 64
      %v3257 = vpop.permute.xlu0 %3256
      %3258 = vrot.lane.b32.xlu0 %v3239, 64
      %v3259 = vpop.permute.xlu0 %3258
      %3260 = vrot.lane.b32.xlu0 %v3241, 64
      %v3261 = vpop.permute.xlu0 %3260
      %3262 = vrot.lane.b32.xlu0 %v3243, 64
      %v3263 = vpop.permute.xlu0 %3262
      %3264 = vrot.lane.b32.xlu0 %v3245, 64
      %v3265 = vpop.permute.xlu0 %3264
      %v3266 = vsel %vm401, %v3247, %v3249
      %v3267 = vsel %vm401, %v3249, %v3251
      %v3268 = vsel %vm401, %v3251, %v3253
      %v3269 = vsel %vm401, %v3253, %v3255
      %v3270 = vsel %vm401, %v3257, %v3259
      %v3271 = vsel %vm401, %v3259, %v3261
      %v3272 = vsel %vm401, %v3261, %v3263
      %v3273 = vsel %vm401, %v3263, %v3265
      %v3282 = vadd.f32 %v3147, %v3266
      %v3283 = vadd.f32 %v3148, %v3267
      %v3284 = vadd.f32 %v3149, %v3268
      %v3285 = vadd.f32 %v3150, %v3269
      %v3286 = vadd.f32 %v3151, %v3270
      %v3287 = vadd.f32 %v3152, %v3271
      %v3288 = vadd.f32 %v3153, %v3272
      %v3289 = vadd.f32 %v3154, %v3273
      %v3290 = vlaneseq
      %v3291 = vshrl.u32 %v3290, 7
      %v3292 = vsub.s32 4, %v3291
      %v3293 = vrot.slane %v201, %v3292
      %v3294 = vlaneseq
      %v3295 = vshrl.u32 %v3294, 7
      %v3296 = vsub.s32 4, %v3295
      %v3297 = vrot.slane %v202, %v3296
      %v3298 = vlaneseq
      %v3299 = vshrl.u32 %v3298, 7
      %v3300 = vsub.s32 4, %v3299
      %v3301 = vrot.slane %v203, %v3300
      %v3302 = vlaneseq
      %v3303 = vshrl.u32 %v3302, 7
      %v3304 = vsub.s32 4, %v3303
      %v3305 = vrot.slane %v204, %v3304
      %v3306 = vmul.f32 %v171, %v3293
      %v3307 = vmul.f32 %v172, %v3297
      %v3308 = vmul.f32 %v173, %v3301
      %v3309 = vmul.f32 %v174, %v3305
      %v3310 = vmul.f32 %v177, %v3293
      %v3311 = vmul.f32 %v178, %v3297
      %v3312 = vmul.f32 %v179, %v3301
      %v3313 = vmul.f32 %v180, %v3305
      %v3314 = vmul.f32 %v183, %v3293
      %v3315 = vmul.f32 %v184, %v3297
      %v3316 = vmul.f32 %v185, %v3301
      %v3317 = vmul.f32 %v186, %v3305
      %vm3330 = vcmask 1043456
      %v3331 = vrot.slane %v3306, 4
      %v3332 = vrot.slane %v3310, 4
      %v3333 = vsel %vm3330, %v3331, %v3332
      %v3334 = vrot.slane %v3307, 4
      %v3335 = vrot.slane %v3311, 4
      %v3336 = vsel %vm3330, %v3334, %v3335
      %v3337 = vrot.slane %v3308, 4
      %v3338 = vrot.slane %v3312, 4
      %v3339 = vsel %vm3330, %v3337, %v3338
      %v3340 = vrot.slane %v3309, 4
      %v3341 = vrot.slane %v3313, 4
      %v3342 = vsel %vm3330, %v3340, %v3341
      %v3343 = vrot.slane %v3314, 4
      %v3344 = vsel %vm3330, %v3332, %v3343
      %v3345 = vrot.slane %v3315, 4
      %v3346 = vsel %vm3330, %v3335, %v3345
      %v3347 = vrot.slane %v3316, 4
      %v3348 = vsel %vm3330, %v3338, %v3347
      %v3349 = vrot.slane %v3317, 4
      %v3350 = vsel %vm3330, %v3341, %v3349
      %v3359 = vadd.f32 %v3282, %v3333
      %v3360 = vadd.f32 %v3283, %v3336
      %v3361 = vadd.f32 %v3284, %v3339
      %v3362 = vadd.f32 %v3285, %v3342
      %v3363 = vadd.f32 %v3286, %v3344
      %v3364 = vadd.f32 %v3287, %v3346
      %v3365 = vadd.f32 %v3288, %v3348
      %v3366 = vadd.f32 %v3289, %v3350
      %v3367 = vlaneseq
      %v3368 = vshrl.u32 %v3367, 7
      %v3369 = vsub.s32 5, %v3368
      %v3370 = vrot.slane %v201, %v3369
      %v3371 = vlaneseq
      %v3372 = vshrl.u32 %v3371, 7
      %v3373 = vsub.s32 5, %v3372
      %v3374 = vrot.slane %v202, %v3373
      %v3375 = vlaneseq
      %v3376 = vshrl.u32 %v3375, 7
      %v3377 = vsub.s32 5, %v3376
      %v3378 = vrot.slane %v203, %v3377
      %v3379 = vlaneseq
      %v3380 = vshrl.u32 %v3379, 7
      %v3381 = vsub.s32 5, %v3380
      %v3382 = vrot.slane %v204, %v3381
      %3387 = vrot.lane.b32.xlu0 %v3370, 32
      %v3388 = vpop.permute.xlu0 %3387
      %3389 = vrot.lane.b32.xlu0 %v3374, 32
      %v3390 = vpop.permute.xlu0 %3389
      %3391 = vrot.lane.b32.xlu0 %v3378, 32
      %v3392 = vpop.permute.xlu0 %3391
      %3393 = vrot.lane.b32.xlu0 %v3382, 32
      %v3394 = vpop.permute.xlu0 %3393
      %v3395 = vsel %vm299, %v3388, %v3390
      %v3396 = vsel %vm299, %v3390, %v3392
      %v3397 = vsel %vm299, %v3392, %v3394
      %v3403 = vmul.f32 %v171, %v3388
      %v3404 = vmul.f32 %v172, %v3395
      %v3405 = vmul.f32 %v173, %v3396
      %v3406 = vmul.f32 %v174, %v3397
      %v3407 = vmul.f32 %v175, %v3394
      %v3408 = vmul.f32 %v177, %v3388
      %v3409 = vmul.f32 %v178, %v3395
      %v3410 = vmul.f32 %v179, %v3396
      %v3411 = vmul.f32 %v180, %v3397
      %v3412 = vmul.f32 %v181, %v3394
      %v3413 = vmul.f32 %v183, %v3388
      %v3414 = vmul.f32 %v184, %v3395
      %v3415 = vmul.f32 %v185, %v3396
      %v3416 = vmul.f32 %v186, %v3397
      %v3417 = vmul.f32 %v187, %v3394
      %v3433 = vrot.slane %v3403, 4
      %v3434 = vrot.slane %v3408, 4
      %v3435 = vsel %vm3330, %v3433, %v3434
      %v3436 = vrot.slane %v3404, 4
      %v3437 = vrot.slane %v3409, 4
      %v3438 = vsel %vm3330, %v3436, %v3437
      %v3439 = vrot.slane %v3405, 4
      %v3440 = vrot.slane %v3410, 4
      %v3441 = vsel %vm3330, %v3439, %v3440
      %v3442 = vrot.slane %v3406, 4
      %v3443 = vrot.slane %v3411, 4
      %v3444 = vsel %vm3330, %v3442, %v3443
      %v3445 = vrot.slane %v3407, 4
      %v3446 = vrot.slane %v3412, 4
      %v3447 = vsel %vm3330, %v3445, %v3446
      %v3448 = vrot.slane %v3413, 4
      %v3449 = vsel %vm3330, %v3434, %v3448
      %v3450 = vrot.slane %v3414, 4
      %v3451 = vsel %vm3330, %v3437, %v3450
      %v3452 = vrot.slane %v3415, 4
      %v3453 = vsel %vm3330, %v3440, %v3452
      %v3454 = vrot.slane %v3416, 4
      %v3455 = vsel %vm3330, %v3443, %v3454
      %v3456 = vrot.slane %v3417, 4
      %v3457 = vsel %vm3330, %v3446, %v3456
      %3458 = vrot.lane.b32.xlu0 %v3435, 96
      %v3459 = vpop.permute.xlu0 %3458
      %3460 = vrot.lane.b32.xlu0 %v3438, 96
      %v3461 = vpop.permute.xlu0 %3460
      %3462 = vrot.lane.b32.xlu0 %v3441, 96
      %v3463 = vpop.permute.xlu0 %3462
      %3464 = vrot.lane.b32.xlu0 %v3444, 96
      %v3465 = vpop.permute.xlu0 %3464
      %3466 = vrot.lane.b32.xlu0 %v3447, 96
      %v3467 = vpop.permute.xlu0 %3466
      %3468 = vrot.lane.b32.xlu0 %v3449, 96
      %v3469 = vpop.permute.xlu0 %3468
      %3470 = vrot.lane.b32.xlu0 %v3451, 96
      %v3471 = vpop.permute.xlu0 %3470
      %3472 = vrot.lane.b32.xlu0 %v3453, 96
      %v3473 = vpop.permute.xlu0 %3472
      %3474 = vrot.lane.b32.xlu0 %v3455, 96
      %v3475 = vpop.permute.xlu0 %3474
      %3476 = vrot.lane.b32.xlu0 %v3457, 96
      %v3477 = vpop.permute.xlu0 %3476
      %v3478 = vsel %vm348, %v3459, %v3461
      %v3479 = vsel %vm348, %v3461, %v3463
      %v3480 = vsel %vm348, %v3463, %v3465
      %v3481 = vsel %vm348, %v3465, %v3467
      %v3482 = vsel %vm348, %v3469, %v3471
      %v3483 = vsel %vm348, %v3471, %v3473
      %v3484 = vsel %vm348, %v3473, %v3475
      %v3485 = vsel %vm348, %v3475, %v3477
      %v3494 = vadd.f32 %v3359, %v3478
      %v3495 = vadd.f32 %v3360, %v3479
      %v3496 = vadd.f32 %v3361, %v3480
      %v3497 = vadd.f32 %v3362, %v3481
      %v3498 = vadd.f32 %v3363, %v3482
      %v3499 = vadd.f32 %v3364, %v3483
      %v3500 = vadd.f32 %v3365, %v3484
      %v3501 = vadd.f32 %v3366, %v3485
      %v3502 = vlaneseq
      %v3503 = vshrl.u32 %v3502, 7
      %v3504 = vsub.s32 6, %v3503
      %v3505 = vrot.slane %v201, %v3504
      %v3506 = vlaneseq
      %v3507 = vshrl.u32 %v3506, 7
      %v3508 = vsub.s32 6, %v3507
      %v3509 = vrot.slane %v202, %v3508
      %v3510 = vlaneseq
      %v3511 = vshrl.u32 %v3510, 7
      %v3512 = vsub.s32 6, %v3511
      %v3513 = vrot.slane %v203, %v3512
      %v3514 = vlaneseq
      %v3515 = vshrl.u32 %v3514, 7
      %v3516 = vsub.s32 6, %v3515
      %v3517 = vrot.slane %v204, %v3516
      %3522 = vrot.lane.b32.xlu0 %v3505, 64
      %v3523 = vpop.permute.xlu0 %3522
      %3524 = vrot.lane.b32.xlu0 %v3509, 64
      %v3525 = vpop.permute.xlu0 %3524
      %3526 = vrot.lane.b32.xlu0 %v3513, 64
      %v3527 = vpop.permute.xlu0 %3526
      %3528 = vrot.lane.b32.xlu0 %v3517, 64
      %v3529 = vpop.permute.xlu0 %3528
      %v3530 = vsel %vm401, %v3523, %v3525
      %v3531 = vsel %vm401, %v3525, %v3527
      %v3532 = vsel %vm401, %v3527, %v3529
      %v3538 = vmul.f32 %v171, %v3523
      %v3539 = vmul.f32 %v172, %v3530
      %v3540 = vmul.f32 %v173, %v3531
      %v3541 = vmul.f32 %v174, %v3532
      %v3542 = vmul.f32 %v175, %v3529
      %v3543 = vmul.f32 %v177, %v3523
      %v3544 = vmul.f32 %v178, %v3530
      %v3545 = vmul.f32 %v179, %v3531
      %v3546 = vmul.f32 %v180, %v3532
      %v3547 = vmul.f32 %v181, %v3529
      %v3548 = vmul.f32 %v183, %v3523
      %v3549 = vmul.f32 %v184, %v3530
      %v3550 = vmul.f32 %v185, %v3531
      %v3551 = vmul.f32 %v186, %v3532
      %v3552 = vmul.f32 %v187, %v3529
      %v3568 = vrot.slane %v3538, 4
      %v3569 = vrot.slane %v3543, 4
      %v3570 = vsel %vm3330, %v3568, %v3569
      %v3571 = vrot.slane %v3539, 4
      %v3572 = vrot.slane %v3544, 4
      %v3573 = vsel %vm3330, %v3571, %v3572
      %v3574 = vrot.slane %v3540, 4
      %v3575 = vrot.slane %v3545, 4
      %v3576 = vsel %vm3330, %v3574, %v3575
      %v3577 = vrot.slane %v3541, 4
      %v3578 = vrot.slane %v3546, 4
      %v3579 = vsel %vm3330, %v3577, %v3578
      %v3580 = vrot.slane %v3542, 4
      %v3581 = vrot.slane %v3547, 4
      %v3582 = vsel %vm3330, %v3580, %v3581
      %v3583 = vrot.slane %v3548, 4
      %v3584 = vsel %vm3330, %v3569, %v3583
      %v3585 = vrot.slane %v3549, 4
      %v3586 = vsel %vm3330, %v3572, %v3585
      %v3587 = vrot.slane %v3550, 4
      %v3588 = vsel %vm3330, %v3575, %v3587
      %v3589 = vrot.slane %v3551, 4
      %v3590 = vsel %vm3330, %v3578, %v3589
      %v3591 = vrot.slane %v3552, 4
      %v3592 = vsel %vm3330, %v3581, %v3591
      %3593 = vrot.lane.b32.xlu0 %v3570, 64
      %v3594 = vpop.permute.xlu0 %3593
      %3595 = vrot.lane.b32.xlu0 %v3573, 64
      %v3596 = vpop.permute.xlu0 %3595
      %3597 = vrot.lane.b32.xlu0 %v3576, 64
      %v3598 = vpop.permute.xlu0 %3597
      %3599 = vrot.lane.b32.xlu0 %v3579, 64
      %v3600 = vpop.permute.xlu0 %3599
      %3601 = vrot.lane.b32.xlu0 %v3582, 64
      %v3602 = vpop.permute.xlu0 %3601
      %3603 = vrot.lane.b32.xlu0 %v3584, 64
      %v3604 = vpop.permute.xlu0 %3603
      %3605 = vrot.lane.b32.xlu0 %v3586, 64
      %v3606 = vpop.permute.xlu0 %3605
      %3607 = vrot.lane.b32.xlu0 %v3588, 64
      %v3608 = vpop.permute.xlu0 %3607
      %3609 = vrot.lane.b32.xlu0 %v3590, 64
      %v3610 = vpop.permute.xlu0 %3609
      %3611 = vrot.lane.b32.xlu0 %v3592, 64
      %v3612 = vpop.permute.xlu0 %3611
      %v3613 = vsel %vm401, %v3594, %v3596
      %v3614 = vsel %vm401, %v3596, %v3598
      %v3615 = vsel %vm401, %v3598, %v3600
      %v3616 = vsel %vm401, %v3600, %v3602
      %v3617 = vsel %vm401, %v3604, %v3606
      %v3618 = vsel %vm401, %v3606, %v3608
      %v3619 = vsel %vm401, %v3608, %v3610
      %v3620 = vsel %vm401, %v3610, %v3612
      %v3629 = vadd.f32 %v3494, %v3613
      %v3630 = vadd.f32 %v3495, %v3614
      %v3631 = vadd.f32 %v3496, %v3615
      %v3632 = vadd.f32 %v3497, %v3616
      %v3633 = vadd.f32 %v3498, %v3617
      %v3634 = vadd.f32 %v3499, %v3618
      %v3635 = vadd.f32 %v3500, %v3619
      %v3636 = vadd.f32 %v3501, %v3620
      %v3637 = vlaneseq
      %v3638 = vshrl.u32 %v3637, 7
      %v3639 = vsub.s32 7, %v3638
      %v3640 = vrot.slane %v201, %v3639
      %v3641 = vlaneseq
      %v3642 = vshrl.u32 %v3641, 7
      %v3643 = vsub.s32 7, %v3642
      %v3644 = vrot.slane %v202, %v3643
      %v3645 = vlaneseq
      %v3646 = vshrl.u32 %v3645, 7
      %v3647 = vsub.s32 7, %v3646
      %v3648 = vrot.slane %v203, %v3647
      %v3649 = vlaneseq
      %v3650 = vshrl.u32 %v3649, 7
      %v3651 = vsub.s32 7, %v3650
      %v3652 = vrot.slane %v204, %v3651
      %3657 = vrot.lane.b32.xlu0 %v3640, 96
      %v3658 = vpop.permute.xlu0 %3657
      %3659 = vrot.lane.b32.xlu0 %v3644, 96
      %v3660 = vpop.permute.xlu0 %3659
      %3661 = vrot.lane.b32.xlu0 %v3648, 96
      %v3662 = vpop.permute.xlu0 %3661
      %3663 = vrot.lane.b32.xlu0 %v3652, 96
      %v3664 = vpop.permute.xlu0 %3663
      %v3665 = vsel %vm348, %v3658, %v3660
      %v3666 = vsel %vm348, %v3660, %v3662
      %v3667 = vsel %vm348, %v3662, %v3664
      %v3673 = vmul.f32 %v171, %v3658
      %v3674 = vmul.f32 %v172, %v3665
      %v3675 = vmul.f32 %v173, %v3666
      %v3676 = vmul.f32 %v174, %v3667
      %v3677 = vmul.f32 %v175, %v3664
      %v3678 = vmul.f32 %v177, %v3658
      %v3679 = vmul.f32 %v178, %v3665
      %v3680 = vmul.f32 %v179, %v3666
      %v3681 = vmul.f32 %v180, %v3667
      %v3682 = vmul.f32 %v181, %v3664
      %v3683 = vmul.f32 %v183, %v3658
      %v3684 = vmul.f32 %v184, %v3665
      %v3685 = vmul.f32 %v185, %v3666
      %v3686 = vmul.f32 %v186, %v3667
      %v3687 = vmul.f32 %v187, %v3664
      %v3703 = vrot.slane %v3673, 4
      %v3704 = vrot.slane %v3678, 4
      %v3705 = vsel %vm3330, %v3703, %v3704
      %v3706 = vrot.slane %v3674, 4
      %v3707 = vrot.slane %v3679, 4
      %v3708 = vsel %vm3330, %v3706, %v3707
      %v3709 = vrot.slane %v3675, 4
      %v3710 = vrot.slane %v3680, 4
      %v3711 = vsel %vm3330, %v3709, %v3710
      %v3712 = vrot.slane %v3676, 4
      %v3713 = vrot.slane %v3681, 4
      %v3714 = vsel %vm3330, %v3712, %v3713
      %v3715 = vrot.slane %v3677, 4
      %v3716 = vrot.slane %v3682, 4
      %v3717 = vsel %vm3330, %v3715, %v3716
      %v3718 = vrot.slane %v3683, 4
      %v3719 = vsel %vm3330, %v3704, %v3718
      %v3720 = vrot.slane %v3684, 4
      %v3721 = vsel %vm3330, %v3707, %v3720
      %v3722 = vrot.slane %v3685, 4
      %v3723 = vsel %vm3330, %v3710, %v3722
      %v3724 = vrot.slane %v3686, 4
      %v3725 = vsel %vm3330, %v3713, %v3724
      %v3726 = vrot.slane %v3687, 4
      %v3727 = vsel %vm3330, %v3716, %v3726
      %3728 = vrot.lane.b32.xlu0 %v3705, 32
      %v3729 = vpop.permute.xlu0 %3728
      %3730 = vrot.lane.b32.xlu0 %v3708, 32
      %v3731 = vpop.permute.xlu0 %3730
      %3732 = vrot.lane.b32.xlu0 %v3711, 32
      %v3733 = vpop.permute.xlu0 %3732
      %3734 = vrot.lane.b32.xlu0 %v3714, 32
      %v3735 = vpop.permute.xlu0 %3734
      %3736 = vrot.lane.b32.xlu0 %v3717, 32
      %v3737 = vpop.permute.xlu0 %3736
      %3738 = vrot.lane.b32.xlu0 %v3719, 32
      %v3739 = vpop.permute.xlu0 %3738
      %3740 = vrot.lane.b32.xlu0 %v3721, 32
      %v3741 = vpop.permute.xlu0 %3740
      %3742 = vrot.lane.b32.xlu0 %v3723, 32
      %v3743 = vpop.permute.xlu0 %3742
      %3744 = vrot.lane.b32.xlu0 %v3725, 32
      %v3745 = vpop.permute.xlu0 %3744
      %3746 = vrot.lane.b32.xlu0 %v3727, 32
      %v3747 = vpop.permute.xlu0 %3746
      %v3748 = vsel %vm299, %v3729, %v3731
      %v3749 = vsel %vm299, %v3731, %v3733
      %v3750 = vsel %vm299, %v3733, %v3735
      %v3751 = vsel %vm299, %v3735, %v3737
      %v3752 = vsel %vm299, %v3739, %v3741
      %v3753 = vsel %vm299, %v3741, %v3743
      %v3754 = vsel %vm299, %v3743, %v3745
      %v3755 = vsel %vm299, %v3745, %v3747
      %v3764 = vadd.f32 %v3629, %v3748
      %v3765 = vadd.f32 %v3630, %v3749
      %v3766 = vadd.f32 %v3631, %v3750
      %v3767 = vadd.f32 %v3632, %v3751
      %v3768 = vadd.f32 %v3633, %v3752
      %v3769 = vadd.f32 %v3634, %v3753
      %v3770 = vadd.f32 %v3635, %v3754
      %v3771 = vadd.f32 %v3636, %v3755
      %v3772 = vlaneseq
      %v3773 = vshrl.u32 %v3772, 7
      %v3774 = vsub.s32 0, %v3773
      %v3775 = vrot.slane %v205, %v3774
      %v3776 = vlaneseq
      %v3777 = vshrl.u32 %v3776, 7
      %v3778 = vsub.s32 0, %v3777
      %v3779 = vrot.slane %v206, %v3778
      %v3780 = vlaneseq
      %v3781 = vshrl.u32 %v3780, 7
      %v3782 = vsub.s32 0, %v3781
      %v3783 = vrot.slane %v207, %v3782
      %v3784 = vlaneseq
      %v3785 = vshrl.u32 %v3784, 7
      %v3786 = vsub.s32 0, %v3785
      %v3787 = vrot.slane %v208, %v3786
      %v3788 = vmul.f32 %v172, %v3775
      %v3789 = vmul.f32 %v173, %v3779
      %v3790 = vmul.f32 %v174, %v3783
      %v3791 = vmul.f32 %v175, %v3787
      %v3792 = vmul.f32 %v178, %v3775
      %v3793 = vmul.f32 %v179, %v3779
      %v3794 = vmul.f32 %v180, %v3783
      %v3795 = vmul.f32 %v181, %v3787
      %v3796 = vmul.f32 %v184, %v3775
      %v3797 = vmul.f32 %v185, %v3779
      %v3798 = vmul.f32 %v186, %v3783
      %v3799 = vmul.f32 %v187, %v3787
      %v3812 = vrot.slane %v3788, 4
      %v3813 = vrot.slane %v3792, 4
      %v3814 = vsel %vm3330, %v3812, %v3813
      %v3815 = vrot.slane %v3789, 4
      %v3816 = vrot.slane %v3793, 4
      %v3817 = vsel %vm3330, %v3815, %v3816
      %v3818 = vrot.slane %v3790, 4
      %v3819 = vrot.slane %v3794, 4
      %v3820 = vsel %vm3330, %v3818, %v3819
      %v3821 = vrot.slane %v3791, 4
      %v3822 = vrot.slane %v3795, 4
      %v3823 = vsel %vm3330, %v3821, %v3822
      %v3824 = vrot.slane %v3796, 4
      %v3825 = vsel %vm3330, %v3813, %v3824
      %v3826 = vrot.slane %v3797, 4
      %v3827 = vsel %vm3330, %v3816, %v3826
      %v3828 = vrot.slane %v3798, 4
      %v3829 = vsel %vm3330, %v3819, %v3828
      %v3830 = vrot.slane %v3799, 4
      %v3831 = vsel %vm3330, %v3822, %v3830
      %v3840 = vadd.f32 %v3764, %v3814
      %v3841 = vadd.f32 %v3765, %v3817
      %v3842 = vadd.f32 %v3766, %v3820
      %v3843 = vadd.f32 %v3767, %v3823
      %v3844 = vadd.f32 %v3768, %v3825
      %v3845 = vadd.f32 %v3769, %v3827
      %v3846 = vadd.f32 %v3770, %v3829
      %v3847 = vadd.f32 %v3771, %v3831
      %v3848 = vlaneseq
      %v3849 = vshrl.u32 %v3848, 7
      %v3850 = vsub.s32 1, %v3849
      %v3851 = vrot.slane %v205, %v3850
      %v3852 = vlaneseq
      %v3853 = vshrl.u32 %v3852, 7
      %v3854 = vsub.s32 1, %v3853
      %v3855 = vrot.slane %v206, %v3854
      %v3856 = vlaneseq
      %v3857 = vshrl.u32 %v3856, 7
      %v3858 = vsub.s32 1, %v3857
      %v3859 = vrot.slane %v207, %v3858
      %v3860 = vlaneseq
      %v3861 = vshrl.u32 %v3860, 7
      %v3862 = vsub.s32 1, %v3861
      %v3863 = vrot.slane %v208, %v3862
      %3868 = vrot.lane.b32.xlu0 %v3851, 32
      %v3869 = vpop.permute.xlu0 %3868
      %3870 = vrot.lane.b32.xlu0 %v3855, 32
      %v3871 = vpop.permute.xlu0 %3870
      %3872 = vrot.lane.b32.xlu0 %v3859, 32
      %v3873 = vpop.permute.xlu0 %3872
      %3874 = vrot.lane.b32.xlu0 %v3863, 32
      %v3875 = vpop.permute.xlu0 %3874
      %v3876 = vsel %vm299, %v3869, %v3871
      %v3877 = vsel %vm299, %v3871, %v3873
      %v3878 = vsel %vm299, %v3873, %v3875
      %v3884 = vmul.f32 %v172, %v3869
      %v3885 = vmul.f32 %v173, %v3876
      %v3886 = vmul.f32 %v174, %v3877
      %v3887 = vmul.f32 %v175, %v3878
      %v3888 = vmul.f32 %v176, %v3875
      %v3889 = vmul.f32 %v178, %v3869
      %v3890 = vmul.f32 %v179, %v3876
      %v3891 = vmul.f32 %v180, %v3877
      %v3892 = vmul.f32 %v181, %v3878
      %v3893 = vmul.f32 %v182, %v3875
      %v3894 = vmul.f32 %v184, %v3869
      %v3895 = vmul.f32 %v185, %v3876
      %v3896 = vmul.f32 %v186, %v3877
      %v3897 = vmul.f32 %v187, %v3878
      %v3898 = vmul.f32 %v188, %v3875
      %v3914 = vrot.slane %v3884, 4
      %v3915 = vrot.slane %v3889, 4
      %v3916 = vsel %vm3330, %v3914, %v3915
      %v3917 = vrot.slane %v3885, 4
      %v3918 = vrot.slane %v3890, 4
      %v3919 = vsel %vm3330, %v3917, %v3918
      %v3920 = vrot.slane %v3886, 4
      %v3921 = vrot.slane %v3891, 4
      %v3922 = vsel %vm3330, %v3920, %v3921
      %v3923 = vrot.slane %v3887, 4
      %v3924 = vrot.slane %v3892, 4
      %v3925 = vsel %vm3330, %v3923, %v3924
      %v3926 = vrot.slane %v3888, 4
      %v3927 = vrot.slane %v3893, 4
      %v3928 = vsel %vm3330, %v3926, %v3927
      %v3929 = vrot.slane %v3894, 4
      %v3930 = vsel %vm3330, %v3915, %v3929
      %v3931 = vrot.slane %v3895, 4
      %v3932 = vsel %vm3330, %v3918, %v3931
      %v3933 = vrot.slane %v3896, 4
      %v3934 = vsel %vm3330, %v3921, %v3933
      %v3935 = vrot.slane %v3897, 4
      %v3936 = vsel %vm3330, %v3924, %v3935
      %v3937 = vrot.slane %v3898, 4
      %v3938 = vsel %vm3330, %v3927, %v3937
      %3939 = vrot.lane.b32.xlu0 %v3916, 96
      %v3940 = vpop.permute.xlu0 %3939
      %3941 = vrot.lane.b32.xlu0 %v3919, 96
      %v3942 = vpop.permute.xlu0 %3941
      %3943 = vrot.lane.b32.xlu0 %v3922, 96
      %v3944 = vpop.permute.xlu0 %3943
      %3945 = vrot.lane.b32.xlu0 %v3925, 96
      %v3946 = vpop.permute.xlu0 %3945
      %3947 = vrot.lane.b32.xlu0 %v3928, 96
      %v3948 = vpop.permute.xlu0 %3947
      %3949 = vrot.lane.b32.xlu0 %v3930, 96
      %v3950 = vpop.permute.xlu0 %3949
      %3951 = vrot.lane.b32.xlu0 %v3932, 96
      %v3952 = vpop.permute.xlu0 %3951
      %3953 = vrot.lane.b32.xlu0 %v3934, 96
      %v3954 = vpop.permute.xlu0 %3953
      %3955 = vrot.lane.b32.xlu0 %v3936, 96
      %v3956 = vpop.permute.xlu0 %3955
      %3957 = vrot.lane.b32.xlu0 %v3938, 96
      %v3958 = vpop.permute.xlu0 %3957
      %v3959 = vsel %vm348, %v3940, %v3942
      %v3960 = vsel %vm348, %v3942, %v3944
      %v3961 = vsel %vm348, %v3944, %v3946
      %v3962 = vsel %vm348, %v3946, %v3948
      %v3963 = vsel %vm348, %v3950, %v3952
      %v3964 = vsel %vm348, %v3952, %v3954
      %v3965 = vsel %vm348, %v3954, %v3956
      %v3966 = vsel %vm348, %v3956, %v3958
      %v3975 = vadd.f32 %v3840, %v3959
      %v3976 = vadd.f32 %v3841, %v3960
      %v3977 = vadd.f32 %v3842, %v3961
      %v3978 = vadd.f32 %v3843, %v3962
      %v3979 = vadd.f32 %v3844, %v3963
      %v3980 = vadd.f32 %v3845, %v3964
      %v3981 = vadd.f32 %v3846, %v3965
      %v3982 = vadd.f32 %v3847, %v3966
      %v3983 = vlaneseq
      %v3984 = vshrl.u32 %v3983, 7
      %v3985 = vsub.s32 2, %v3984
      %v3986 = vrot.slane %v205, %v3985
      %v3987 = vlaneseq
      %v3988 = vshrl.u32 %v3987, 7
      %v3989 = vsub.s32 2, %v3988
      %v3990 = vrot.slane %v206, %v3989
      %v3991 = vlaneseq
      %v3992 = vshrl.u32 %v3991, 7
      %v3993 = vsub.s32 2, %v3992
      %v3994 = vrot.slane %v207, %v3993
      %v3995 = vlaneseq
      %v3996 = vshrl.u32 %v3995, 7
      %v3997 = vsub.s32 2, %v3996
      %v3998 = vrot.slane %v208, %v3997
      %4003 = vrot.lane.b32.xlu0 %v3986, 64
      %v4004 = vpop.permute.xlu0 %4003
      %4005 = vrot.lane.b32.xlu0 %v3990, 64
      %v4006 = vpop.permute.xlu0 %4005
      %4007 = vrot.lane.b32.xlu0 %v3994, 64
      %v4008 = vpop.permute.xlu0 %4007
      %4009 = vrot.lane.b32.xlu0 %v3998, 64
      %v4010 = vpop.permute.xlu0 %4009
      %v4011 = vsel %vm401, %v4004, %v4006
      %v4012 = vsel %vm401, %v4006, %v4008
      %v4013 = vsel %vm401, %v4008, %v4010
      %v4019 = vmul.f32 %v172, %v4004
      %v4020 = vmul.f32 %v173, %v4011
      %v4021 = vmul.f32 %v174, %v4012
      %v4022 = vmul.f32 %v175, %v4013
      %v4023 = vmul.f32 %v176, %v4010
      %v4024 = vmul.f32 %v178, %v4004
      %v4025 = vmul.f32 %v179, %v4011
      %v4026 = vmul.f32 %v180, %v4012
      %v4027 = vmul.f32 %v181, %v4013
      %v4028 = vmul.f32 %v182, %v4010
      %v4029 = vmul.f32 %v184, %v4004
      %v4030 = vmul.f32 %v185, %v4011
      %v4031 = vmul.f32 %v186, %v4012
      %v4032 = vmul.f32 %v187, %v4013
      %v4033 = vmul.f32 %v188, %v4010
      %v4049 = vrot.slane %v4019, 4
      %v4050 = vrot.slane %v4024, 4
      %v4051 = vsel %vm3330, %v4049, %v4050
      %v4052 = vrot.slane %v4020, 4
      %v4053 = vrot.slane %v4025, 4
      %v4054 = vsel %vm3330, %v4052, %v4053
      %v4055 = vrot.slane %v4021, 4
      %v4056 = vrot.slane %v4026, 4
      %v4057 = vsel %vm3330, %v4055, %v4056
      %v4058 = vrot.slane %v4022, 4
      %v4059 = vrot.slane %v4027, 4
      %v4060 = vsel %vm3330, %v4058, %v4059
      %v4061 = vrot.slane %v4023, 4
      %v4062 = vrot.slane %v4028, 4
      %v4063 = vsel %vm3330, %v4061, %v4062
      %v4064 = vrot.slane %v4029, 4
      %v4065 = vsel %vm3330, %v4050, %v4064
      %v4066 = vrot.slane %v4030, 4
      %v4067 = vsel %vm3330, %v4053, %v4066
      %v4068 = vrot.slane %v4031, 4
      %v4069 = vsel %vm3330, %v4056, %v4068
      %v4070 = vrot.slane %v4032, 4
      %v4071 = vsel %vm3330, %v4059, %v4070
      %v4072 = vrot.slane %v4033, 4
      %v4073 = vsel %vm3330, %v4062, %v4072
      %4074 = vrot.lane.b32.xlu0 %v4051, 64
      %v4075 = vpop.permute.xlu0 %4074
      %4076 = vrot.lane.b32.xlu0 %v4054, 64
      %v4077 = vpop.permute.xlu0 %4076
      %4078 = vrot.lane.b32.xlu0 %v4057, 64
      %v4079 = vpop.permute.xlu0 %4078
      %4080 = vrot.lane.b32.xlu0 %v4060, 64
      %v4081 = vpop.permute.xlu0 %4080
      %4082 = vrot.lane.b32.xlu0 %v4063, 64
      %v4083 = vpop.permute.xlu0 %4082
      %4084 = vrot.lane.b32.xlu0 %v4065, 64
      %v4085 = vpop.permute.xlu0 %4084
      %4086 = vrot.lane.b32.xlu0 %v4067, 64
      %v4087 = vpop.permute.xlu0 %4086
      %4088 = vrot.lane.b32.xlu0 %v4069, 64
      %v4089 = vpop.permute.xlu0 %4088
      %4090 = vrot.lane.b32.xlu0 %v4071, 64
      %v4091 = vpop.permute.xlu0 %4090
      %4092 = vrot.lane.b32.xlu0 %v4073, 64
      %v4093 = vpop.permute.xlu0 %4092
      %v4094 = vsel %vm401, %v4075, %v4077
      %v4095 = vsel %vm401, %v4077, %v4079
      %v4096 = vsel %vm401, %v4079, %v4081
      %v4097 = vsel %vm401, %v4081, %v4083
      %v4098 = vsel %vm401, %v4085, %v4087
      %v4099 = vsel %vm401, %v4087, %v4089
      %v4100 = vsel %vm401, %v4089, %v4091
      %v4101 = vsel %vm401, %v4091, %v4093
      %v4110 = vadd.f32 %v3975, %v4094
      %v4111 = vadd.f32 %v3976, %v4095
      %v4112 = vadd.f32 %v3977, %v4096
      %v4113 = vadd.f32 %v3978, %v4097
      %v4114 = vadd.f32 %v3979, %v4098
      %v4115 = vadd.f32 %v3980, %v4099
      %v4116 = vadd.f32 %v3981, %v4100
      %v4117 = vadd.f32 %v3982, %v4101
      %v4118 = vlaneseq
      %v4119 = vshrl.u32 %v4118, 7
      %v4120 = vsub.s32 3, %v4119
      %v4121 = vrot.slane %v205, %v4120
      %v4122 = vlaneseq
      %v4123 = vshrl.u32 %v4122, 7
      %v4124 = vsub.s32 3, %v4123
      %v4125 = vrot.slane %v206, %v4124
      %v4126 = vlaneseq
      %v4127 = vshrl.u32 %v4126, 7
      %v4128 = vsub.s32 3, %v4127
      %v4129 = vrot.slane %v207, %v4128
      %v4130 = vlaneseq
      %v4131 = vshrl.u32 %v4130, 7
      %v4132 = vsub.s32 3, %v4131
      %v4133 = vrot.slane %v208, %v4132
      %v4134 = vmul.f32 %v171, %v4121
      %v4135 = vmul.f32 %v172, %v4125
      %v4136 = vmul.f32 %v173, %v4129
      %v4137 = vmul.f32 %v174, %v4133
      %v4138 = vmul.f32 %v177, %v4121
      %v4139 = vmul.f32 %v178, %v4125
      %v4140 = vmul.f32 %v179, %v4129
      %v4141 = vmul.f32 %v180, %v4133
      %v4142 = vmul.f32 %v183, %v4121
      %v4143 = vmul.f32 %v184, %v4125
      %v4144 = vmul.f32 %v185, %v4129
      %v4145 = vmul.f32 %v186, %v4133
      %vm4158 = vcmask 1042432
      %v4159 = vrot.slane %v4134, 5
      %v4160 = vrot.slane %v4138, 5
      %v4161 = vsel %vm4158, %v4159, %v4160
      %v4162 = vrot.slane %v4135, 5
      %v4163 = vrot.slane %v4139, 5
      %v4164 = vsel %vm4158, %v4162, %v4163
      %v4165 = vrot.slane %v4136, 5
      %v4166 = vrot.slane %v4140, 5
      %v4167 = vsel %vm4158, %v4165, %v4166
      %v4168 = vrot.slane %v4137, 5
      %v4169 = vrot.slane %v4141, 5
      %v4170 = vsel %vm4158, %v4168, %v4169
      %v4171 = vrot.slane %v4142, 5
      %v4172 = vsel %vm4158, %v4160, %v4171
      %v4173 = vrot.slane %v4143, 5
      %v4174 = vsel %vm4158, %v4163, %v4173
      %v4175 = vrot.slane %v4144, 5
      %v4176 = vsel %vm4158, %v4166, %v4175
      %v4177 = vrot.slane %v4145, 5
      %v4178 = vsel %vm4158, %v4169, %v4177
      %v4187 = vadd.f32 %v4110, %v4161
      %v4188 = vadd.f32 %v4111, %v4164
      %v4189 = vadd.f32 %v4112, %v4167
      %v4190 = vadd.f32 %v4113, %v4170
      %v4191 = vadd.f32 %v4114, %v4172
      %v4192 = vadd.f32 %v4115, %v4174
      %v4193 = vadd.f32 %v4116, %v4176
      %v4194 = vadd.f32 %v4117, %v4178
      %v4195 = vlaneseq
      %v4196 = vshrl.u32 %v4195, 7
      %v4197 = vsub.s32 4, %v4196
      %v4198 = vrot.slane %v205, %v4197
      %v4199 = vlaneseq
      %v4200 = vshrl.u32 %v4199, 7
      %v4201 = vsub.s32 4, %v4200
      %v4202 = vrot.slane %v206, %v4201
      %v4203 = vlaneseq
      %v4204 = vshrl.u32 %v4203, 7
      %v4205 = vsub.s32 4, %v4204
      %v4206 = vrot.slane %v207, %v4205
      %v4207 = vlaneseq
      %v4208 = vshrl.u32 %v4207, 7
      %v4209 = vsub.s32 4, %v4208
      %v4210 = vrot.slane %v208, %v4209
      %4215 = vrot.lane.b32.xlu0 %v4198, 32
      %v4216 = vpop.permute.xlu0 %4215
      %4217 = vrot.lane.b32.xlu0 %v4202, 32
      %v4218 = vpop.permute.xlu0 %4217
      %4219 = vrot.lane.b32.xlu0 %v4206, 32
      %v4220 = vpop.permute.xlu0 %4219
      %4221 = vrot.lane.b32.xlu0 %v4210, 32
      %v4222 = vpop.permute.xlu0 %4221
      %v4223 = vsel %vm299, %v4216, %v4218
      %v4224 = vsel %vm299, %v4218, %v4220
      %v4225 = vsel %vm299, %v4220, %v4222
      %v4231 = vmul.f32 %v171, %v4216
      %v4232 = vmul.f32 %v172, %v4223
      %v4233 = vmul.f32 %v173, %v4224
      %v4234 = vmul.f32 %v174, %v4225
      %v4235 = vmul.f32 %v175, %v4222
      %v4236 = vmul.f32 %v177, %v4216
      %v4237 = vmul.f32 %v178, %v4223
      %v4238 = vmul.f32 %v179, %v4224
      %v4239 = vmul.f32 %v180, %v4225
      %v4240 = vmul.f32 %v181, %v4222
      %v4241 = vmul.f32 %v183, %v4216
      %v4242 = vmul.f32 %v184, %v4223
      %v4243 = vmul.f32 %v185, %v4224
      %v4244 = vmul.f32 %v186, %v4225
      %v4245 = vmul.f32 %v187, %v4222
      %v4261 = vrot.slane %v4231, 5
      %v4262 = vrot.slane %v4236, 5
      %v4263 = vsel %vm4158, %v4261, %v4262
      %v4264 = vrot.slane %v4232, 5
      %v4265 = vrot.slane %v4237, 5
      %v4266 = vsel %vm4158, %v4264, %v4265
      %v4267 = vrot.slane %v4233, 5
      %v4268 = vrot.slane %v4238, 5
      %v4269 = vsel %vm4158, %v4267, %v4268
      %v4270 = vrot.slane %v4234, 5
      %v4271 = vrot.slane %v4239, 5
      %v4272 = vsel %vm4158, %v4270, %v4271
      %v4273 = vrot.slane %v4235, 5
      %v4274 = vrot.slane %v4240, 5
      %v4275 = vsel %vm4158, %v4273, %v4274
      %v4276 = vrot.slane %v4241, 5
      %v4277 = vsel %vm4158, %v4262, %v4276
      %v4278 = vrot.slane %v4242, 5
      %v4279 = vsel %vm4158, %v4265, %v4278
      %v4280 = vrot.slane %v4243, 5
      %v4281 = vsel %vm4158, %v4268, %v4280
      %v4282 = vrot.slane %v4244, 5
      %v4283 = vsel %vm4158, %v4271, %v4282
      %v4284 = vrot.slane %v4245, 5
      %v4285 = vsel %vm4158, %v4274, %v4284
      %4286 = vrot.lane.b32.xlu0 %v4263, 96
      %v4287 = vpop.permute.xlu0 %4286
      %4288 = vrot.lane.b32.xlu0 %v4266, 96
      %v4289 = vpop.permute.xlu0 %4288
      %4290 = vrot.lane.b32.xlu0 %v4269, 96
      %v4291 = vpop.permute.xlu0 %4290
      %4292 = vrot.lane.b32.xlu0 %v4272, 96
      %v4293 = vpop.permute.xlu0 %4292
      %4294 = vrot.lane.b32.xlu0 %v4275, 96
      %v4295 = vpop.permute.xlu0 %4294
      %4296 = vrot.lane.b32.xlu0 %v4277, 96
      %v4297 = vpop.permute.xlu0 %4296
      %4298 = vrot.lane.b32.xlu0 %v4279, 96
      %v4299 = vpop.permute.xlu0 %4298
      %4300 = vrot.lane.b32.xlu0 %v4281, 96
      %v4301 = vpop.permute.xlu0 %4300
      %4302 = vrot.lane.b32.xlu0 %v4283, 96
      %v4303 = vpop.permute.xlu0 %4302
      %4304 = vrot.lane.b32.xlu0 %v4285, 96
      %v4305 = vpop.permute.xlu0 %4304
      %v4306 = vsel %vm348, %v4287, %v4289
      %v4307 = vsel %vm348, %v4289, %v4291
      %v4308 = vsel %vm348, %v4291, %v4293
      %v4309 = vsel %vm348, %v4293, %v4295
      %v4310 = vsel %vm348, %v4297, %v4299
      %v4311 = vsel %vm348, %v4299, %v4301
      %v4312 = vsel %vm348, %v4301, %v4303
      %v4313 = vsel %vm348, %v4303, %v4305
      %v4322 = vadd.f32 %v4187, %v4306
      %v4323 = vadd.f32 %v4188, %v4307
      %v4324 = vadd.f32 %v4189, %v4308
      %v4325 = vadd.f32 %v4190, %v4309
      %v4326 = vadd.f32 %v4191, %v4310
      %v4327 = vadd.f32 %v4192, %v4311
      %v4328 = vadd.f32 %v4193, %v4312
      %v4329 = vadd.f32 %v4194, %v4313
      %v4330 = vlaneseq
      %v4331 = vshrl.u32 %v4330, 7
      %v4332 = vsub.s32 5, %v4331
      %v4333 = vrot.slane %v205, %v4332
      %v4334 = vlaneseq
      %v4335 = vshrl.u32 %v4334, 7
      %v4336 = vsub.s32 5, %v4335
      %v4337 = vrot.slane %v206, %v4336
      %v4338 = vlaneseq
      %v4339 = vshrl.u32 %v4338, 7
      %v4340 = vsub.s32 5, %v4339
      %v4341 = vrot.slane %v207, %v4340
      %v4342 = vlaneseq
      %v4343 = vshrl.u32 %v4342, 7
      %v4344 = vsub.s32 5, %v4343
      %v4345 = vrot.slane %v208, %v4344
      %4350 = vrot.lane.b32.xlu0 %v4333, 64
      %v4351 = vpop.permute.xlu0 %4350
      %4352 = vrot.lane.b32.xlu0 %v4337, 64
      %v4353 = vpop.permute.xlu0 %4352
      %4354 = vrot.lane.b32.xlu0 %v4341, 64
      %v4355 = vpop.permute.xlu0 %4354
      %4356 = vrot.lane.b32.xlu0 %v4345, 64
      %v4357 = vpop.permute.xlu0 %4356
      %v4358 = vsel %vm401, %v4351, %v4353
      %v4359 = vsel %vm401, %v4353, %v4355
      %v4360 = vsel %vm401, %v4355, %v4357
      %v4366 = vmul.f32 %v171, %v4351
      %v4367 = vmul.f32 %v172, %v4358
      %v4368 = vmul.f32 %v173, %v4359
      %v4369 = vmul.f32 %v174, %v4360
      %v4370 = vmul.f32 %v175, %v4357
      %v4371 = vmul.f32 %v177, %v4351
      %v4372 = vmul.f32 %v178, %v4358
      %v4373 = vmul.f32 %v179, %v4359
      %v4374 = vmul.f32 %v180, %v4360
      %v4375 = vmul.f32 %v181, %v4357
      %v4376 = vmul.f32 %v183, %v4351
      %v4377 = vmul.f32 %v184, %v4358
      %v4378 = vmul.f32 %v185, %v4359
      %v4379 = vmul.f32 %v186, %v4360
      %v4380 = vmul.f32 %v187, %v4357
      %v4396 = vrot.slane %v4366, 5
      %v4397 = vrot.slane %v4371, 5
      %v4398 = vsel %vm4158, %v4396, %v4397
      %v4399 = vrot.slane %v4367, 5
      %v4400 = vrot.slane %v4372, 5
      %v4401 = vsel %vm4158, %v4399, %v4400
      %v4402 = vrot.slane %v4368, 5
      %v4403 = vrot.slane %v4373, 5
      %v4404 = vsel %vm4158, %v4402, %v4403
      %v4405 = vrot.slane %v4369, 5
      %v4406 = vrot.slane %v4374, 5
      %v4407 = vsel %vm4158, %v4405, %v4406
      %v4408 = vrot.slane %v4370, 5
      %v4409 = vrot.slane %v4375, 5
      %v4410 = vsel %vm4158, %v4408, %v4409
      %v4411 = vrot.slane %v4376, 5
      %v4412 = vsel %vm4158, %v4397, %v4411
      %v4413 = vrot.slane %v4377, 5
      %v4414 = vsel %vm4158, %v4400, %v4413
      %v4415 = vrot.slane %v4378, 5
      %v4416 = vsel %vm4158, %v4403, %v4415
      %v4417 = vrot.slane %v4379, 5
      %v4418 = vsel %vm4158, %v4406, %v4417
      %v4419 = vrot.slane %v4380, 5
      %v4420 = vsel %vm4158, %v4409, %v4419
      %4421 = vrot.lane.b32.xlu0 %v4398, 64
      %v4422 = vpop.permute.xlu0 %4421
      %4423 = vrot.lane.b32.xlu0 %v4401, 64
      %v4424 = vpop.permute.xlu0 %4423
      %4425 = vrot.lane.b32.xlu0 %v4404, 64
      %v4426 = vpop.permute.xlu0 %4425
      %4427 = vrot.lane.b32.xlu0 %v4407, 64
      %v4428 = vpop.permute.xlu0 %4427
      %4429 = vrot.lane.b32.xlu0 %v4410, 64
      %v4430 = vpop.permute.xlu0 %4429
      %4431 = vrot.lane.b32.xlu0 %v4412, 64
      %v4432 = vpop.permute.xlu0 %4431
      %4433 = vrot.lane.b32.xlu0 %v4414, 64
      %v4434 = vpop.permute.xlu0 %4433
      %4435 = vrot.lane.b32.xlu0 %v4416, 64
      %v4436 = vpop.permute.xlu0 %4435
      %4437 = vrot.lane.b32.xlu0 %v4418, 64
      %v4438 = vpop.permute.xlu0 %4437
      %4439 = vrot.lane.b32.xlu0 %v4420, 64
      %v4440 = vpop.permute.xlu0 %4439
      %v4441 = vsel %vm401, %v4422, %v4424
      %v4442 = vsel %vm401, %v4424, %v4426
      %v4443 = vsel %vm401, %v4426, %v4428
      %v4444 = vsel %vm401, %v4428, %v4430
      %v4445 = vsel %vm401, %v4432, %v4434
      %v4446 = vsel %vm401, %v4434, %v4436
      %v4447 = vsel %vm401, %v4436, %v4438
      %v4448 = vsel %vm401, %v4438, %v4440
      %v4457 = vadd.f32 %v4322, %v4441
      %v4458 = vadd.f32 %v4323, %v4442
      %v4459 = vadd.f32 %v4324, %v4443
      %v4460 = vadd.f32 %v4325, %v4444
      %v4461 = vadd.f32 %v4326, %v4445
      %v4462 = vadd.f32 %v4327, %v4446
      %v4463 = vadd.f32 %v4328, %v4447
      %v4464 = vadd.f32 %v4329, %v4448
      %v4465 = vlaneseq
      %v4466 = vshrl.u32 %v4465, 7
      %v4467 = vsub.s32 6, %v4466
      %v4468 = vrot.slane %v205, %v4467
      %v4469 = vlaneseq
      %v4470 = vshrl.u32 %v4469, 7
      %v4471 = vsub.s32 6, %v4470
      %v4472 = vrot.slane %v206, %v4471
      %v4473 = vlaneseq
      %v4474 = vshrl.u32 %v4473, 7
      %v4475 = vsub.s32 6, %v4474
      %v4476 = vrot.slane %v207, %v4475
      %v4477 = vlaneseq
      %v4478 = vshrl.u32 %v4477, 7
      %v4479 = vsub.s32 6, %v4478
      %v4480 = vrot.slane %v208, %v4479
      %4485 = vrot.lane.b32.xlu0 %v4468, 96
      %v4486 = vpop.permute.xlu0 %4485
      %4487 = vrot.lane.b32.xlu0 %v4472, 96
      %v4488 = vpop.permute.xlu0 %4487
      %4489 = vrot.lane.b32.xlu0 %v4476, 96
      %v4490 = vpop.permute.xlu0 %4489
      %4491 = vrot.lane.b32.xlu0 %v4480, 96
      %v4492 = vpop.permute.xlu0 %4491
      %v4493 = vsel %vm348, %v4486, %v4488
      %v4494 = vsel %vm348, %v4488, %v4490
      %v4495 = vsel %vm348, %v4490, %v4492
      %v4501 = vmul.f32 %v171, %v4486
      %v4502 = vmul.f32 %v172, %v4493
      %v4503 = vmul.f32 %v173, %v4494
      %v4504 = vmul.f32 %v174, %v4495
      %v4505 = vmul.f32 %v175, %v4492
      %v4506 = vmul.f32 %v177, %v4486
      %v4507 = vmul.f32 %v178, %v4493
      %v4508 = vmul.f32 %v179, %v4494
      %v4509 = vmul.f32 %v180, %v4495
      %v4510 = vmul.f32 %v181, %v4492
      %v4511 = vmul.f32 %v183, %v4486
      %v4512 = vmul.f32 %v184, %v4493
      %v4513 = vmul.f32 %v185, %v4494
      %v4514 = vmul.f32 %v186, %v4495
      %v4515 = vmul.f32 %v187, %v4492
      %v4531 = vrot.slane %v4501, 5
      %v4532 = vrot.slane %v4506, 5
      %v4533 = vsel %vm4158, %v4531, %v4532
      %v4534 = vrot.slane %v4502, 5
      %v4535 = vrot.slane %v4507, 5
      %v4536 = vsel %vm4158, %v4534, %v4535
      %v4537 = vrot.slane %v4503, 5
      %v4538 = vrot.slane %v4508, 5
      %v4539 = vsel %vm4158, %v4537, %v4538
      %v4540 = vrot.slane %v4504, 5
      %v4541 = vrot.slane %v4509, 5
      %v4542 = vsel %vm4158, %v4540, %v4541
      %v4543 = vrot.slane %v4505, 5
      %v4544 = vrot.slane %v4510, 5
      %v4545 = vsel %vm4158, %v4543, %v4544
      %v4546 = vrot.slane %v4511, 5
      %v4547 = vsel %vm4158, %v4532, %v4546
      %v4548 = vrot.slane %v4512, 5
      %v4549 = vsel %vm4158, %v4535, %v4548
      %v4550 = vrot.slane %v4513, 5
      %v4551 = vsel %vm4158, %v4538, %v4550
      %v4552 = vrot.slane %v4514, 5
      %v4553 = vsel %vm4158, %v4541, %v4552
      %v4554 = vrot.slane %v4515, 5
      %v4555 = vsel %vm4158, %v4544, %v4554
      %4556 = vrot.lane.b32.xlu0 %v4533, 32
      %v4557 = vpop.permute.xlu0 %4556
      %4558 = vrot.lane.b32.xlu0 %v4536, 32
      %v4559 = vpop.permute.xlu0 %4558
      %4560 = vrot.lane.b32.xlu0 %v4539, 32
      %v4561 = vpop.permute.xlu0 %4560
      %4562 = vrot.lane.b32.xlu0 %v4542, 32
      %v4563 = vpop.permute.xlu0 %4562
      %4564 = vrot.lane.b32.xlu0 %v4545, 32
      %v4565 = vpop.permute.xlu0 %4564
      %4566 = vrot.lane.b32.xlu0 %v4547, 32
      %v4567 = vpop.permute.xlu0 %4566
      %4568 = vrot.lane.b32.xlu0 %v4549, 32
      %v4569 = vpop.permute.xlu0 %4568
      %4570 = vrot.lane.b32.xlu0 %v4551, 32
      %v4571 = vpop.permute.xlu0 %4570
      %4572 = vrot.lane.b32.xlu0 %v4553, 32
      %v4573 = vpop.permute.xlu0 %4572
      %4574 = vrot.lane.b32.xlu0 %v4555, 32
      %v4575 = vpop.permute.xlu0 %4574
      %v4576 = vsel %vm299, %v4557, %v4559
      %v4577 = vsel %vm299, %v4559, %v4561
      %v4578 = vsel %vm299, %v4561, %v4563
      %v4579 = vsel %vm299, %v4563, %v4565
      %v4580 = vsel %vm299, %v4567, %v4569
      %v4581 = vsel %vm299, %v4569, %v4571
      %v4582 = vsel %vm299, %v4571, %v4573
      %v4583 = vsel %vm299, %v4573, %v4575
      %v4592 = vadd.f32 %v4457, %v4576
      %v4593 = vadd.f32 %v4458, %v4577
      %v4594 = vadd.f32 %v4459, %v4578
      %v4595 = vadd.f32 %v4460, %v4579
      %v4596 = vadd.f32 %v4461, %v4580
      %v4597 = vadd.f32 %v4462, %v4581
      %v4598 = vadd.f32 %v4463, %v4582
      %v4599 = vadd.f32 %v4464, %v4583
      %v4600 = vlaneseq
      %v4601 = vshrl.u32 %v4600, 7
      %v4602 = vsub.s32 7, %v4601
      %v4603 = vrot.slane %v205, %v4602
      %v4604 = vlaneseq
      %v4605 = vshrl.u32 %v4604, 7
      %v4606 = vsub.s32 7, %v4605
      %v4607 = vrot.slane %v206, %v4606
      %v4608 = vlaneseq
      %v4609 = vshrl.u32 %v4608, 7
      %v4610 = vsub.s32 7, %v4609
      %v4611 = vrot.slane %v207, %v4610
      %v4612 = vlaneseq
      %v4613 = vshrl.u32 %v4612, 7
      %v4614 = vsub.s32 7, %v4613
      %v4615 = vrot.slane %v208, %v4614
      %v4616 = vmul.f32 %v172, %v4603
      %v4617 = vmul.f32 %v173, %v4607
      %v4618 = vmul.f32 %v174, %v4611
      %v4619 = vmul.f32 %v175, %v4615
      %v4620 = vmul.f32 %v178, %v4603
      %v4621 = vmul.f32 %v179, %v4607
      %v4622 = vmul.f32 %v180, %v4611
      %v4623 = vmul.f32 %v181, %v4615
      %v4624 = vmul.f32 %v184, %v4603
      %v4625 = vmul.f32 %v185, %v4607
      %v4626 = vmul.f32 %v186, %v4611
      %v4627 = vmul.f32 %v187, %v4615
      %v4640 = vrot.slane %v4616, 5
      %v4641 = vrot.slane %v4620, 5
      %v4642 = vsel %vm4158, %v4640, %v4641
      %v4643 = vrot.slane %v4617, 5
      %v4644 = vrot.slane %v4621, 5
      %v4645 = vsel %vm4158, %v4643, %v4644
      %v4646 = vrot.slane %v4618, 5
      %v4647 = vrot.slane %v4622, 5
      %v4648 = vsel %vm4158, %v4646, %v4647
      %v4649 = vrot.slane %v4619, 5
      %v4650 = vrot.slane %v4623, 5
      %v4651 = vsel %vm4158, %v4649, %v4650
      %v4652 = vrot.slane %v4624, 5
      %v4653 = vsel %vm4158, %v4641, %v4652
      %v4654 = vrot.slane %v4625, 5
      %v4655 = vsel %vm4158, %v4644, %v4654
      %v4656 = vrot.slane %v4626, 5
      %v4657 = vsel %vm4158, %v4647, %v4656
      %v4658 = vrot.slane %v4627, 5
      %v4659 = vsel %vm4158, %v4650, %v4658
      %v4668 = vadd.f32 %v4592, %v4642
      %v4669 = vadd.f32 %v4593, %v4645
      %v4670 = vadd.f32 %v4594, %v4648
      %v4671 = vadd.f32 %v4595, %v4651
      %v4672 = vadd.f32 %v4596, %v4653
      %v4673 = vadd.f32 %v4597, %v4655
      %v4674 = vadd.f32 %v4598, %v4657
      %v4675 = vadd.f32 %v4599, %v4659
      %v4676 = vlaneseq
      %v4677 = vshrl.u32 %v4676, 7
      %v4678 = vsub.s32 0, %v4677
      %v4679 = vrot.slane %v209, %v4678
      %v4680 = vlaneseq
      %v4681 = vshrl.u32 %v4680, 7
      %v4682 = vsub.s32 0, %v4681
      %v4683 = vrot.slane %v210, %v4682
      %v4684 = vlaneseq
      %v4685 = vshrl.u32 %v4684, 7
      %v4686 = vsub.s32 0, %v4685
      %v4687 = vrot.slane %v211, %v4686
      %v4688 = vlaneseq
      %v4689 = vshrl.u32 %v4688, 7
      %v4690 = vsub.s32 0, %v4689
      %v4691 = vrot.slane %v212, %v4690
      %4696 = vrot.lane.b32.xlu0 %v4679, 32
      %v4697 = vpop.permute.xlu0 %4696
      %4698 = vrot.lane.b32.xlu0 %v4683, 32
      %v4699 = vpop.permute.xlu0 %4698
      %4700 = vrot.lane.b32.xlu0 %v4687, 32
      %v4701 = vpop.permute.xlu0 %4700
      %4702 = vrot.lane.b32.xlu0 %v4691, 32
      %v4703 = vpop.permute.xlu0 %4702
      %v4704 = vsel %vm299, %v4697, %v4699
      %v4705 = vsel %vm299, %v4699, %v4701
      %v4706 = vsel %vm299, %v4701, %v4703
      %v4712 = vmul.f32 %v172, %v4697
      %v4713 = vmul.f32 %v173, %v4704
      %v4714 = vmul.f32 %v174, %v4705
      %v4715 = vmul.f32 %v175, %v4706
      %v4716 = vmul.f32 %v176, %v4703
      %v4717 = vmul.f32 %v178, %v4697
      %v4718 = vmul.f32 %v179, %v4704
      %v4719 = vmul.f32 %v180, %v4705
      %v4720 = vmul.f32 %v181, %v4706
      %v4721 = vmul.f32 %v182, %v4703
      %v4722 = vmul.f32 %v184, %v4697
      %v4723 = vmul.f32 %v185, %v4704
      %v4724 = vmul.f32 %v186, %v4705
      %v4725 = vmul.f32 %v187, %v4706
      %v4726 = vmul.f32 %v188, %v4703
      %v4742 = vrot.slane %v4712, 5
      %v4743 = vrot.slane %v4717, 5
      %v4744 = vsel %vm4158, %v4742, %v4743
      %v4745 = vrot.slane %v4713, 5
      %v4746 = vrot.slane %v4718, 5
      %v4747 = vsel %vm4158, %v4745, %v4746
      %v4748 = vrot.slane %v4714, 5
      %v4749 = vrot.slane %v4719, 5
      %v4750 = vsel %vm4158, %v4748, %v4749
      %v4751 = vrot.slane %v4715, 5
      %v4752 = vrot.slane %v4720, 5
      %v4753 = vsel %vm4158, %v4751, %v4752
      %v4754 = vrot.slane %v4716, 5
      %v4755 = vrot.slane %v4721, 5
      %v4756 = vsel %vm4158, %v4754, %v4755
      %v4757 = vrot.slane %v4722, 5
      %v4758 = vsel %vm4158, %v4743, %v4757
      %v4759 = vrot.slane %v4723, 5
      %v4760 = vsel %vm4158, %v4746, %v4759
      %v4761 = vrot.slane %v4724, 5
      %v4762 = vsel %vm4158, %v4749, %v4761
      %v4763 = vrot.slane %v4725, 5
      %v4764 = vsel %vm4158, %v4752, %v4763
      %v4765 = vrot.slane %v4726, 5
      %v4766 = vsel %vm4158, %v4755, %v4765
      %4767 = vrot.lane.b32.xlu0 %v4744, 96
      %v4768 = vpop.permute.xlu0 %4767
      %4769 = vrot.lane.b32.xlu0 %v4747, 96
      %v4770 = vpop.permute.xlu0 %4769
      %4771 = vrot.lane.b32.xlu0 %v4750, 96
      %v4772 = vpop.permute.xlu0 %4771
      %4773 = vrot.lane.b32.xlu0 %v4753, 96
      %v4774 = vpop.permute.xlu0 %4773
      %4775 = vrot.lane.b32.xlu0 %v4756, 96
      %v4776 = vpop.permute.xlu0 %4775
      %4777 = vrot.lane.b32.xlu0 %v4758, 96
      %v4778 = vpop.permute.xlu0 %4777
      %4779 = vrot.lane.b32.xlu0 %v4760, 96
      %v4780 = vpop.permute.xlu0 %4779
      %4781 = vrot.lane.b32.xlu0 %v4762, 96
      %v4782 = vpop.permute.xlu0 %4781
      %4783 = vrot.lane.b32.xlu0 %v4764, 96
      %v4784 = vpop.permute.xlu0 %4783
      %4785 = vrot.lane.b32.xlu0 %v4766, 96
      %v4786 = vpop.permute.xlu0 %4785
      %v4787 = vsel %vm348, %v4768, %v4770
      %v4788 = vsel %vm348, %v4770, %v4772
      %v4789 = vsel %vm348, %v4772, %v4774
      %v4790 = vsel %vm348, %v4774, %v4776
      %v4791 = vsel %vm348, %v4778, %v4780
      %v4792 = vsel %vm348, %v4780, %v4782
      %v4793 = vsel %vm348, %v4782, %v4784
      %v4794 = vsel %vm348, %v4784, %v4786
      %v4803 = vadd.f32 %v4668, %v4787
      %v4804 = vadd.f32 %v4669, %v4788
      %v4805 = vadd.f32 %v4670, %v4789
      %v4806 = vadd.f32 %v4671, %v4790
      %v4807 = vadd.f32 %v4672, %v4791
      %v4808 = vadd.f32 %v4673, %v4792
      %v4809 = vadd.f32 %v4674, %v4793
      %v4810 = vadd.f32 %v4675, %v4794
      %v4811 = vlaneseq
      %v4812 = vshrl.u32 %v4811, 7
      %v4813 = vsub.s32 1, %v4812
      %v4814 = vrot.slane %v209, %v4813
      %v4815 = vlaneseq
      %v4816 = vshrl.u32 %v4815, 7
      %v4817 = vsub.s32 1, %v4816
      %v4818 = vrot.slane %v210, %v4817
      %v4819 = vlaneseq
      %v4820 = vshrl.u32 %v4819, 7
      %v4821 = vsub.s32 1, %v4820
      %v4822 = vrot.slane %v211, %v4821
      %v4823 = vlaneseq
      %v4824 = vshrl.u32 %v4823, 7
      %v4825 = vsub.s32 1, %v4824
      %v4826 = vrot.slane %v212, %v4825
      %4831 = vrot.lane.b32.xlu0 %v4814, 64
      %v4832 = vpop.permute.xlu0 %4831
      %4833 = vrot.lane.b32.xlu0 %v4818, 64
      %v4834 = vpop.permute.xlu0 %4833
      %4835 = vrot.lane.b32.xlu0 %v4822, 64
      %v4836 = vpop.permute.xlu0 %4835
      %4837 = vrot.lane.b32.xlu0 %v4826, 64
      %v4838 = vpop.permute.xlu0 %4837
      %v4839 = vsel %vm401, %v4832, %v4834
      %v4840 = vsel %vm401, %v4834, %v4836
      %v4841 = vsel %vm401, %v4836, %v4838
      %v4847 = vmul.f32 %v172, %v4832
      %v4848 = vmul.f32 %v173, %v4839
      %v4849 = vmul.f32 %v174, %v4840
      %v4850 = vmul.f32 %v175, %v4841
      %v4851 = vmul.f32 %v176, %v4838
      %v4852 = vmul.f32 %v178, %v4832
      %v4853 = vmul.f32 %v179, %v4839
      %v4854 = vmul.f32 %v180, %v4840
      %v4855 = vmul.f32 %v181, %v4841
      %v4856 = vmul.f32 %v182, %v4838
      %v4857 = vmul.f32 %v184, %v4832
      %v4858 = vmul.f32 %v185, %v4839
      %v4859 = vmul.f32 %v186, %v4840
      %v4860 = vmul.f32 %v187, %v4841
      %v4861 = vmul.f32 %v188, %v4838
      %v4877 = vrot.slane %v4847, 5
      %v4878 = vrot.slane %v4852, 5
      %v4879 = vsel %vm4158, %v4877, %v4878
      %v4880 = vrot.slane %v4848, 5
      %v4881 = vrot.slane %v4853, 5
      %v4882 = vsel %vm4158, %v4880, %v4881
      %v4883 = vrot.slane %v4849, 5
      %v4884 = vrot.slane %v4854, 5
      %v4885 = vsel %vm4158, %v4883, %v4884
      %v4886 = vrot.slane %v4850, 5
      %v4887 = vrot.slane %v4855, 5
      %v4888 = vsel %vm4158, %v4886, %v4887
      %v4889 = vrot.slane %v4851, 5
      %v4890 = vrot.slane %v4856, 5
      %v4891 = vsel %vm4158, %v4889, %v4890
      %v4892 = vrot.slane %v4857, 5
      %v4893 = vsel %vm4158, %v4878, %v4892
      %v4894 = vrot.slane %v4858, 5
      %v4895 = vsel %vm4158, %v4881, %v4894
      %v4896 = vrot.slane %v4859, 5
      %v4897 = vsel %vm4158, %v4884, %v4896
      %v4898 = vrot.slane %v4860, 5
      %v4899 = vsel %vm4158, %v4887, %v4898
      %v4900 = vrot.slane %v4861, 5
      %v4901 = vsel %vm4158, %v4890, %v4900
      %4902 = vrot.lane.b32.xlu0 %v4879, 64
      %v4903 = vpop.permute.xlu0 %4902
      %4904 = vrot.lane.b32.xlu0 %v4882, 64
      %v4905 = vpop.permute.xlu0 %4904
      %4906 = vrot.lane.b32.xlu0 %v4885, 64
      %v4907 = vpop.permute.xlu0 %4906
      %4908 = vrot.lane.b32.xlu0 %v4888, 64
      %v4909 = vpop.permute.xlu0 %4908
      %4910 = vrot.lane.b32.xlu0 %v4891, 64
      %v4911 = vpop.permute.xlu0 %4910
      %4912 = vrot.lane.b32.xlu0 %v4893, 64
      %v4913 = vpop.permute.xlu0 %4912
      %4914 = vrot.lane.b32.xlu0 %v4895, 64
      %v4915 = vpop.permute.xlu0 %4914
      %4916 = vrot.lane.b32.xlu0 %v4897, 64
      %v4917 = vpop.permute.xlu0 %4916
      %4918 = vrot.lane.b32.xlu0 %v4899, 64
      %v4919 = vpop.permute.xlu0 %4918
      %4920 = vrot.lane.b32.xlu0 %v4901, 64
      %v4921 = vpop.permute.xlu0 %4920
      %v4922 = vsel %vm401, %v4903, %v4905
      %v4923 = vsel %vm401, %v4905, %v4907
      %v4924 = vsel %vm401, %v4907, %v4909
      %v4925 = vsel %vm401, %v4909, %v4911
      %v4926 = vsel %vm401, %v4913, %v4915
      %v4927 = vsel %vm401, %v4915, %v4917
      %v4928 = vsel %vm401, %v4917, %v4919
      %v4929 = vsel %vm401, %v4919, %v4921
      %v4938 = vadd.f32 %v4803, %v4922
      %v4939 = vadd.f32 %v4804, %v4923
      %v4940 = vadd.f32 %v4805, %v4924
      %v4941 = vadd.f32 %v4806, %v4925
      %v4942 = vadd.f32 %v4807, %v4926
      %v4943 = vadd.f32 %v4808, %v4927
      %v4944 = vadd.f32 %v4809, %v4928
      %v4945 = vadd.f32 %v4810, %v4929
      %v4946 = vlaneseq
      %v4947 = vshrl.u32 %v4946, 7
      %v4948 = vsub.s32 2, %v4947
      %v4949 = vrot.slane %v209, %v4948
      %v4950 = vlaneseq
      %v4951 = vshrl.u32 %v4950, 7
      %v4952 = vsub.s32 2, %v4951
      %v4953 = vrot.slane %v210, %v4952
      %v4954 = vlaneseq
      %v4955 = vshrl.u32 %v4954, 7
      %v4956 = vsub.s32 2, %v4955
      %v4957 = vrot.slane %v211, %v4956
      %v4958 = vlaneseq
      %v4959 = vshrl.u32 %v4958, 7
      %v4960 = vsub.s32 2, %v4959
      %v4961 = vrot.slane %v212, %v4960
      %v4962 = vmul.f32 %v171, %v4949
      %v4963 = vmul.f32 %v172, %v4953
      %v4964 = vmul.f32 %v173, %v4957
      %v4965 = vmul.f32 %v174, %v4961
      %v4966 = vmul.f32 %v177, %v4949
      %v4967 = vmul.f32 %v178, %v4953
      %v4968 = vmul.f32 %v179, %v4957
      %v4969 = vmul.f32 %v180, %v4961
      %v4970 = vmul.f32 %v183, %v4949
      %v4971 = vmul.f32 %v184, %v4953
      %v4972 = vmul.f32 %v185, %v4957
      %v4973 = vmul.f32 %v186, %v4961
      %vm4986 = vcmask 1041408
      %v4987 = vrot.slane %v4962, 6
      %v4988 = vrot.slane %v4966, 6
      %v4989 = vsel %vm4986, %v4987, %v4988
      %v4990 = vrot.slane %v4963, 6
      %v4991 = vrot.slane %v4967, 6
      %v4992 = vsel %vm4986, %v4990, %v4991
      %v4993 = vrot.slane %v4964, 6
      %v4994 = vrot.slane %v4968, 6
      %v4995 = vsel %vm4986, %v4993, %v4994
      %v4996 = vrot.slane %v4965, 6
      %v4997 = vrot.slane %v4969, 6
      %v4998 = vsel %vm4986, %v4996, %v4997
      %v4999 = vrot.slane %v4970, 6
      %v5000 = vsel %vm4986, %v4988, %v4999
      %v5001 = vrot.slane %v4971, 6
      %v5002 = vsel %vm4986, %v4991, %v5001
      %v5003 = vrot.slane %v4972, 6
      %v5004 = vsel %vm4986, %v4994, %v5003
      %v5005 = vrot.slane %v4973, 6
      %v5006 = vsel %vm4986, %v4997, %v5005
      %v5015 = vadd.f32 %v4938, %v4989
      %v5016 = vadd.f32 %v4939, %v4992
      %v5017 = vadd.f32 %v4940, %v4995
      %v5018 = vadd.f32 %v4941, %v4998
      %v5019 = vadd.f32 %v4942, %v5000
      %v5020 = vadd.f32 %v4943, %v5002
      %v5021 = vadd.f32 %v4944, %v5004
      %v5022 = vadd.f32 %v4945, %v5006
      %v5023 = vlaneseq
      %v5024 = vshrl.u32 %v5023, 7
      %v5025 = vsub.s32 3, %v5024
      %v5026 = vrot.slane %v209, %v5025
      %v5027 = vlaneseq
      %v5028 = vshrl.u32 %v5027, 7
      %v5029 = vsub.s32 3, %v5028
      %v5030 = vrot.slane %v210, %v5029
      %v5031 = vlaneseq
      %v5032 = vshrl.u32 %v5031, 7
      %v5033 = vsub.s32 3, %v5032
      %v5034 = vrot.slane %v211, %v5033
      %v5035 = vlaneseq
      %v5036 = vshrl.u32 %v5035, 7
      %v5037 = vsub.s32 3, %v5036
      %v5038 = vrot.slane %v212, %v5037
      %5043 = vrot.lane.b32.xlu0 %v5026, 32
      %v5044 = vpop.permute.xlu0 %5043
      %5045 = vrot.lane.b32.xlu0 %v5030, 32
      %v5046 = vpop.permute.xlu0 %5045
      %5047 = vrot.lane.b32.xlu0 %v5034, 32
      %v5048 = vpop.permute.xlu0 %5047
      %5049 = vrot.lane.b32.xlu0 %v5038, 32
      %v5050 = vpop.permute.xlu0 %5049
      %v5051 = vsel %vm299, %v5044, %v5046
      %v5052 = vsel %vm299, %v5046, %v5048
      %v5053 = vsel %vm299, %v5048, %v5050
      %v5059 = vmul.f32 %v171, %v5044
      %v5060 = vmul.f32 %v172, %v5051
      %v5061 = vmul.f32 %v173, %v5052
      %v5062 = vmul.f32 %v174, %v5053
      %v5063 = vmul.f32 %v175, %v5050
      %v5064 = vmul.f32 %v177, %v5044
      %v5065 = vmul.f32 %v178, %v5051
      %v5066 = vmul.f32 %v179, %v5052
      %v5067 = vmul.f32 %v180, %v5053
      %v5068 = vmul.f32 %v181, %v5050
      %v5069 = vmul.f32 %v183, %v5044
      %v5070 = vmul.f32 %v184, %v5051
      %v5071 = vmul.f32 %v185, %v5052
      %v5072 = vmul.f32 %v186, %v5053
      %v5073 = vmul.f32 %v187, %v5050
      %v5089 = vrot.slane %v5059, 6
      %v5090 = vrot.slane %v5064, 6
      %v5091 = vsel %vm4986, %v5089, %v5090
      %v5092 = vrot.slane %v5060, 6
      %v5093 = vrot.slane %v5065, 6
      %v5094 = vsel %vm4986, %v5092, %v5093
      %v5095 = vrot.slane %v5061, 6
      %v5096 = vrot.slane %v5066, 6
      %v5097 = vsel %vm4986, %v5095, %v5096
      %v5098 = vrot.slane %v5062, 6
      %v5099 = vrot.slane %v5067, 6
      %v5100 = vsel %vm4986, %v5098, %v5099
      %v5101 = vrot.slane %v5063, 6
      %v5102 = vrot.slane %v5068, 6
      %v5103 = vsel %vm4986, %v5101, %v5102
      %v5104 = vrot.slane %v5069, 6
      %v5105 = vsel %vm4986, %v5090, %v5104
      %v5106 = vrot.slane %v5070, 6
      %v5107 = vsel %vm4986, %v5093, %v5106
      %v5108 = vrot.slane %v5071, 6
      %v5109 = vsel %vm4986, %v5096, %v5108
      %v5110 = vrot.slane %v5072, 6
      %v5111 = vsel %vm4986, %v5099, %v5110
      %v5112 = vrot.slane %v5073, 6
      %v5113 = vsel %vm4986, %v5102, %v5112
      %5114 = vrot.lane.b32.xlu0 %v5091, 96
      %v5115 = vpop.permute.xlu0 %5114
      %5116 = vrot.lane.b32.xlu0 %v5094, 96
      %v5117 = vpop.permute.xlu0 %5116
      %5118 = vrot.lane.b32.xlu0 %v5097, 96
      %v5119 = vpop.permute.xlu0 %5118
      %5120 = vrot.lane.b32.xlu0 %v5100, 96
      %v5121 = vpop.permute.xlu0 %5120
      %5122 = vrot.lane.b32.xlu0 %v5103, 96
      %v5123 = vpop.permute.xlu0 %5122
      %5124 = vrot.lane.b32.xlu0 %v5105, 96
      %v5125 = vpop.permute.xlu0 %5124
      %5126 = vrot.lane.b32.xlu0 %v5107, 96
      %v5127 = vpop.permute.xlu0 %5126
      %5128 = vrot.lane.b32.xlu0 %v5109, 96
      %v5129 = vpop.permute.xlu0 %5128
      %5130 = vrot.lane.b32.xlu0 %v5111, 96
      %v5131 = vpop.permute.xlu0 %5130
      %5132 = vrot.lane.b32.xlu0 %v5113, 96
      %v5133 = vpop.permute.xlu0 %5132
      %v5134 = vsel %vm348, %v5115, %v5117
      %v5135 = vsel %vm348, %v5117, %v5119
      %v5136 = vsel %vm348, %v5119, %v5121
      %v5137 = vsel %vm348, %v5121, %v5123
      %v5138 = vsel %vm348, %v5125, %v5127
      %v5139 = vsel %vm348, %v5127, %v5129
      %v5140 = vsel %vm348, %v5129, %v5131
      %v5141 = vsel %vm348, %v5131, %v5133
      %v5150 = vadd.f32 %v5015, %v5134
      %v5151 = vadd.f32 %v5016, %v5135
      %v5152 = vadd.f32 %v5017, %v5136
      %v5153 = vadd.f32 %v5018, %v5137
      %v5154 = vadd.f32 %v5019, %v5138
      %v5155 = vadd.f32 %v5020, %v5139
      %v5156 = vadd.f32 %v5021, %v5140
      %v5157 = vadd.f32 %v5022, %v5141
      %v5158 = vlaneseq
      %v5159 = vshrl.u32 %v5158, 7
      %v5160 = vsub.s32 4, %v5159
      %v5161 = vrot.slane %v209, %v5160
      %v5162 = vlaneseq
      %v5163 = vshrl.u32 %v5162, 7
      %v5164 = vsub.s32 4, %v5163
      %v5165 = vrot.slane %v210, %v5164
      %v5166 = vlaneseq
      %v5167 = vshrl.u32 %v5166, 7
      %v5168 = vsub.s32 4, %v5167
      %v5169 = vrot.slane %v211, %v5168
      %v5170 = vlaneseq
      %v5171 = vshrl.u32 %v5170, 7
      %v5172 = vsub.s32 4, %v5171
      %v5173 = vrot.slane %v212, %v5172
      %5178 = vrot.lane.b32.xlu0 %v5161, 64
      %v5179 = vpop.permute.xlu0 %5178
      %5180 = vrot.lane.b32.xlu0 %v5165, 64
      %v5181 = vpop.permute.xlu0 %5180
      %5182 = vrot.lane.b32.xlu0 %v5169, 64
      %v5183 = vpop.permute.xlu0 %5182
      %5184 = vrot.lane.b32.xlu0 %v5173, 64
      %v5185 = vpop.permute.xlu0 %5184
      %v5186 = vsel %vm401, %v5179, %v5181
      %v5187 = vsel %vm401, %v5181, %v5183
      %v5188 = vsel %vm401, %v5183, %v5185
      %v5194 = vmul.f32 %v171, %v5179
      %v5195 = vmul.f32 %v172, %v5186
      %v5196 = vmul.f32 %v173, %v5187
      %v5197 = vmul.f32 %v174, %v5188
      %v5198 = vmul.f32 %v175, %v5185
      %v5199 = vmul.f32 %v177, %v5179
      %v5200 = vmul.f32 %v178, %v5186
      %v5201 = vmul.f32 %v179, %v5187
      %v5202 = vmul.f32 %v180, %v5188
      %v5203 = vmul.f32 %v181, %v5185
      %v5204 = vmul.f32 %v183, %v5179
      %v5205 = vmul.f32 %v184, %v5186
      %v5206 = vmul.f32 %v185, %v5187
      %v5207 = vmul.f32 %v186, %v5188
      %v5208 = vmul.f32 %v187, %v5185
      %v5224 = vrot.slane %v5194, 6
      %v5225 = vrot.slane %v5199, 6
      %v5226 = vsel %vm4986, %v5224, %v5225
      %v5227 = vrot.slane %v5195, 6
      %v5228 = vrot.slane %v5200, 6
      %v5229 = vsel %vm4986, %v5227, %v5228
      %v5230 = vrot.slane %v5196, 6
      %v5231 = vrot.slane %v5201, 6
      %v5232 = vsel %vm4986, %v5230, %v5231
      %v5233 = vrot.slane %v5197, 6
      %v5234 = vrot.slane %v5202, 6
      %v5235 = vsel %vm4986, %v5233, %v5234
      %v5236 = vrot.slane %v5198, 6
      %v5237 = vrot.slane %v5203, 6
      %v5238 = vsel %vm4986, %v5236, %v5237
      %v5239 = vrot.slane %v5204, 6
      %v5240 = vsel %vm4986, %v5225, %v5239
      %v5241 = vrot.slane %v5205, 6
      %v5242 = vsel %vm4986, %v5228, %v5241
      %v5243 = vrot.slane %v5206, 6
      %v5244 = vsel %vm4986, %v5231, %v5243
      %v5245 = vrot.slane %v5207, 6
      %v5246 = vsel %vm4986, %v5234, %v5245
      %v5247 = vrot.slane %v5208, 6
      %v5248 = vsel %vm4986, %v5237, %v5247
      %5249 = vrot.lane.b32.xlu0 %v5226, 64
      %v5250 = vpop.permute.xlu0 %5249
      %5251 = vrot.lane.b32.xlu0 %v5229, 64
      %v5252 = vpop.permute.xlu0 %5251
      %5253 = vrot.lane.b32.xlu0 %v5232, 64
      %v5254 = vpop.permute.xlu0 %5253
      %5255 = vrot.lane.b32.xlu0 %v5235, 64
      %v5256 = vpop.permute.xlu0 %5255
      %5257 = vrot.lane.b32.xlu0 %v5238, 64
      %v5258 = vpop.permute.xlu0 %5257
      %5259 = vrot.lane.b32.xlu0 %v5240, 64
      %v5260 = vpop.permute.xlu0 %5259
      %5261 = vrot.lane.b32.xlu0 %v5242, 64
      %v5262 = vpop.permute.xlu0 %5261
      %5263 = vrot.lane.b32.xlu0 %v5244, 64
      %v5264 = vpop.permute.xlu0 %5263
      %5265 = vrot.lane.b32.xlu0 %v5246, 64
      %v5266 = vpop.permute.xlu0 %5265
      %5267 = vrot.lane.b32.xlu0 %v5248, 64
      %v5268 = vpop.permute.xlu0 %5267
      %v5269 = vsel %vm401, %v5250, %v5252
      %v5270 = vsel %vm401, %v5252, %v5254
      %v5271 = vsel %vm401, %v5254, %v5256
      %v5272 = vsel %vm401, %v5256, %v5258
      %v5273 = vsel %vm401, %v5260, %v5262
      %v5274 = vsel %vm401, %v5262, %v5264
      %v5275 = vsel %vm401, %v5264, %v5266
      %v5276 = vsel %vm401, %v5266, %v5268
      %v5285 = vadd.f32 %v5150, %v5269
      %v5286 = vadd.f32 %v5151, %v5270
      %v5287 = vadd.f32 %v5152, %v5271
      %v5288 = vadd.f32 %v5153, %v5272
      %v5289 = vadd.f32 %v5154, %v5273
      %v5290 = vadd.f32 %v5155, %v5274
      %v5291 = vadd.f32 %v5156, %v5275
      %v5292 = vadd.f32 %v5157, %v5276
      %v5293 = vlaneseq
      %v5294 = vshrl.u32 %v5293, 7
      %v5295 = vsub.s32 5, %v5294
      %v5296 = vrot.slane %v209, %v5295
      %v5297 = vlaneseq
      %v5298 = vshrl.u32 %v5297, 7
      %v5299 = vsub.s32 5, %v5298
      %v5300 = vrot.slane %v210, %v5299
      %v5301 = vlaneseq
      %v5302 = vshrl.u32 %v5301, 7
      %v5303 = vsub.s32 5, %v5302
      %v5304 = vrot.slane %v211, %v5303
      %v5305 = vlaneseq
      %v5306 = vshrl.u32 %v5305, 7
      %v5307 = vsub.s32 5, %v5306
      %v5308 = vrot.slane %v212, %v5307
      %5313 = vrot.lane.b32.xlu0 %v5296, 96
      %v5314 = vpop.permute.xlu0 %5313
      %5315 = vrot.lane.b32.xlu0 %v5300, 96
      %v5316 = vpop.permute.xlu0 %5315
      %5317 = vrot.lane.b32.xlu0 %v5304, 96
      %v5318 = vpop.permute.xlu0 %5317
      %5319 = vrot.lane.b32.xlu0 %v5308, 96
      %v5320 = vpop.permute.xlu0 %5319
      %v5321 = vsel %vm348, %v5314, %v5316
      %v5322 = vsel %vm348, %v5316, %v5318
      %v5323 = vsel %vm348, %v5318, %v5320
      %v5329 = vmul.f32 %v171, %v5314
      %v5330 = vmul.f32 %v172, %v5321
      %v5331 = vmul.f32 %v173, %v5322
      %v5332 = vmul.f32 %v174, %v5323
      %v5333 = vmul.f32 %v175, %v5320
      %v5334 = vmul.f32 %v177, %v5314
      %v5335 = vmul.f32 %v178, %v5321
      %v5336 = vmul.f32 %v179, %v5322
      %v5337 = vmul.f32 %v180, %v5323
      %v5338 = vmul.f32 %v181, %v5320
      %v5339 = vmul.f32 %v183, %v5314
      %v5340 = vmul.f32 %v184, %v5321
      %v5341 = vmul.f32 %v185, %v5322
      %v5342 = vmul.f32 %v186, %v5323
      %v5343 = vmul.f32 %v187, %v5320
      %v5359 = vrot.slane %v5329, 6
      %v5360 = vrot.slane %v5334, 6
      %v5361 = vsel %vm4986, %v5359, %v5360
      %v5362 = vrot.slane %v5330, 6
      %v5363 = vrot.slane %v5335, 6
      %v5364 = vsel %vm4986, %v5362, %v5363
      %v5365 = vrot.slane %v5331, 6
      %v5366 = vrot.slane %v5336, 6
      %v5367 = vsel %vm4986, %v5365, %v5366
      %v5368 = vrot.slane %v5332, 6
      %v5369 = vrot.slane %v5337, 6
      %v5370 = vsel %vm4986, %v5368, %v5369
      %v5371 = vrot.slane %v5333, 6
      %v5372 = vrot.slane %v5338, 6
      %v5373 = vsel %vm4986, %v5371, %v5372
      %v5374 = vrot.slane %v5339, 6
      %v5375 = vsel %vm4986, %v5360, %v5374
      %v5376 = vrot.slane %v5340, 6
      %v5377 = vsel %vm4986, %v5363, %v5376
      %v5378 = vrot.slane %v5341, 6
      %v5379 = vsel %vm4986, %v5366, %v5378
      %v5380 = vrot.slane %v5342, 6
      %v5381 = vsel %vm4986, %v5369, %v5380
      %v5382 = vrot.slane %v5343, 6
      %v5383 = vsel %vm4986, %v5372, %v5382
      %5384 = vrot.lane.b32.xlu0 %v5361, 32
      %v5385 = vpop.permute.xlu0 %5384
      %5386 = vrot.lane.b32.xlu0 %v5364, 32
      %v5387 = vpop.permute.xlu0 %5386
      %5388 = vrot.lane.b32.xlu0 %v5367, 32
      %v5389 = vpop.permute.xlu0 %5388
      %5390 = vrot.lane.b32.xlu0 %v5370, 32
      %v5391 = vpop.permute.xlu0 %5390
      %5392 = vrot.lane.b32.xlu0 %v5373, 32
      %v5393 = vpop.permute.xlu0 %5392
      %5394 = vrot.lane.b32.xlu0 %v5375, 32
      %v5395 = vpop.permute.xlu0 %5394
      %5396 = vrot.lane.b32.xlu0 %v5377, 32
      %v5397 = vpop.permute.xlu0 %5396
      %5398 = vrot.lane.b32.xlu0 %v5379, 32
      %v5399 = vpop.permute.xlu0 %5398
      %5400 = vrot.lane.b32.xlu0 %v5381, 32
      %v5401 = vpop.permute.xlu0 %5400
      %5402 = vrot.lane.b32.xlu0 %v5383, 32
      %v5403 = vpop.permute.xlu0 %5402
      %v5404 = vsel %vm299, %v5385, %v5387
      %v5405 = vsel %vm299, %v5387, %v5389
      %v5406 = vsel %vm299, %v5389, %v5391
      %v5407 = vsel %vm299, %v5391, %v5393
      %v5408 = vsel %vm299, %v5395, %v5397
      %v5409 = vsel %vm299, %v5397, %v5399
      %v5410 = vsel %vm299, %v5399, %v5401
      %v5411 = vsel %vm299, %v5401, %v5403
      %v5420 = vadd.f32 %v5285, %v5404
      %v5421 = vadd.f32 %v5286, %v5405
      %v5422 = vadd.f32 %v5287, %v5406
      %v5423 = vadd.f32 %v5288, %v5407
      %v5424 = vadd.f32 %v5289, %v5408
      %v5425 = vadd.f32 %v5290, %v5409
      %v5426 = vadd.f32 %v5291, %v5410
      %v5427 = vadd.f32 %v5292, %v5411
      %v5428 = vlaneseq
      %v5429 = vshrl.u32 %v5428, 7
      %v5430 = vsub.s32 6, %v5429
      %v5431 = vrot.slane %v209, %v5430
      %v5432 = vlaneseq
      %v5433 = vshrl.u32 %v5432, 7
      %v5434 = vsub.s32 6, %v5433
      %v5435 = vrot.slane %v210, %v5434
      %v5436 = vlaneseq
      %v5437 = vshrl.u32 %v5436, 7
      %v5438 = vsub.s32 6, %v5437
      %v5439 = vrot.slane %v211, %v5438
      %v5440 = vlaneseq
      %v5441 = vshrl.u32 %v5440, 7
      %v5442 = vsub.s32 6, %v5441
      %v5443 = vrot.slane %v212, %v5442
      %v5444 = vmul.f32 %v172, %v5431
      %v5445 = vmul.f32 %v173, %v5435
      %v5446 = vmul.f32 %v174, %v5439
      %v5447 = vmul.f32 %v175, %v5443
      %v5448 = vmul.f32 %v178, %v5431
      %v5449 = vmul.f32 %v179, %v5435
      %v5450 = vmul.f32 %v180, %v5439
      %v5451 = vmul.f32 %v181, %v5443
      %v5452 = vmul.f32 %v184, %v5431
      %v5453 = vmul.f32 %v185, %v5435
      %v5454 = vmul.f32 %v186, %v5439
      %v5455 = vmul.f32 %v187, %v5443
      %v5468 = vrot.slane %v5444, 6
      %v5469 = vrot.slane %v5448, 6
      %v5470 = vsel %vm4986, %v5468, %v5469
      %v5471 = vrot.slane %v5445, 6
      %v5472 = vrot.slane %v5449, 6
      %v5473 = vsel %vm4986, %v5471, %v5472
      %v5474 = vrot.slane %v5446, 6
      %v5475 = vrot.slane %v5450, 6
      %v5476 = vsel %vm4986, %v5474, %v5475
      %v5477 = vrot.slane %v5447, 6
      %v5478 = vrot.slane %v5451, 6
      %v5479 = vsel %vm4986, %v5477, %v5478
      %v5480 = vrot.slane %v5452, 6
      %v5481 = vsel %vm4986, %v5469, %v5480
      %v5482 = vrot.slane %v5453, 6
      %v5483 = vsel %vm4986, %v5472, %v5482
      %v5484 = vrot.slane %v5454, 6
      %v5485 = vsel %vm4986, %v5475, %v5484
      %v5486 = vrot.slane %v5455, 6
      %v5487 = vsel %vm4986, %v5478, %v5486
      %v5496 = vadd.f32 %v5420, %v5470
      %v5497 = vadd.f32 %v5421, %v5473
      %v5498 = vadd.f32 %v5422, %v5476
      %v5499 = vadd.f32 %v5423, %v5479
      %v5500 = vadd.f32 %v5424, %v5481
      %v5501 = vadd.f32 %v5425, %v5483
      %v5502 = vadd.f32 %v5426, %v5485
      %v5503 = vadd.f32 %v5427, %v5487
      %v5504 = vlaneseq
      %v5505 = vshrl.u32 %v5504, 7
      %v5506 = vsub.s32 7, %v5505
      %v5507 = vrot.slane %v209, %v5506
      %v5508 = vlaneseq
      %v5509 = vshrl.u32 %v5508, 7
      %v5510 = vsub.s32 7, %v5509
      %v5511 = vrot.slane %v210, %v5510
      %v5512 = vlaneseq
      %v5513 = vshrl.u32 %v5512, 7
      %v5514 = vsub.s32 7, %v5513
      %v5515 = vrot.slane %v211, %v5514
      %v5516 = vlaneseq
      %v5517 = vshrl.u32 %v5516, 7
      %v5518 = vsub.s32 7, %v5517
      %v5519 = vrot.slane %v212, %v5518
      %5524 = vrot.lane.b32.xlu0 %v5507, 32
      %v5525 = vpop.permute.xlu0 %5524
      %5526 = vrot.lane.b32.xlu0 %v5511, 32
      %v5527 = vpop.permute.xlu0 %5526
      %5528 = vrot.lane.b32.xlu0 %v5515, 32
      %v5529 = vpop.permute.xlu0 %5528
      %5530 = vrot.lane.b32.xlu0 %v5519, 32
      %v5531 = vpop.permute.xlu0 %5530
      %v5532 = vsel %vm299, %v5525, %v5527
      %v5533 = vsel %vm299, %v5527, %v5529
      %v5534 = vsel %vm299, %v5529, %v5531
      %v5540 = vmul.f32 %v172, %v5525
      %v5541 = vmul.f32 %v173, %v5532
      %v5542 = vmul.f32 %v174, %v5533
      %v5543 = vmul.f32 %v175, %v5534
      %v5544 = vmul.f32 %v176, %v5531
      %v5545 = vmul.f32 %v178, %v5525
      %v5546 = vmul.f32 %v179, %v5532
      %v5547 = vmul.f32 %v180, %v5533
      %v5548 = vmul.f32 %v181, %v5534
      %v5549 = vmul.f32 %v182, %v5531
      %v5550 = vmul.f32 %v184, %v5525
      %v5551 = vmul.f32 %v185, %v5532
      %v5552 = vmul.f32 %v186, %v5533
      %v5553 = vmul.f32 %v187, %v5534
      %v5554 = vmul.f32 %v188, %v5531
      %v5570 = vrot.slane %v5540, 6
      %v5571 = vrot.slane %v5545, 6
      %v5572 = vsel %vm4986, %v5570, %v5571
      %v5573 = vrot.slane %v5541, 6
      %v5574 = vrot.slane %v5546, 6
      %v5575 = vsel %vm4986, %v5573, %v5574
      %v5576 = vrot.slane %v5542, 6
      %v5577 = vrot.slane %v5547, 6
      %v5578 = vsel %vm4986, %v5576, %v5577
      %v5579 = vrot.slane %v5543, 6
      %v5580 = vrot.slane %v5548, 6
      %v5581 = vsel %vm4986, %v5579, %v5580
      %v5582 = vrot.slane %v5544, 6
      %v5583 = vrot.slane %v5549, 6
      %v5584 = vsel %vm4986, %v5582, %v5583
      %v5585 = vrot.slane %v5550, 6
      %v5586 = vsel %vm4986, %v5571, %v5585
      %v5587 = vrot.slane %v5551, 6
      %v5588 = vsel %vm4986, %v5574, %v5587
      %v5589 = vrot.slane %v5552, 6
      %v5590 = vsel %vm4986, %v5577, %v5589
      %v5591 = vrot.slane %v5553, 6
      %v5592 = vsel %vm4986, %v5580, %v5591
      %v5593 = vrot.slane %v5554, 6
      %v5594 = vsel %vm4986, %v5583, %v5593
      %5595 = vrot.lane.b32.xlu0 %v5572, 96
      %v5596 = vpop.permute.xlu0 %5595
      %5597 = vrot.lane.b32.xlu0 %v5575, 96
      %v5598 = vpop.permute.xlu0 %5597
      %5599 = vrot.lane.b32.xlu0 %v5578, 96
      %v5600 = vpop.permute.xlu0 %5599
      %5601 = vrot.lane.b32.xlu0 %v5581, 96
      %v5602 = vpop.permute.xlu0 %5601
      %5603 = vrot.lane.b32.xlu0 %v5584, 96
      %v5604 = vpop.permute.xlu0 %5603
      %5605 = vrot.lane.b32.xlu0 %v5586, 96
      %v5606 = vpop.permute.xlu0 %5605
      %5607 = vrot.lane.b32.xlu0 %v5588, 96
      %v5608 = vpop.permute.xlu0 %5607
      %5609 = vrot.lane.b32.xlu0 %v5590, 96
      %v5610 = vpop.permute.xlu0 %5609
      %5611 = vrot.lane.b32.xlu0 %v5592, 96
      %v5612 = vpop.permute.xlu0 %5611
      %5613 = vrot.lane.b32.xlu0 %v5594, 96
      %v5614 = vpop.permute.xlu0 %5613
      %v5615 = vsel %vm348, %v5596, %v5598
      %v5616 = vsel %vm348, %v5598, %v5600
      %v5617 = vsel %vm348, %v5600, %v5602
      %v5618 = vsel %vm348, %v5602, %v5604
      %v5619 = vsel %vm348, %v5606, %v5608
      %v5620 = vsel %vm348, %v5608, %v5610
      %v5621 = vsel %vm348, %v5610, %v5612
      %v5622 = vsel %vm348, %v5612, %v5614
      %v5631 = vadd.f32 %v5496, %v5615
      %v5632 = vadd.f32 %v5497, %v5616
      %v5633 = vadd.f32 %v5498, %v5617
      %v5634 = vadd.f32 %v5499, %v5618
      %v5635 = vadd.f32 %v5500, %v5619
      %v5636 = vadd.f32 %v5501, %v5620
      %v5637 = vadd.f32 %v5502, %v5621
      %v5638 = vadd.f32 %v5503, %v5622
      %v5639 = vlaneseq
      %v5640 = vshrl.u32 %v5639, 7
      %v5641 = vsub.s32 0, %v5640
      %v5642 = vrot.slane %v213, %v5641
      %v5643 = vlaneseq
      %v5644 = vshrl.u32 %v5643, 7
      %v5645 = vsub.s32 0, %v5644
      %v5646 = vrot.slane %v214, %v5645
      %v5647 = vlaneseq
      %v5648 = vshrl.u32 %v5647, 7
      %v5649 = vsub.s32 0, %v5648
      %v5650 = vrot.slane %v215, %v5649
      %v5651 = vlaneseq
      %v5652 = vshrl.u32 %v5651, 7
      %v5653 = vsub.s32 0, %v5652
      %v5654 = vrot.slane %v216, %v5653
      %5659 = vrot.lane.b32.xlu0 %v5642, 64
      %v5660 = vpop.permute.xlu0 %5659
      %5661 = vrot.lane.b32.xlu0 %v5646, 64
      %v5662 = vpop.permute.xlu0 %5661
      %5663 = vrot.lane.b32.xlu0 %v5650, 64
      %v5664 = vpop.permute.xlu0 %5663
      %5665 = vrot.lane.b32.xlu0 %v5654, 64
      %v5666 = vpop.permute.xlu0 %5665
      %v5667 = vsel %vm401, %v5660, %v5662
      %v5668 = vsel %vm401, %v5662, %v5664
      %v5669 = vsel %vm401, %v5664, %v5666
      %v5675 = vmul.f32 %v172, %v5660
      %v5676 = vmul.f32 %v173, %v5667
      %v5677 = vmul.f32 %v174, %v5668
      %v5678 = vmul.f32 %v175, %v5669
      %v5679 = vmul.f32 %v176, %v5666
      %v5680 = vmul.f32 %v178, %v5660
      %v5681 = vmul.f32 %v179, %v5667
      %v5682 = vmul.f32 %v180, %v5668
      %v5683 = vmul.f32 %v181, %v5669
      %v5684 = vmul.f32 %v182, %v5666
      %v5685 = vmul.f32 %v184, %v5660
      %v5686 = vmul.f32 %v185, %v5667
      %v5687 = vmul.f32 %v186, %v5668
      %v5688 = vmul.f32 %v187, %v5669
      %v5689 = vmul.f32 %v188, %v5666
      %v5705 = vrot.slane %v5675, 6
      %v5706 = vrot.slane %v5680, 6
      %v5707 = vsel %vm4986, %v5705, %v5706
      %v5708 = vrot.slane %v5676, 6
      %v5709 = vrot.slane %v5681, 6
      %v5710 = vsel %vm4986, %v5708, %v5709
      %v5711 = vrot.slane %v5677, 6
      %v5712 = vrot.slane %v5682, 6
      %v5713 = vsel %vm4986, %v5711, %v5712
      %v5714 = vrot.slane %v5678, 6
      %v5715 = vrot.slane %v5683, 6
      %v5716 = vsel %vm4986, %v5714, %v5715
      %v5717 = vrot.slane %v5679, 6
      %v5718 = vrot.slane %v5684, 6
      %v5719 = vsel %vm4986, %v5717, %v5718
      %v5720 = vrot.slane %v5685, 6
      %v5721 = vsel %vm4986, %v5706, %v5720
      %v5722 = vrot.slane %v5686, 6
      %v5723 = vsel %vm4986, %v5709, %v5722
      %v5724 = vrot.slane %v5687, 6
      %v5725 = vsel %vm4986, %v5712, %v5724
      %v5726 = vrot.slane %v5688, 6
      %v5727 = vsel %vm4986, %v5715, %v5726
      %v5728 = vrot.slane %v5689, 6
      %v5729 = vsel %vm4986, %v5718, %v5728
      %5730 = vrot.lane.b32.xlu0 %v5707, 64
      %v5731 = vpop.permute.xlu0 %5730
      %5732 = vrot.lane.b32.xlu0 %v5710, 64
      %v5733 = vpop.permute.xlu0 %5732
      %5734 = vrot.lane.b32.xlu0 %v5713, 64
      %v5735 = vpop.permute.xlu0 %5734
      %5736 = vrot.lane.b32.xlu0 %v5716, 64
      %v5737 = vpop.permute.xlu0 %5736
      %5738 = vrot.lane.b32.xlu0 %v5719, 64
      %v5739 = vpop.permute.xlu0 %5738
      %5740 = vrot.lane.b32.xlu0 %v5721, 64
      %v5741 = vpop.permute.xlu0 %5740
      %5742 = vrot.lane.b32.xlu0 %v5723, 64
      %v5743 = vpop.permute.xlu0 %5742
      %5744 = vrot.lane.b32.xlu0 %v5725, 64
      %v5745 = vpop.permute.xlu0 %5744
      %5746 = vrot.lane.b32.xlu0 %v5727, 64
      %v5747 = vpop.permute.xlu0 %5746
      %5748 = vrot.lane.b32.xlu0 %v5729, 64
      %v5749 = vpop.permute.xlu0 %5748
      %v5750 = vsel %vm401, %v5731, %v5733
      %v5751 = vsel %vm401, %v5733, %v5735
      %v5752 = vsel %vm401, %v5735, %v5737
      %v5753 = vsel %vm401, %v5737, %v5739
      %v5754 = vsel %vm401, %v5741, %v5743
      %v5755 = vsel %vm401, %v5743, %v5745
      %v5756 = vsel %vm401, %v5745, %v5747
      %v5757 = vsel %vm401, %v5747, %v5749
      %v5766 = vadd.f32 %v5631, %v5750
      %v5767 = vadd.f32 %v5632, %v5751
      %v5768 = vadd.f32 %v5633, %v5752
      %v5769 = vadd.f32 %v5634, %v5753
      %v5770 = vadd.f32 %v5635, %v5754
      %v5771 = vadd.f32 %v5636, %v5755
      %v5772 = vadd.f32 %v5637, %v5756
      %v5773 = vadd.f32 %v5638, %v5757
      %5774 = vst [vmem:[%s170] sm:$0xff] %v5766
      %5775 = vst [vmem:[%s170 + $0x8] sm:$0xff] %v5767
      %5776 = vst [vmem:[%s170 + $0x10] sm:$0xff] %v5768
      %5777 = vst [vmem:[%s170 + $0x18] sm:$0xff] %v5769
      %5778 = vst [vmem:[%s170 + $0x20] sm:$0xff] %v5770
      %5779 = vst [vmem:[%s170 + $0x28] sm:$0xff] %v5771
      %5780 = vst [vmem:[%s170 + $0x30] sm:$0xff] %v5772
      %5781 = vst [vmem:[%s170 + $0x38] sm:$0xff] %v5773
      %p5782 = scmp.lt.s32.totalorder %s14, 1
      %s5783 = scalar_select %p5782, %s14, 1
      %s5784 = smul.addr %s5783, 8
      %s5785 = smul.addr %s5784, 8
      %s5786 = scalar_lea.vmem %s3, %s5785
      // Predicated region
      $region33: #{dwconv7x7.1} parent=31 // pred_check
        %p5787 = pneg %p100
      $region34: #{dwconv7x7.1} parent=31 // pred_check_branch
        %5789 = sbr.rel (%p5787) target = $region36
      $region35: #{dwconv7x7.1} parent=31 // pred_region
        _
      $region36: #{dwconv7x7.1} parent=31 // pred_fallthru
        _
    $region32: #{dwconv7x7.1} parent=5 // pred_fallthru
      _
    %p5790 = scmp.le.s32.totalorder 2, %s9
    // Predicated region
    $region37: #{dwconv7x7.1} parent=5 // pred_check
      %p5791 = pneg %p5790
    $region38: #{dwconv7x7.1} parent=5 // pred_check_branch
      %5793 = sbr.rel (%p5791) target = $region40
    $region39: #{dwconv7x7.1} parent=5 // pred_region
      %s5794 = ssub.s32 %s9, 2
      // Predicated region
      $region41: #{dwconv7x7.1} parent=39 // pred_check
        %p5795 = pneg %p106
      $region42: #{dwconv7x7.1} parent=39 // pred_check_branch
        %5797 = sbr.rel (%p5795) target = $region44
      $region43: #{dwconv7x7.1} parent=39 // pred_region
        %p5798 = scmp.lt.s32.totalorder %s15, 1
        %s5799 = scalar_select %p5798, %s15, 1
        %s5800 = smul.addr %s5799, 8
        %s5801 = smul.addr %s5800, 8
        %s5802 = scalar_lea.vmem %s3, %s5801
      $region44: #{dwconv7x7.1} parent=39 // pred_fallthru
        _
    $region40: #{dwconv7x7.1} parent=5 // pred_fallthru
      _
  $region6: #{dwconv7x7.1} parent=0 // loop_footer
    %s13 = sadd.s32 1, %s9
  $region7: #{dwconv7x7.1} parent=0 // loop_footer_branch
    %8 = sbr.rel target = $region3
  $region8: #{dwconv7x7.1} parent=0 // loop_exit
    _

</llo_original>
